<compile_context>
chip_gen: v7x
topology: tpu7x:2x2x1
jax: 0.10.0
libtpu: 0.0.40
codegen_flags: <defaults>
</compile_context>

<pallas_src>
import functools

import jax
import jax.numpy as jnp
from jax.experimental import pallas as pl
from jax.experimental.pallas import tpu as pltpu  # noqa: F401  (kept for TPU-specific tuning hooks)


# ---------------------------------------------------------------------------
# Fused forward kernel: embeddings-LN -> encoder layers -> pooler -> CE loss
# ---------------------------------------------------------------------------

def _bert_cls_kernel(
    x_ref, mask_ref, labels_ref, eg_ref, eb_ref,
    qkvw_ref, qkvb_ref, wo_ref, bo_ref, ln1g_ref, ln1b_ref,
    wi_ref, bi_ref, wf_ref, bf_ref, ln2g_ref, ln2b_ref,
    poolw_ref, poolb_ref, clsw_ref, clsb_ref,
    loss_ref, logits_ref,
    *, B, S, H, nh, dh, n_layers, n_labels):
  f32 = jnp.float32

  def layer_norm(x, g, b):
    mean = jnp.mean(x, axis=-1, keepdims=True)
    xc = x - mean
    var = jnp.mean(xc * xc, axis=-1, keepdims=True)
    return (xc * jax.lax.rsqrt(var + 1e-12)) * g + b

  def gelu(y):
    # TODO(synk): HF BERT uses exact erf-GELU; tanh approximation used here.
    return 0.5 * y * (1.0 + jnp.tanh(0.7978845608028654 *
                                     (y + 0.044715 * y * y * y)))

  # --- embedding layernorm ---
  x = layer_norm(x_ref[...].astype(f32), eg_ref[...], eb_ref[...])   # (B*S, H)

  # additive attention bias from the padding mask, built in-kernel
  bias = (1.0 - mask_ref[...].astype(f32)) * (-1e4)                  # (B, S)
  scale = 1.0 / (float(dh) ** 0.5)

  # --- encoder layers (static Python loop, weights resident in VMEM) ---
  for l in range(n_layers):
    # fused QKV projection: one MXU pass, N = 3H lanes
    qkv = jnp.dot(x, qkvw_ref[l], preferred_element_type=f32) + qkvb_ref[l]
    q = qkv[:, 0 * H:1 * H]
    k = qkv[:, 1 * H:2 * H]
    v = qkv[:, 2 * H:3 * H]

    # per-(batch, head) attention with static slices; all on-chip
    batch_ctx = []
    for b in range(B):
      rs, re = b * S, (b + 1) * S
      bias_b = bias[b:b + 1, :]                                      # (1, S)
      head_ctx = []
      for h in range(nh):
        cs, ce = h * dh, (h + 1) * dh
        qs = q[rs:re, cs:ce]                                         # (S, dh)
        ks = k[rs:re, cs:ce]
        vs = v[rs:re, cs:ce]
        s = jax.lax.dot_general(qs, ks, (((1,), (1,)), ((), ())),
                                preferred_element_type=f32) * scale  # (S, S)
        s = s + bias_b
        m = jnp.max(s, axis=-1, keepdims=True)
        p = jnp.exp(s - m)
        denom = jnp.sum(p, axis=-1, keepdims=True)
        p = p * pl.reciprocal(denom, approx=True)                    # EUP divide
        head_ctx.append(jnp.dot(p, vs, preferred_element_type=f32))  # (S, dh)
      batch_ctx.append(jnp.concatenate(head_ctx, axis=-1))           # (S, H)
    ctx = jnp.concatenate(batch_ctx, axis=0)                         # (B*S, H)

    attn_out = jnp.dot(ctx, wo_ref[l], preferred_element_type=f32) + bo_ref[l]
    x = layer_norm(attn_out + x, ln1g_ref[l], ln1b_ref[l])
    inter = gelu(jnp.dot(x, wi_ref[l], preferred_element_type=f32) + bi_ref[l])
    ffn = jnp.dot(inter, wf_ref[l], preferred_element_type=f32) + bf_ref[l]
    x = layer_norm(ffn + x, ln2g_ref[l], ln2b_ref[l])

  # --- pooler (first token per sequence) + classifier head ---
  h_cls = jnp.concatenate([x[b * S:b * S + 1, :] for b in range(B)], axis=0)
  pooled = jnp.tanh(
      jnp.dot(h_cls, poolw_ref[...], preferred_element_type=f32) + poolb_ref[...])
  logits = jnp.dot(pooled, clsw_ref[...], preferred_element_type=f32) + clsb_ref[...]

  # --- cross entropy (mean); one-hot built via iota compare, no JAX one_hot ---
  zmax = jnp.max(logits, axis=-1, keepdims=True)
  zs = logits - zmax
  lse = jnp.log(jnp.sum(jnp.exp(zs), axis=-1, keepdims=True))
  logp = zs - lse
  lbl = labels_ref[...]                                              # (B, 1) int32
  cls_ids = jax.lax.broadcasted_iota(jnp.int32, (B, n_labels), 1)
  onehot = (cls_ids == lbl).astype(f32)
  per_ex = -jnp.sum(onehot * logp, axis=-1, keepdims=True)           # (B, 1)
  loss_ref[...] = jnp.sum(per_ex, axis=0, keepdims=True) * (1.0 / B)
  logits_ref[...] = logits


# ---------------------------------------------------------------------------
# Model (mini BertForSequenceClassification) wrapper
# ---------------------------------------------------------------------------

CONFIG = dict(
    vocab_size=100,
    max_position=32,
    type_vocab=2,
    hidden=32,
    heads=2,
    layers=2,
    intermediate=64,
    n_labels=4,
)


def init_params(key, cfg):
  H, I = cfg["hidden"], cfg["intermediate"]
  NL, Lyr = cfg["n_labels"], cfg["layers"]

  def nrm(k, shape, scale=0.02):
    return scale * jax.random.normal(k, shape, dtype=jnp.float32)

  keys = iter(jax.random.split(key, 32))
  return {
      "word_emb": nrm(next(keys), (cfg["vocab_size"], H)),
      "pos_emb": nrm(next(keys), (cfg["max_position"], H)),
      "type_emb": nrm(next(keys), (cfg["type_vocab"], H)),
      "emb_ln_g": jnp.ones((1, H), jnp.float32),
      "emb_ln_b": jnp.zeros((1, H), jnp.float32),
      # per-layer weights stacked on a leading layer axis; QKV fused to (H, 3H)
      "qkv_w": nrm(next(keys), (Lyr, H, 3 * H)),
      "qkv_b": jnp.zeros((Lyr, 1, 3 * H), jnp.float32),
      "wo": nrm(next(keys), (Lyr, H, H)),
      "bo": jnp.zeros((Lyr, 1, H), jnp.float32),
      "ln1_g": jnp.ones((Lyr, 1, H), jnp.float32),
      "ln1_b": jnp.zeros((Lyr, 1, H), jnp.float32),
      "wi": nrm(next(keys), (Lyr, H, I)),
      "bi": jnp.zeros((Lyr, 1, I), jnp.float32),
      "wf": nrm(next(keys), (Lyr, I, H)),
      "bf": jnp.zeros((Lyr, 1, H), jnp.float32),
      "ln2_g": jnp.ones((Lyr, 1, H), jnp.float32),
      "ln2_b": jnp.zeros((Lyr, 1, H), jnp.float32),
      "pool_w": nrm(next(keys), (H, H)),
      "pool_b": jnp.zeros((1, H), jnp.float32),
      "cls_w": nrm(next(keys), (H, NL)),
      "cls_b": jnp.zeros((1, NL), jnp.float32),
  }


def classification_model_forward(params, input_ids, attention_mask, labels, cfg):
  """Equivalent of ClassificationModel.forward: returns (CE loss scalar, logits)."""
  B, S = input_ids.shape
  H, nh = cfg["hidden"], cfg["heads"]
  Lyr, NL = cfg["layers"], cfg["n_labels"]
  dh = H // nh

  # --- embeddings (data-dependent gather stays in plain JAX glue) ---
  x = (params["word_emb"][input_ids]
       + params["pos_emb"][jnp.arange(S)][None, :, :]
       + params["type_emb"][0][None, None, :])   # token_type hard-coded to 0
  x = x.reshape(B * S, H).astype(jnp.float32)
  # TODO(synk): dropout (train mode) omitted for determinism.

  mask = attention_mask.astype(jnp.float32)              # (B, S)
  labels2d = labels.astype(jnp.int32).reshape(B, 1)      # (B, 1)

  inputs = [
      x, mask, labels2d,
      params["emb_ln_g"], params["emb_ln_b"],
      params["qkv_w"], params["qkv_b"],
      params["wo"], params["bo"], params["ln1_g"], params["ln1_b"],
      params["wi"], params["bi"], params["wf"], params["bf"],
      params["ln2_g"], params["ln2_b"],
      params["pool_w"], params["pool_b"], params["cls_w"], params["cls_b"],
  ]
  # everything is a full-array (unblocked) VMEM resident block
  in_specs = [
      pl.BlockSpec(tuple(a.shape), lambda i, nd=a.ndim: (0,) * nd)
      for a in inputs
  ]

  loss2d, logits = pl.pallas_call(
      functools.partial(_bert_cls_kernel, B=B, S=S, H=H, nh=nh, dh=dh,
                        n_layers=Lyr, n_labels=NL),
      out_shape=(jax.ShapeDtypeStruct((1, 1), jnp.float32),
                 jax.ShapeDtypeStruct((B, NL), jnp.float32)),
      grid=(1,),
      in_specs=in_specs,
      out_specs=(pl.BlockSpec((1, 1), lambda i: (0, 0)),
                 pl.BlockSpec((B, NL), lambda i: (0, 0))),
  )(*inputs)
  return loss2d[0, 0], logits


if __name__ == "__main__":
  key = jax.random.PRNGKey(0)
  pkey, ikey = jax.random.split(key)
  params = init_params(pkey, CONFIG)

  B, S = 2, 8
  input_ids = jax.random.randint(ikey, (B, S), 0, CONFIG["vocab_size"],
                                 dtype=jnp.int32)
  # second example has 3 padding tokens
  attention_mask = jnp.array([[1] * 8, [1] * 5 + [0] * 3], dtype=jnp.int32)
  labels = jnp.array([1, 3], dtype=jnp.int32)

  @jax.jit
  def run(p, ids, msk, lbl):
    return classification_model_forward(p, ids, msk, lbl, CONFIG)

  loss, logits = run(params, input_ids, attention_mask, labels)
  loss = jax.block_until_ready(loss)
  logits = jax.block_until_ready(logits)

  assert logits.shape == (B, CONFIG["n_labels"])
  assert loss.shape == () and bool(jnp.isfinite(loss))
  print("KERNEL_OK")
</pallas_src>

<mosaic_0001>
module attributes {stable_mosaic.version = 11 : i64} {
  func.func @_bert_cls_kernel(%arg0: i32, %arg1: memref<16x32xf32, #tpu.memory_space<vmem>>, %arg2: memref<2x8xf32, #tpu.memory_space<vmem>>, %arg3: memref<2x1xi32, #tpu.memory_space<vmem>>, %arg4: memref<1x32xf32, #tpu.memory_space<vmem>>, %arg5: memref<1x32xf32, #tpu.memory_space<vmem>>, %arg6: memref<2x32x96xf32, #tpu.memory_space<vmem>>, %arg7: memref<2x1x96xf32, #tpu.memory_space<vmem>>, %arg8: memref<2x32x32xf32, #tpu.memory_space<vmem>>, %arg9: memref<2x1x32xf32, #tpu.memory_space<vmem>>, %arg10: memref<2x1x32xf32, #tpu.memory_space<vmem>>, %arg11: memref<2x1x32xf32, #tpu.memory_space<vmem>>, %arg12: memref<2x32x64xf32, #tpu.memory_space<vmem>>, %arg13: memref<2x1x64xf32, #tpu.memory_space<vmem>>, %arg14: memref<2x64x32xf32, #tpu.memory_space<vmem>>, %arg15: memref<2x1x32xf32, #tpu.memory_space<vmem>>, %arg16: memref<2x1x32xf32, #tpu.memory_space<vmem>>, %arg17: memref<2x1x32xf32, #tpu.memory_space<vmem>>, %arg18: memref<32x32xf32, #tpu.memory_space<vmem>>, %arg19: memref<1x32xf32, #tpu.memory_space<vmem>>, %arg20: memref<32x4xf32, #tpu.memory_space<vmem>>, %arg21: memref<1x4xf32, #tpu.memory_space<vmem>>, %arg22: memref<1x1xf32, #tpu.memory_space<vmem>>, %arg23: memref<2x4xf32, #tpu.memory_space<vmem>>) attributes {dimension_semantics = [#tpu.dimension_semantics<arbitrary>], iteration_bounds = array<i64: 1>, scalar_prefetch = 0 : i64, scratch_operands = 0 : i64, tpu.core_type = #tpu.core_type<tc>, window_params = [{pipeline_mode = #tpu.pipeline_mode<synchronous>, transform_indices = @transform_0, window_bounds = array<i64: 16, 32>}, {pipeline_mode = #tpu.pipeline_mode<synchronous>, transform_indices = @transform_1, window_bounds = array<i64: 2, 8>}, {pipeline_mode = #tpu.pipeline_mode<synchronous>, transform_indices = @transform_2, window_bounds = array<i64: 2, 1>}, {pipeline_mode = #tpu.pipeline_mode<synchronous>, transform_indices = @transform_3, window_bounds = array<i64: 1, 32>}, {pipeline_mode = #tpu.pipeline_mode<synchronous>, transform_indices = @transform_4, window_bounds = array<i64: 1, 32>}, {pipeline_mode = #tpu.pipeline_mode<synchronous>, transform_indices = @transform_5, window_bounds = array<i64: 2, 32, 96>}, {pipeline_mode = #tpu.pipeline_mode<synchronous>, transform_indices = @transform_6, window_bounds = array<i64: 2, 1, 96>}, {pipeline_mode = #tpu.pipeline_mode<synchronous>, transform_indices = @transform_7, window_bounds = array<i64: 2, 32, 32>}, {pipeline_mode = #tpu.pipeline_mode<synchronous>, transform_indices = @transform_8, window_bounds = array<i64: 2, 1, 32>}, {pipeline_mode = #tpu.pipeline_mode<synchronous>, transform_indices = @transform_9, window_bounds = array<i64: 2, 1, 32>}, {pipeline_mode = #tpu.pipeline_mode<synchronous>, transform_indices = @transform_10, window_bounds = array<i64: 2, 1, 32>}, {pipeline_mode = #tpu.pipeline_mode<synchronous>, transform_indices = @transform_11, window_bounds = array<i64: 2, 32, 64>}, {pipeline_mode = #tpu.pipeline_mode<synchronous>, transform_indices = @transform_12, window_bounds = array<i64: 2, 1, 64>}, {pipeline_mode = #tpu.pipeline_mode<synchronous>, transform_indices = @transform_13, window_bounds = array<i64: 2, 64, 32>}, {pipeline_mode = #tpu.pipeline_mode<synchronous>, transform_indices = @transform_14, window_bounds = array<i64: 2, 1, 32>}, {pipeline_mode = #tpu.pipeline_mode<synchronous>, transform_indices = @transform_15, window_bounds = array<i64: 2, 1, 32>}, {pipeline_mode = #tpu.pipeline_mode<synchronous>, transform_indices = @transform_16, window_bounds = array<i64: 2, 1, 32>}, {pipeline_mode = #tpu.pipeline_mode<synchronous>, transform_indices = @transform_17, window_bounds = array<i64: 32, 32>}, {pipeline_mode = #tpu.pipeline_mode<synchronous>, transform_indices = @transform_18, window_bounds = array<i64: 1, 32>}, {pipeline_mode = #tpu.pipeline_mode<synchronous>, transform_indices = @transform_19, window_bounds = array<i64: 32, 4>}, {pipeline_mode = #tpu.pipeline_mode<synchronous>, transform_indices = @transform_20, window_bounds = array<i64: 1, 4>}, {pipeline_mode = #tpu.pipeline_mode<synchronous>, transform_indices = @transform_21, window_bounds = array<i64: 1, 1>}, {pipeline_mode = #tpu.pipeline_mode<synchronous>, transform_indices = @transform_22, window_bounds = array<i64: 2, 4>}]} {
    %c0 = arith.constant 0 : index
    %c0_0 = arith.constant 0 : index
    %0 = vector.load %arg1[%c0, %c0_0] : memref<16x32xf32, #tpu.memory_space<vmem>>, vector<16x32xf32>
    %c0_1 = arith.constant 0 : index
    %c0_2 = arith.constant 0 : index
    %1 = vector.load %arg4[%c0_1, %c0_2] : memref<1x32xf32, #tpu.memory_space<vmem>>, vector<1x32xf32>
    %c0_3 = arith.constant 0 : index
    %c0_4 = arith.constant 0 : index
    %2 = vector.load %arg5[%c0_3, %c0_4] : memref<1x32xf32, #tpu.memory_space<vmem>>, vector<1x32xf32>
    %cst = arith.constant dense<0.000000e+00> : vector<16xf32>
    %3 = vector.multi_reduction <add>, %0, %cst [1] : vector<16x32xf32> to vector<16xf32>
    %4 = vector.shape_cast %3 : vector<16xf32> to vector<16x1xf32>
    %cst_5 = arith.constant 3.200000e+01 : f32
    %5 = vector.broadcast %cst_5 : f32 to vector<16x1xf32>
    %6 = arith.divf %4, %5 : vector<16x1xf32>
    %7 = vector.broadcast %6 : vector<16x1xf32> to vector<16x32xf32>
    %8 = arith.subf %0, %7 : vector<16x32xf32>
    %9 = arith.mulf %8, %8 : vector<16x32xf32>
    %cst_6 = arith.constant dense<0.000000e+00> : vector<16xf32>
    %10 = vector.multi_reduction <add>, %9, %cst_6 [1] : vector<16x32xf32> to vector<16xf32>
    %11 = vector.shape_cast %10 : vector<16xf32> to vector<16x1xf32>
    %cst_7 = arith.constant 3.200000e+01 : f32
    %12 = vector.broadcast %cst_7 : f32 to vector<16x1xf32>
    %13 = arith.divf %11, %12 : vector<16x1xf32>
    %cst_8 = arith.constant 9.99999996E-13 : f32
    %14 = vector.broadcast %cst_8 : f32 to vector<16x1xf32>
    %15 = arith.addf %13, %14 : vector<16x1xf32>
    %16 = math.rsqrt %15 : vector<16x1xf32>
    %17 = vector.broadcast %16 : vector<16x1xf32> to vector<16x32xf32>
    %18 = arith.mulf %8, %17 : vector<16x32xf32>
    %19 = vector.broadcast %1 : vector<1x32xf32> to vector<16x32xf32>
    %20 = arith.mulf %18, %19 : vector<16x32xf32>
    %21 = vector.broadcast %2 : vector<1x32xf32> to vector<16x32xf32>
    %22 = arith.addf %20, %21 : vector<16x32xf32>
    %c0_9 = arith.constant 0 : index
    %c0_10 = arith.constant 0 : index
    %23 = vector.load %arg2[%c0_9, %c0_10] : memref<2x8xf32, #tpu.memory_space<vmem>>, vector<2x8xf32>
    %cst_11 = arith.constant 1.000000e+00 : f32
    %24 = vector.broadcast %cst_11 : f32 to vector<2x8xf32>
    %25 = arith.subf %24, %23 : vector<2x8xf32>
    %cst_12 = arith.constant -1.000000e+04 : f32
    %26 = vector.broadcast %cst_12 : f32 to vector<2x8xf32>
    %27 = arith.mulf %25, %26 : vector<2x8xf32>
    %c0_13 = arith.constant 0 : index
    %c0_14 = arith.constant 0 : index
    %c0_15 = arith.constant 0 : index
    %28 = vector.load %arg6[%c0_13, %c0_14, %c0_15] : memref<2x32x96xf32, #tpu.memory_space<vmem>>, vector<1x32x96xf32>
    %29 = vector.shape_cast %28 : vector<1x32x96xf32> to vector<32x96xf32>
    %cst_16 = arith.constant dense<0.000000e+00> : vector<16x96xf32>
    %30 = tpu.matmul %22, %29, %cst_16 {dimension_numbers = #tpu.dot_dimension_numbers<[1], [0], [0], [1], [0, 0, 1, 1], [], []>} : vector<16x32xf32>, vector<32x96xf32>, vector<16x96xf32> -> vector<16x96xf32>
    %c0_17 = arith.constant 0 : index
    %c0_18 = arith.constant 0 : index
    %c0_19 = arith.constant 0 : index
    %31 = vector.load %arg7[%c0_17, %c0_18, %c0_19] : memref<2x1x96xf32, #tpu.memory_space<vmem>>, vector<1x1x96xf32>
    %32 = vector.shape_cast %31 : vector<1x1x96xf32> to vector<1x96xf32>
    %33 = vector.broadcast %32 : vector<1x96xf32> to vector<16x96xf32>
    %34 = arith.addf %30, %33 : vector<16x96xf32>
    %35 = vector.extract_strided_slice %34 {offsets = [0, 0], sizes = [16, 32], strides = [1, 1]} : vector<16x96xf32> to vector<16x32xf32>
    %36 = vector.extract_strided_slice %34 {offsets = [0, 32], sizes = [16, 32], strides = [1, 1]} : vector<16x96xf32> to vector<16x32xf32>
    %37 = vector.extract_strided_slice %34 {offsets = [0, 64], sizes = [16, 32], strides = [1, 1]} : vector<16x96xf32> to vector<16x32xf32>
    %38 = vector.extract_strided_slice %27 {offsets = [0, 0], sizes = [1, 8], strides = [1, 1]} : vector<2x8xf32> to vector<1x8xf32>
    %39 = vector.extract_strided_slice %35 {offsets = [0, 0], sizes = [8, 16], strides = [1, 1]} : vector<16x32xf32> to vector<8x16xf32>
    %40 = vector.extract_strided_slice %36 {offsets = [0, 0], sizes = [8, 16], strides = [1, 1]} : vector<16x32xf32> to vector<8x16xf32>
    %41 = vector.extract_strided_slice %37 {offsets = [0, 0], sizes = [8, 16], strides = [1, 1]} : vector<16x32xf32> to vector<8x16xf32>
    %cst_20 = arith.constant dense<0.000000e+00> : vector<8x8xf32>
    %42 = tpu.matmul %39, %40, %cst_20 {dimension_numbers = #tpu.dot_dimension_numbers<[1], [1], [0], [0], [0, 0, 1, 0], [], []>} : vector<8x16xf32>, vector<8x16xf32>, vector<8x8xf32> -> vector<8x8xf32>
    %cst_21 = arith.constant 2.500000e-01 : f32
    %43 = vector.broadcast %cst_21 : f32 to vector<8x8xf32>
    %44 = arith.mulf %42, %43 : vector<8x8xf32>
    %45 = vector.broadcast %38 : vector<1x8xf32> to vector<8x8xf32>
    %46 = arith.addf %44, %45 : vector<8x8xf32>
    %cst_22 = arith.constant dense<0xFF800000> : vector<8xf32>
    %47 = vector.multi_reduction <maximumf>, %46, %cst_22 [1] : vector<8x8xf32> to vector<8xf32>
    %48 = vector.shape_cast %47 : vector<8xf32> to vector<8x1xf32>
    %49 = vector.broadcast %48 : vector<8x1xf32> to vector<8x8xf32>
    %50 = arith.subf %46, %49 : vector<8x8xf32>
    %51 = math.exp %50 : vector<8x8xf32>
    %cst_23 = arith.constant dense<0.000000e+00> : vector<8xf32>
    %52 = vector.multi_reduction <add>, %51, %cst_23 [1] : vector<8x8xf32> to vector<8xf32>
    %53 = vector.shape_cast %52 : vector<8xf32> to vector<8x1xf32>
    %54 = tpu.reciprocal %53 {approx = true} : vector<8x1xf32> -> vector<8x1xf32>
    %55 = vector.broadcast %54 : vector<8x1xf32> to vector<8x8xf32>
    %56 = arith.mulf %51, %55 : vector<8x8xf32>
    %cst_24 = arith.constant dense<0.000000e+00> : vector<8x16xf32>
    %57 = tpu.matmul %56, %41, %cst_24 {dimension_numbers = #tpu.dot_dimension_numbers<[1], [0], [0], [1], [0, 0, 1, 1], [], []>} : vector<8x8xf32>, vector<8x16xf32>, vector<8x16xf32> -> vector<8x16xf32>
    %58 = vector.extract_strided_slice %35 {offsets = [0, 16], sizes = [8, 16], strides = [1, 1]} : vector<16x32xf32> to vector<8x16xf32>
    %59 = vector.extract_strided_slice %36 {offsets = [0, 16], sizes = [8, 16], strides = [1, 1]} : vector<16x32xf32> to vector<8x16xf32>
    %60 = vector.extract_strided_slice %37 {offsets = [0, 16], sizes = [8, 16], strides = [1, 1]} : vector<16x32xf32> to vector<8x16xf32>
    %cst_25 = arith.constant dense<0.000000e+00> : vector<8x8xf32>
    %61 = tpu.matmul %58, %59, %cst_25 {dimension_numbers = #tpu.dot_dimension_numbers<[1], [1], [0], [0], [0, 0, 1, 0], [], []>} : vector<8x16xf32>, vector<8x16xf32>, vector<8x8xf32> -> vector<8x8xf32>
    %cst_26 = arith.constant 2.500000e-01 : f32
    %62 = vector.broadcast %cst_26 : f32 to vector<8x8xf32>
    %63 = arith.mulf %61, %62 : vector<8x8xf32>
    %64 = vector.broadcast %38 : vector<1x8xf32> to vector<8x8xf32>
    %65 = arith.addf %63, %64 : vector<8x8xf32>
    %cst_27 = arith.constant dense<0xFF800000> : vector<8xf32>
    %66 = vector.multi_reduction <maximumf>, %65, %cst_27 [1] : vector<8x8xf32> to vector<8xf32>
    %67 = vector.shape_cast %66 : vector<8xf32> to vector<8x1xf32>
    %68 = vector.broadcast %67 : vector<8x1xf32> to vector<8x8xf32>
    %69 = arith.subf %65, %68 : vector<8x8xf32>
    %70 = math.exp %69 : vector<8x8xf32>
    %cst_28 = arith.constant dense<0.000000e+00> : vector<8xf32>
    %71 = vector.multi_reduction <add>, %70, %cst_28 [1] : vector<8x8xf32> to vector<8xf32>
    %72 = vector.shape_cast %71 : vector<8xf32> to vector<8x1xf32>
    %73 = tpu.reciprocal %72 {approx = true} : vector<8x1xf32> -> vector<8x1xf32>
    %74 = vector.broadcast %73 : vector<8x1xf32> to vector<8x8xf32>
    %75 = arith.mulf %70, %74 : vector<8x8xf32>
    %cst_29 = arith.constant dense<0.000000e+00> : vector<8x16xf32>
    %76 = tpu.matmul %75, %60, %cst_29 {dimension_numbers = #tpu.dot_dimension_numbers<[1], [0], [0], [1], [0, 0, 1, 1], [], []>} : vector<8x8xf32>, vector<8x16xf32>, vector<8x16xf32> -> vector<8x16xf32>
    %77 = tpu.concatenate %57, %76 in 1 : vector<8x16xf32>, vector<8x16xf32> -> vector<8x32xf32>
    %78 = vector.extract_strided_slice %27 {offsets = [1, 0], sizes = [1, 8], strides = [1, 1]} : vector<2x8xf32> to vector<1x8xf32>
    %79 = vector.extract_strided_slice %35 {offsets = [8, 0], sizes = [8, 16], strides = [1, 1]} : vector<16x32xf32> to vector<8x16xf32>
    %80 = vector.extract_strided_slice %36 {offsets = [8, 0], sizes = [8, 16], strides = [1, 1]} : vector<16x32xf32> to vector<8x16xf32>
    %81 = vector.extract_strided_slice %37 {offsets = [8, 0], sizes = [8, 16], strides = [1, 1]} : vector<16x32xf32> to vector<8x16xf32>
    %cst_30 = arith.constant dense<0.000000e+00> : vector<8x8xf32>
    %82 = tpu.matmul %79, %80, %cst_30 {dimension_numbers = #tpu.dot_dimension_numbers<[1], [1], [0], [0], [0, 0, 1, 0], [], []>} : vector<8x16xf32>, vector<8x16xf32>, vector<8x8xf32> -> vector<8x8xf32>
    %cst_31 = arith.constant 2.500000e-01 : f32
    %83 = vector.broadcast %cst_31 : f32 to vector<8x8xf32>
    %84 = arith.mulf %82, %83 : vector<8x8xf32>
    %85 = vector.broadcast %78 : vector<1x8xf32> to vector<8x8xf32>
    %86 = arith.addf %84, %85 : vector<8x8xf32>
    %cst_32 = arith.constant dense<0xFF800000> : vector<8xf32>
    %87 = vector.multi_reduction <maximumf>, %86, %cst_32 [1] : vector<8x8xf32> to vector<8xf32>
    %88 = vector.shape_cast %87 : vector<8xf32> to vector<8x1xf32>
    %89 = vector.broadcast %88 : vector<8x1xf32> to vector<8x8xf32>
    %90 = arith.subf %86, %89 : vector<8x8xf32>
    %91 = math.exp %90 : vector<8x8xf32>
    %cst_33 = arith.constant dense<0.000000e+00> : vector<8xf32>
    %92 = vector.multi_reduction <add>, %91, %cst_33 [1] : vector<8x8xf32> to vector<8xf32>
    %93 = vector.shape_cast %92 : vector<8xf32> to vector<8x1xf32>
    %94 = tpu.reciprocal %93 {approx = true} : vector<8x1xf32> -> vector<8x1xf32>
    %95 = vector.broadcast %94 : vector<8x1xf32> to vector<8x8xf32>
    %96 = arith.mulf %91, %95 : vector<8x8xf32>
    %cst_34 = arith.constant dense<0.000000e+00> : vector<8x16xf32>
    %97 = tpu.matmul %96, %81, %cst_34 {dimension_numbers = #tpu.dot_dimension_numbers<[1], [0], [0], [1], [0, 0, 1, 1], [], []>} : vector<8x8xf32>, vector<8x16xf32>, vector<8x16xf32> -> vector<8x16xf32>
    %98 = vector.extract_strided_slice %35 {offsets = [8, 16], sizes = [8, 16], strides = [1, 1]} : vector<16x32xf32> to vector<8x16xf32>
    %99 = vector.extract_strided_slice %36 {offsets = [8, 16], sizes = [8, 16], strides = [1, 1]} : vector<16x32xf32> to vector<8x16xf32>
    %100 = vector.extract_strided_slice %37 {offsets = [8, 16], sizes = [8, 16], strides = [1, 1]} : vector<16x32xf32> to vector<8x16xf32>
    %cst_35 = arith.constant dense<0.000000e+00> : vector<8x8xf32>
    %101 = tpu.matmul %98, %99, %cst_35 {dimension_numbers = #tpu.dot_dimension_numbers<[1], [1], [0], [0], [0, 0, 1, 0], [], []>} : vector<8x16xf32>, vector<8x16xf32>, vector<8x8xf32> -> vector<8x8xf32>
    %cst_36 = arith.constant 2.500000e-01 : f32
    %102 = vector.broadcast %cst_36 : f32 to vector<8x8xf32>
    %103 = arith.mulf %101, %102 : vector<8x8xf32>
    %104 = vector.broadcast %78 : vector<1x8xf32> to vector<8x8xf32>
    %105 = arith.addf %103, %104 : vector<8x8xf32>
    %cst_37 = arith.constant dense<0xFF800000> : vector<8xf32>
    %106 = vector.multi_reduction <maximumf>, %105, %cst_37 [1] : vector<8x8xf32> to vector<8xf32>
    %107 = vector.shape_cast %106 : vector<8xf32> to vector<8x1xf32>
    %108 = vector.broadcast %107 : vector<8x1xf32> to vector<8x8xf32>
    %109 = arith.subf %105, %108 : vector<8x8xf32>
    %110 = math.exp %109 : vector<8x8xf32>
    %cst_38 = arith.constant dense<0.000000e+00> : vector<8xf32>
    %111 = vector.multi_reduction <add>, %110, %cst_38 [1] : vector<8x8xf32> to vector<8xf32>
    %112 = vector.shape_cast %111 : vector<8xf32> to vector<8x1xf32>
    %113 = tpu.reciprocal %112 {approx = true} : vector<8x1xf32> -> vector<8x1xf32>
    %114 = vector.broadcast %113 : vector<8x1xf32> to vector<8x8xf32>
    %115 = arith.mulf %110, %114 : vector<8x8xf32>
    %cst_39 = arith.constant dense<0.000000e+00> : vector<8x16xf32>
    %116 = tpu.matmul %115, %100, %cst_39 {dimension_numbers = #tpu.dot_dimension_numbers<[1], [0], [0], [1], [0, 0, 1, 1], [], []>} : vector<8x8xf32>, vector<8x16xf32>, vector<8x16xf32> -> vector<8x16xf32>
    %117 = tpu.concatenate %97, %116 in 1 : vector<8x16xf32>, vector<8x16xf32> -> vector<8x32xf32>
    %118 = tpu.concatenate %77, %117 in 0 : vector<8x32xf32>, vector<8x32xf32> -> vector<16x32xf32>
    %c0_40 = arith.constant 0 : index
    %c0_41 = arith.constant 0 : index
    %c0_42 = arith.constant 0 : index
    %119 = vector.load %arg8[%c0_40, %c0_41, %c0_42] : memref<2x32x32xf32, #tpu.memory_space<vmem>>, vector<1x32x32xf32>
    %120 = vector.shape_cast %119 : vector<1x32x32xf32> to vector<32x32xf32>
    %cst_43 = arith.constant dense<0.000000e+00> : vector<16x32xf32>
    %121 = tpu.matmul %118, %120, %cst_43 {dimension_numbers = #tpu.dot_dimension_numbers<[1], [0], [0], [1], [0, 0, 1, 1], [], []>} : vector<16x32xf32>, vector<32x32xf32>, vector<16x32xf32> -> vector<16x32xf32>
    %c0_44 = arith.constant 0 : index
    %c0_45 = arith.constant 0 : index
    %c0_46 = arith.constant 0 : index
    %122 = vector.load %arg9[%c0_44, %c0_45, %c0_46] : memref<2x1x32xf32, #tpu.memory_space<vmem>>, vector<1x1x32xf32>
    %123 = vector.shape_cast %122 : vector<1x1x32xf32> to vector<1x32xf32>
    %124 = vector.broadcast %123 : vector<1x32xf32> to vector<16x32xf32>
    %125 = arith.addf %121, %124 : vector<16x32xf32>
    %126 = arith.addf %125, %22 : vector<16x32xf32>
    %c0_47 = arith.constant 0 : index
    %c0_48 = arith.constant 0 : index
    %c0_49 = arith.constant 0 : index
    %127 = vector.load %arg10[%c0_47, %c0_48, %c0_49] : memref<2x1x32xf32, #tpu.memory_space<vmem>>, vector<1x1x32xf32>
    %128 = vector.shape_cast %127 : vector<1x1x32xf32> to vector<1x32xf32>
    %c0_50 = arith.constant 0 : index
    %c0_51 = arith.constant 0 : index
    %c0_52 = arith.constant 0 : index
    %129 = vector.load %arg11[%c0_50, %c0_51, %c0_52] : memref<2x1x32xf32, #tpu.memory_space<vmem>>, vector<1x1x32xf32>
    %130 = vector.shape_cast %129 : vector<1x1x32xf32> to vector<1x32xf32>
    %cst_53 = arith.constant dense<0.000000e+00> : vector<16xf32>
    %131 = vector.multi_reduction <add>, %126, %cst_53 [1] : vector<16x32xf32> to vector<16xf32>
    %132 = vector.shape_cast %131 : vector<16xf32> to vector<16x1xf32>
    %cst_54 = arith.constant 3.200000e+01 : f32
    %133 = vector.broadcast %cst_54 : f32 to vector<16x1xf32>
    %134 = arith.divf %132, %133 : vector<16x1xf32>
    %135 = vector.broadcast %134 : vector<16x1xf32> to vector<16x32xf32>
    %136 = arith.subf %126, %135 : vector<16x32xf32>
    %137 = arith.mulf %136, %136 : vector<16x32xf32>
    %cst_55 = arith.constant dense<0.000000e+00> : vector<16xf32>
    %138 = vector.multi_reduction <add>, %137, %cst_55 [1] : vector<16x32xf32> to vector<16xf32>
    %139 = vector.shape_cast %138 : vector<16xf32> to vector<16x1xf32>
    %cst_56 = arith.constant 3.200000e+01 : f32
    %140 = vector.broadcast %cst_56 : f32 to vector<16x1xf32>
    %141 = arith.divf %139, %140 : vector<16x1xf32>
    %cst_57 = arith.constant 9.99999996E-13 : f32
    %142 = vector.broadcast %cst_57 : f32 to vector<16x1xf32>
    %143 = arith.addf %141, %142 : vector<16x1xf32>
    %144 = math.rsqrt %143 : vector<16x1xf32>
    %145 = vector.broadcast %144 : vector<16x1xf32> to vector<16x32xf32>
    %146 = arith.mulf %136, %145 : vector<16x32xf32>
    %147 = vector.broadcast %128 : vector<1x32xf32> to vector<16x32xf32>
    %148 = arith.mulf %146, %147 : vector<16x32xf32>
    %149 = vector.broadcast %130 : vector<1x32xf32> to vector<16x32xf32>
    %150 = arith.addf %148, %149 : vector<16x32xf32>
    %c0_58 = arith.constant 0 : index
    %c0_59 = arith.constant 0 : index
    %c0_60 = arith.constant 0 : index
    %151 = vector.load %arg12[%c0_58, %c0_59, %c0_60] : memref<2x32x64xf32, #tpu.memory_space<vmem>>, vector<1x32x64xf32>
    %152 = vector.shape_cast %151 : vector<1x32x64xf32> to vector<32x64xf32>
    %cst_61 = arith.constant dense<0.000000e+00> : vector<16x64xf32>
    %153 = tpu.matmul %150, %152, %cst_61 {dimension_numbers = #tpu.dot_dimension_numbers<[1], [0], [0], [1], [0, 0, 1, 1], [], []>} : vector<16x32xf32>, vector<32x64xf32>, vector<16x64xf32> -> vector<16x64xf32>
    %c0_62 = arith.constant 0 : index
    %c0_63 = arith.constant 0 : index
    %c0_64 = arith.constant 0 : index
    %154 = vector.load %arg13[%c0_62, %c0_63, %c0_64] : memref<2x1x64xf32, #tpu.memory_space<vmem>>, vector<1x1x64xf32>
    %155 = vector.shape_cast %154 : vector<1x1x64xf32> to vector<1x64xf32>
    %156 = vector.broadcast %155 : vector<1x64xf32> to vector<16x64xf32>
    %157 = arith.addf %153, %156 : vector<16x64xf32>
    %cst_65 = arith.constant 5.000000e-01 : f32
    %158 = vector.broadcast %cst_65 : f32 to vector<16x64xf32>
    %159 = arith.mulf %158, %157 : vector<16x64xf32>
    %cst_66 = arith.constant 4.471500e-02 : f32
    %160 = vector.broadcast %cst_66 : f32 to vector<16x64xf32>
    %161 = arith.mulf %160, %157 : vector<16x64xf32>
    %162 = arith.mulf %161, %157 : vector<16x64xf32>
    %163 = arith.mulf %162, %157 : vector<16x64xf32>
    %164 = arith.addf %157, %163 : vector<16x64xf32>
    %cst_67 = arith.constant 0.797884583 : f32
    %165 = vector.broadcast %cst_67 : f32 to vector<16x64xf32>
    %166 = arith.mulf %165, %164 : vector<16x64xf32>
    %167 = math.tanh %166 : vector<16x64xf32>
    %cst_68 = arith.constant 1.000000e+00 : f32
    %168 = vector.broadcast %cst_68 : f32 to vector<16x64xf32>
    %169 = arith.addf %168, %167 : vector<16x64xf32>
    %170 = arith.mulf %159, %169 : vector<16x64xf32>
    %c0_69 = arith.constant 0 : index
    %c0_70 = arith.constant 0 : index
    %c0_71 = arith.constant 0 : index
    %171 = vector.load %arg14[%c0_69, %c0_70, %c0_71] : memref<2x64x32xf32, #tpu.memory_space<vmem>>, vector<1x64x32xf32>
    %172 = vector.shape_cast %171 : vector<1x64x32xf32> to vector<64x32xf32>
    %cst_72 = arith.constant dense<0.000000e+00> : vector<16x32xf32>
    %173 = tpu.matmul %170, %172, %cst_72 {dimension_numbers = #tpu.dot_dimension_numbers<[1], [0], [0], [1], [0, 0, 1, 1], [], []>} : vector<16x64xf32>, vector<64x32xf32>, vector<16x32xf32> -> vector<16x32xf32>
    %c0_73 = arith.constant 0 : index
    %c0_74 = arith.constant 0 : index
    %c0_75 = arith.constant 0 : index
    %174 = vector.load %arg15[%c0_73, %c0_74, %c0_75] : memref<2x1x32xf32, #tpu.memory_space<vmem>>, vector<1x1x32xf32>
    %175 = vector.shape_cast %174 : vector<1x1x32xf32> to vector<1x32xf32>
    %176 = vector.broadcast %175 : vector<1x32xf32> to vector<16x32xf32>
    %177 = arith.addf %173, %176 : vector<16x32xf32>
    %178 = arith.addf %177, %150 : vector<16x32xf32>
    %c0_76 = arith.constant 0 : index
    %c0_77 = arith.constant 0 : index
    %c0_78 = arith.constant 0 : index
    %179 = vector.load %arg16[%c0_76, %c0_77, %c0_78] : memref<2x1x32xf32, #tpu.memory_space<vmem>>, vector<1x1x32xf32>
    %180 = vector.shape_cast %179 : vector<1x1x32xf32> to vector<1x32xf32>
    %c0_79 = arith.constant 0 : index
    %c0_80 = arith.constant 0 : index
    %c0_81 = arith.constant 0 : index
    %181 = vector.load %arg17[%c0_79, %c0_80, %c0_81] : memref<2x1x32xf32, #tpu.memory_space<vmem>>, vector<1x1x32xf32>
    %182 = vector.shape_cast %181 : vector<1x1x32xf32> to vector<1x32xf32>
    %cst_82 = arith.constant dense<0.000000e+00> : vector<16xf32>
    %183 = vector.multi_reduction <add>, %178, %cst_82 [1] : vector<16x32xf32> to vector<16xf32>
    %184 = vector.shape_cast %183 : vector<16xf32> to vector<16x1xf32>
    %cst_83 = arith.constant 3.200000e+01 : f32
    %185 = vector.broadcast %cst_83 : f32 to vector<16x1xf32>
    %186 = arith.divf %184, %185 : vector<16x1xf32>
    %187 = vector.broadcast %186 : vector<16x1xf32> to vector<16x32xf32>
    %188 = arith.subf %178, %187 : vector<16x32xf32>
    %189 = arith.mulf %188, %188 : vector<16x32xf32>
    %cst_84 = arith.constant dense<0.000000e+00> : vector<16xf32>
    %190 = vector.multi_reduction <add>, %189, %cst_84 [1] : vector<16x32xf32> to vector<16xf32>
    %191 = vector.shape_cast %190 : vector<16xf32> to vector<16x1xf32>
    %cst_85 = arith.constant 3.200000e+01 : f32
    %192 = vector.broadcast %cst_85 : f32 to vector<16x1xf32>
    %193 = arith.divf %191, %192 : vector<16x1xf32>
    %cst_86 = arith.constant 9.99999996E-13 : f32
    %194 = vector.broadcast %cst_86 : f32 to vector<16x1xf32>
    %195 = arith.addf %193, %194 : vector<16x1xf32>
    %196 = math.rsqrt %195 : vector<16x1xf32>
    %197 = vector.broadcast %196 : vector<16x1xf32> to vector<16x32xf32>
    %198 = arith.mulf %188, %197 : vector<16x32xf32>
    %199 = vector.broadcast %180 : vector<1x32xf32> to vector<16x32xf32>
    %200 = arith.mulf %198, %199 : vector<16x32xf32>
    %201 = vector.broadcast %182 : vector<1x32xf32> to vector<16x32xf32>
    %202 = arith.addf %200, %201 : vector<16x32xf32>
    %c1 = arith.constant 1 : index
    %c0_87 = arith.constant 0 : index
    %c0_88 = arith.constant 0 : index
    %203 = vector.load %arg6[%c1, %c0_87, %c0_88] : memref<2x32x96xf32, #tpu.memory_space<vmem>>, vector<1x32x96xf32>
    %204 = vector.shape_cast %203 : vector<1x32x96xf32> to vector<32x96xf32>
    %cst_89 = arith.constant dense<0.000000e+00> : vector<16x96xf32>
    %205 = tpu.matmul %202, %204, %cst_89 {dimension_numbers = #tpu.dot_dimension_numbers<[1], [0], [0], [1], [0, 0, 1, 1], [], []>} : vector<16x32xf32>, vector<32x96xf32>, vector<16x96xf32> -> vector<16x96xf32>
    %c1_90 = arith.constant 1 : index
    %c0_91 = arith.constant 0 : index
    %c0_92 = arith.constant 0 : index
    %206 = vector.load %arg7[%c1_90, %c0_91, %c0_92] : memref<2x1x96xf32, #tpu.memory_space<vmem>>, vector<1x1x96xf32>
    %207 = vector.shape_cast %206 : vector<1x1x96xf32> to vector<1x96xf32>
    %208 = vector.broadcast %207 : vector<1x96xf32> to vector<16x96xf32>
    %209 = arith.addf %205, %208 : vector<16x96xf32>
    %210 = vector.extract_strided_slice %209 {offsets = [0, 0], sizes = [16, 32], strides = [1, 1]} : vector<16x96xf32> to vector<16x32xf32>
    %211 = vector.extract_strided_slice %209 {offsets = [0, 32], sizes = [16, 32], strides = [1, 1]} : vector<16x96xf32> to vector<16x32xf32>
    %212 = vector.extract_strided_slice %209 {offsets = [0, 64], sizes = [16, 32], strides = [1, 1]} : vector<16x96xf32> to vector<16x32xf32>
    %213 = vector.extract_strided_slice %27 {offsets = [0, 0], sizes = [1, 8], strides = [1, 1]} : vector<2x8xf32> to vector<1x8xf32>
    %214 = vector.extract_strided_slice %210 {offsets = [0, 0], sizes = [8, 16], strides = [1, 1]} : vector<16x32xf32> to vector<8x16xf32>
    %215 = vector.extract_strided_slice %211 {offsets = [0, 0], sizes = [8, 16], strides = [1, 1]} : vector<16x32xf32> to vector<8x16xf32>
    %216 = vector.extract_strided_slice %212 {offsets = [0, 0], sizes = [8, 16], strides = [1, 1]} : vector<16x32xf32> to vector<8x16xf32>
    %cst_93 = arith.constant dense<0.000000e+00> : vector<8x8xf32>
    %217 = tpu.matmul %214, %215, %cst_93 {dimension_numbers = #tpu.dot_dimension_numbers<[1], [1], [0], [0], [0, 0, 1, 0], [], []>} : vector<8x16xf32>, vector<8x16xf32>, vector<8x8xf32> -> vector<8x8xf32>
    %cst_94 = arith.constant 2.500000e-01 : f32
    %218 = vector.broadcast %cst_94 : f32 to vector<8x8xf32>
    %219 = arith.mulf %217, %218 : vector<8x8xf32>
    %220 = vector.broadcast %213 : vector<1x8xf32> to vector<8x8xf32>
    %221 = arith.addf %219, %220 : vector<8x8xf32>
    %cst_95 = arith.constant dense<0xFF800000> : vector<8xf32>
    %222 = vector.multi_reduction <maximumf>, %221, %cst_95 [1] : vector<8x8xf32> to vector<8xf32>
    %223 = vector.shape_cast %222 : vector<8xf32> to vector<8x1xf32>
    %224 = vector.broadcast %223 : vector<8x1xf32> to vector<8x8xf32>
    %225 = arith.subf %221, %224 : vector<8x8xf32>
    %226 = math.exp %225 : vector<8x8xf32>
    %cst_96 = arith.constant dense<0.000000e+00> : vector<8xf32>
    %227 = vector.multi_reduction <add>, %226, %cst_96 [1] : vector<8x8xf32> to vector<8xf32>
    %228 = vector.shape_cast %227 : vector<8xf32> to vector<8x1xf32>
    %229 = tpu.reciprocal %228 {approx = true} : vector<8x1xf32> -> vector<8x1xf32>
    %230 = vector.broadcast %229 : vector<8x1xf32> to vector<8x8xf32>
    %231 = arith.mulf %226, %230 : vector<8x8xf32>
    %cst_97 = arith.constant dense<0.000000e+00> : vector<8x16xf32>
    %232 = tpu.matmul %231, %216, %cst_97 {dimension_numbers = #tpu.dot_dimension_numbers<[1], [0], [0], [1], [0, 0, 1, 1], [], []>} : vector<8x8xf32>, vector<8x16xf32>, vector<8x16xf32> -> vector<8x16xf32>
    %233 = vector.extract_strided_slice %210 {offsets = [0, 16], sizes = [8, 16], strides = [1, 1]} : vector<16x32xf32> to vector<8x16xf32>
    %234 = vector.extract_strided_slice %211 {offsets = [0, 16], sizes = [8, 16], strides = [1, 1]} : vector<16x32xf32> to vector<8x16xf32>
    %235 = vector.extract_strided_slice %212 {offsets = [0, 16], sizes = [8, 16], strides = [1, 1]} : vector<16x32xf32> to vector<8x16xf32>
    %cst_98 = arith.constant dense<0.000000e+00> : vector<8x8xf32>
    %236 = tpu.matmul %233, %234, %cst_98 {dimension_numbers = #tpu.dot_dimension_numbers<[1], [1], [0], [0], [0, 0, 1, 0], [], []>} : vector<8x16xf32>, vector<8x16xf32>, vector<8x8xf32> -> vector<8x8xf32>
    %cst_99 = arith.constant 2.500000e-01 : f32
    %237 = vector.broadcast %cst_99 : f32 to vector<8x8xf32>
    %238 = arith.mulf %236, %237 : vector<8x8xf32>
    %239 = vector.broadcast %213 : vector<1x8xf32> to vector<8x8xf32>
    %240 = arith.addf %238, %239 : vector<8x8xf32>
    %cst_100 = arith.constant dense<0xFF800000> : vector<8xf32>
    %241 = vector.multi_reduction <maximumf>, %240, %cst_100 [1] : vector<8x8xf32> to vector<8xf32>
    %242 = vector.shape_cast %241 : vector<8xf32> to vector<8x1xf32>
    %243 = vector.broadcast %242 : vector<8x1xf32> to vector<8x8xf32>
    %244 = arith.subf %240, %243 : vector<8x8xf32>
    %245 = math.exp %244 : vector<8x8xf32>
    %cst_101 = arith.constant dense<0.000000e+00> : vector<8xf32>
    %246 = vector.multi_reduction <add>, %245, %cst_101 [1] : vector<8x8xf32> to vector<8xf32>
    %247 = vector.shape_cast %246 : vector<8xf32> to vector<8x1xf32>
    %248 = tpu.reciprocal %247 {approx = true} : vector<8x1xf32> -> vector<8x1xf32>
    %249 = vector.broadcast %248 : vector<8x1xf32> to vector<8x8xf32>
    %250 = arith.mulf %245, %249 : vector<8x8xf32>
    %cst_102 = arith.constant dense<0.000000e+00> : vector<8x16xf32>
    %251 = tpu.matmul %250, %235, %cst_102 {dimension_numbers = #tpu.dot_dimension_numbers<[1], [0], [0], [1], [0, 0, 1, 1], [], []>} : vector<8x8xf32>, vector<8x16xf32>, vector<8x16xf32> -> vector<8x16xf32>
    %252 = tpu.concatenate %232, %251 in 1 : vector<8x16xf32>, vector<8x16xf32> -> vector<8x32xf32>
    %253 = vector.extract_strided_slice %27 {offsets = [1, 0], sizes = [1, 8], strides = [1, 1]} : vector<2x8xf32> to vector<1x8xf32>
    %254 = vector.extract_strided_slice %210 {offsets = [8, 0], sizes = [8, 16], strides = [1, 1]} : vector<16x32xf32> to vector<8x16xf32>
    %255 = vector.extract_strided_slice %211 {offsets = [8, 0], sizes = [8, 16], strides = [1, 1]} : vector<16x32xf32> to vector<8x16xf32>
    %256 = vector.extract_strided_slice %212 {offsets = [8, 0], sizes = [8, 16], strides = [1, 1]} : vector<16x32xf32> to vector<8x16xf32>
    %cst_103 = arith.constant dense<0.000000e+00> : vector<8x8xf32>
    %257 = tpu.matmul %254, %255, %cst_103 {dimension_numbers = #tpu.dot_dimension_numbers<[1], [1], [0], [0], [0, 0, 1, 0], [], []>} : vector<8x16xf32>, vector<8x16xf32>, vector<8x8xf32> -> vector<8x8xf32>
    %cst_104 = arith.constant 2.500000e-01 : f32
    %258 = vector.broadcast %cst_104 : f32 to vector<8x8xf32>
    %259 = arith.mulf %257, %258 : vector<8x8xf32>
    %260 = vector.broadcast %253 : vector<1x8xf32> to vector<8x8xf32>
    %261 = arith.addf %259, %260 : vector<8x8xf32>
    %cst_105 = arith.constant dense<0xFF800000> : vector<8xf32>
    %262 = vector.multi_reduction <maximumf>, %261, %cst_105 [1] : vector<8x8xf32> to vector<8xf32>
    %263 = vector.shape_cast %262 : vector<8xf32> to vector<8x1xf32>
    %264 = vector.broadcast %263 : vector<8x1xf32> to vector<8x8xf32>
    %265 = arith.subf %261, %264 : vector<8x8xf32>
    %266 = math.exp %265 : vector<8x8xf32>
    %cst_106 = arith.constant dense<0.000000e+00> : vector<8xf32>
    %267 = vector.multi_reduction <add>, %266, %cst_106 [1] : vector<8x8xf32> to vector<8xf32>
    %268 = vector.shape_cast %267 : vector<8xf32> to vector<8x1xf32>
    %269 = tpu.reciprocal %268 {approx = true} : vector<8x1xf32> -> vector<8x1xf32>
    %270 = vector.broadcast %269 : vector<8x1xf32> to vector<8x8xf32>
    %271 = arith.mulf %266, %270 : vector<8x8xf32>
    %cst_107 = arith.constant dense<0.000000e+00> : vector<8x16xf32>
    %272 = tpu.matmul %271, %256, %cst_107 {dimension_numbers = #tpu.dot_dimension_numbers<[1], [0], [0], [1], [0, 0, 1, 1], [], []>} : vector<8x8xf32>, vector<8x16xf32>, vector<8x16xf32> -> vector<8x16xf32>
    %273 = vector.extract_strided_slice %210 {offsets = [8, 16], sizes = [8, 16], strides = [1, 1]} : vector<16x32xf32> to vector<8x16xf32>
    %274 = vector.extract_strided_slice %211 {offsets = [8, 16], sizes = [8, 16], strides = [1, 1]} : vector<16x32xf32> to vector<8x16xf32>
    %275 = vector.extract_strided_slice %212 {offsets = [8, 16], sizes = [8, 16], strides = [1, 1]} : vector<16x32xf32> to vector<8x16xf32>
    %cst_108 = arith.constant dense<0.000000e+00> : vector<8x8xf32>
    %276 = tpu.matmul %273, %274, %cst_108 {dimension_numbers = #tpu.dot_dimension_numbers<[1], [1], [0], [0], [0, 0, 1, 0], [], []>} : vector<8x16xf32>, vector<8x16xf32>, vector<8x8xf32> -> vector<8x8xf32>
    %cst_109 = arith.constant 2.500000e-01 : f32
    %277 = vector.broadcast %cst_109 : f32 to vector<8x8xf32>
    %278 = arith.mulf %276, %277 : vector<8x8xf32>
    %279 = vector.broadcast %253 : vector<1x8xf32> to vector<8x8xf32>
    %280 = arith.addf %278, %279 : vector<8x8xf32>
    %cst_110 = arith.constant dense<0xFF800000> : vector<8xf32>
    %281 = vector.multi_reduction <maximumf>, %280, %cst_110 [1] : vector<8x8xf32> to vector<8xf32>
    %282 = vector.shape_cast %281 : vector<8xf32> to vector<8x1xf32>
    %283 = vector.broadcast %282 : vector<8x1xf32> to vector<8x8xf32>
    %284 = arith.subf %280, %283 : vector<8x8xf32>
    %285 = math.exp %284 : vector<8x8xf32>
    %cst_111 = arith.constant dense<0.000000e+00> : vector<8xf32>
    %286 = vector.multi_reduction <add>, %285, %cst_111 [1] : vector<8x8xf32> to vector<8xf32>
    %287 = vector.shape_cast %286 : vector<8xf32> to vector<8x1xf32>
    %288 = tpu.reciprocal %287 {approx = true} : vector<8x1xf32> -> vector<8x1xf32>
    %289 = vector.broadcast %288 : vector<8x1xf32> to vector<8x8xf32>
    %290 = arith.mulf %285, %289 : vector<8x8xf32>
    %cst_112 = arith.constant dense<0.000000e+00> : vector<8x16xf32>
    %291 = tpu.matmul %290, %275, %cst_112 {dimension_numbers = #tpu.dot_dimension_numbers<[1], [0], [0], [1], [0, 0, 1, 1], [], []>} : vector<8x8xf32>, vector<8x16xf32>, vector<8x16xf32> -> vector<8x16xf32>
    %292 = tpu.concatenate %272, %291 in 1 : vector<8x16xf32>, vector<8x16xf32> -> vector<8x32xf32>
    %293 = tpu.concatenate %252, %292 in 0 : vector<8x32xf32>, vector<8x32xf32> -> vector<16x32xf32>
    %c1_113 = arith.constant 1 : index
    %c0_114 = arith.constant 0 : index
    %c0_115 = arith.constant 0 : index
    %294 = vector.load %arg8[%c1_113, %c0_114, %c0_115] : memref<2x32x32xf32, #tpu.memory_space<vmem>>, vector<1x32x32xf32>
    %295 = vector.shape_cast %294 : vector<1x32x32xf32> to vector<32x32xf32>
    %cst_116 = arith.constant dense<0.000000e+00> : vector<16x32xf32>
    %296 = tpu.matmul %293, %295, %cst_116 {dimension_numbers = #tpu.dot_dimension_numbers<[1], [0], [0], [1], [0, 0, 1, 1], [], []>} : vector<16x32xf32>, vector<32x32xf32>, vector<16x32xf32> -> vector<16x32xf32>
    %c1_117 = arith.constant 1 : index
    %c0_118 = arith.constant 0 : index
    %c0_119 = arith.constant 0 : index
    %297 = vector.load %arg9[%c1_117, %c0_118, %c0_119] : memref<2x1x32xf32, #tpu.memory_space<vmem>>, vector<1x1x32xf32>
    %298 = vector.shape_cast %297 : vector<1x1x32xf32> to vector<1x32xf32>
    %299 = vector.broadcast %298 : vector<1x32xf32> to vector<16x32xf32>
    %300 = arith.addf %296, %299 : vector<16x32xf32>
    %301 = arith.addf %300, %202 : vector<16x32xf32>
    %c1_120 = arith.constant 1 : index
    %c0_121 = arith.constant 0 : index
    %c0_122 = arith.constant 0 : index
    %302 = vector.load %arg10[%c1_120, %c0_121, %c0_122] : memref<2x1x32xf32, #tpu.memory_space<vmem>>, vector<1x1x32xf32>
    %303 = vector.shape_cast %302 : vector<1x1x32xf32> to vector<1x32xf32>
    %c1_123 = arith.constant 1 : index
    %c0_124 = arith.constant 0 : index
    %c0_125 = arith.constant 0 : index
    %304 = vector.load %arg11[%c1_123, %c0_124, %c0_125] : memref<2x1x32xf32, #tpu.memory_space<vmem>>, vector<1x1x32xf32>
    %305 = vector.shape_cast %304 : vector<1x1x32xf32> to vector<1x32xf32>
    %cst_126 = arith.constant dense<0.000000e+00> : vector<16xf32>
    %306 = vector.multi_reduction <add>, %301, %cst_126 [1] : vector<16x32xf32> to vector<16xf32>
    %307 = vector.shape_cast %306 : vector<16xf32> to vector<16x1xf32>
    %cst_127 = arith.constant 3.200000e+01 : f32
    %308 = vector.broadcast %cst_127 : f32 to vector<16x1xf32>
    %309 = arith.divf %307, %308 : vector<16x1xf32>
    %310 = vector.broadcast %309 : vector<16x1xf32> to vector<16x32xf32>
    %311 = arith.subf %301, %310 : vector<16x32xf32>
    %312 = arith.mulf %311, %311 : vector<16x32xf32>
    %cst_128 = arith.constant dense<0.000000e+00> : vector<16xf32>
    %313 = vector.multi_reduction <add>, %312, %cst_128 [1] : vector<16x32xf32> to vector<16xf32>
    %314 = vector.shape_cast %313 : vector<16xf32> to vector<16x1xf32>
    %cst_129 = arith.constant 3.200000e+01 : f32
    %315 = vector.broadcast %cst_129 : f32 to vector<16x1xf32>
    %316 = arith.divf %314, %315 : vector<16x1xf32>
    %cst_130 = arith.constant 9.99999996E-13 : f32
    %317 = vector.broadcast %cst_130 : f32 to vector<16x1xf32>
    %318 = arith.addf %316, %317 : vector<16x1xf32>
    %319 = math.rsqrt %318 : vector<16x1xf32>
    %320 = vector.broadcast %319 : vector<16x1xf32> to vector<16x32xf32>
    %321 = arith.mulf %311, %320 : vector<16x32xf32>
    %322 = vector.broadcast %303 : vector<1x32xf32> to vector<16x32xf32>
    %323 = arith.mulf %321, %322 : vector<16x32xf32>
    %324 = vector.broadcast %305 : vector<1x32xf32> to vector<16x32xf32>
    %325 = arith.addf %323, %324 : vector<16x32xf32>
    %c1_131 = arith.constant 1 : index
    %c0_132 = arith.constant 0 : index
    %c0_133 = arith.constant 0 : index
    %326 = vector.load %arg12[%c1_131, %c0_132, %c0_133] : memref<2x32x64xf32, #tpu.memory_space<vmem>>, vector<1x32x64xf32>
    %327 = vector.shape_cast %326 : vector<1x32x64xf32> to vector<32x64xf32>
    %cst_134 = arith.constant dense<0.000000e+00> : vector<16x64xf32>
    %328 = tpu.matmul %325, %327, %cst_134 {dimension_numbers = #tpu.dot_dimension_numbers<[1], [0], [0], [1], [0, 0, 1, 1], [], []>} : vector<16x32xf32>, vector<32x64xf32>, vector<16x64xf32> -> vector<16x64xf32>
    %c1_135 = arith.constant 1 : index
    %c0_136 = arith.constant 0 : index
    %c0_137 = arith.constant 0 : index
    %329 = vector.load %arg13[%c1_135, %c0_136, %c0_137] : memref<2x1x64xf32, #tpu.memory_space<vmem>>, vector<1x1x64xf32>
    %330 = vector.shape_cast %329 : vector<1x1x64xf32> to vector<1x64xf32>
    %331 = vector.broadcast %330 : vector<1x64xf32> to vector<16x64xf32>
    %332 = arith.addf %328, %331 : vector<16x64xf32>
    %cst_138 = arith.constant 5.000000e-01 : f32
    %333 = vector.broadcast %cst_138 : f32 to vector<16x64xf32>
    %334 = arith.mulf %333, %332 : vector<16x64xf32>
    %cst_139 = arith.constant 4.471500e-02 : f32
    %335 = vector.broadcast %cst_139 : f32 to vector<16x64xf32>
    %336 = arith.mulf %335, %332 : vector<16x64xf32>
    %337 = arith.mulf %336, %332 : vector<16x64xf32>
    %338 = arith.mulf %337, %332 : vector<16x64xf32>
    %339 = arith.addf %332, %338 : vector<16x64xf32>
    %cst_140 = arith.constant 0.797884583 : f32
    %340 = vector.broadcast %cst_140 : f32 to vector<16x64xf32>
    %341 = arith.mulf %340, %339 : vector<16x64xf32>
    %342 = math.tanh %341 : vector<16x64xf32>
    %cst_141 = arith.constant 1.000000e+00 : f32
    %343 = vector.broadcast %cst_141 : f32 to vector<16x64xf32>
    %344 = arith.addf %343, %342 : vector<16x64xf32>
    %345 = arith.mulf %334, %344 : vector<16x64xf32>
    %c1_142 = arith.constant 1 : index
    %c0_143 = arith.constant 0 : index
    %c0_144 = arith.constant 0 : index
    %346 = vector.load %arg14[%c1_142, %c0_143, %c0_144] : memref<2x64x32xf32, #tpu.memory_space<vmem>>, vector<1x64x32xf32>
    %347 = vector.shape_cast %346 : vector<1x64x32xf32> to vector<64x32xf32>
    %cst_145 = arith.constant dense<0.000000e+00> : vector<16x32xf32>
    %348 = tpu.matmul %345, %347, %cst_145 {dimension_numbers = #tpu.dot_dimension_numbers<[1], [0], [0], [1], [0, 0, 1, 1], [], []>} : vector<16x64xf32>, vector<64x32xf32>, vector<16x32xf32> -> vector<16x32xf32>
    %c1_146 = arith.constant 1 : index
    %c0_147 = arith.constant 0 : index
    %c0_148 = arith.constant 0 : index
    %349 = vector.load %arg15[%c1_146, %c0_147, %c0_148] : memref<2x1x32xf32, #tpu.memory_space<vmem>>, vector<1x1x32xf32>
    %350 = vector.shape_cast %349 : vector<1x1x32xf32> to vector<1x32xf32>
    %351 = vector.broadcast %350 : vector<1x32xf32> to vector<16x32xf32>
    %352 = arith.addf %348, %351 : vector<16x32xf32>
    %353 = arith.addf %352, %325 : vector<16x32xf32>
    %c1_149 = arith.constant 1 : index
    %c0_150 = arith.constant 0 : index
    %c0_151 = arith.constant 0 : index
    %354 = vector.load %arg16[%c1_149, %c0_150, %c0_151] : memref<2x1x32xf32, #tpu.memory_space<vmem>>, vector<1x1x32xf32>
    %355 = vector.shape_cast %354 : vector<1x1x32xf32> to vector<1x32xf32>
    %c1_152 = arith.constant 1 : index
    %c0_153 = arith.constant 0 : index
    %c0_154 = arith.constant 0 : index
    %356 = vector.load %arg17[%c1_152, %c0_153, %c0_154] : memref<2x1x32xf32, #tpu.memory_space<vmem>>, vector<1x1x32xf32>
    %357 = vector.shape_cast %356 : vector<1x1x32xf32> to vector<1x32xf32>
    %cst_155 = arith.constant dense<0.000000e+00> : vector<16xf32>
    %358 = vector.multi_reduction <add>, %353, %cst_155 [1] : vector<16x32xf32> to vector<16xf32>
    %359 = vector.shape_cast %358 : vector<16xf32> to vector<16x1xf32>
    %cst_156 = arith.constant 3.200000e+01 : f32
    %360 = vector.broadcast %cst_156 : f32 to vector<16x1xf32>
    %361 = arith.divf %359, %360 : vector<16x1xf32>
    %362 = vector.broadcast %361 : vector<16x1xf32> to vector<16x32xf32>
    %363 = arith.subf %353, %362 : vector<16x32xf32>
    %364 = arith.mulf %363, %363 : vector<16x32xf32>
    %cst_157 = arith.constant dense<0.000000e+00> : vector<16xf32>
    %365 = vector.multi_reduction <add>, %364, %cst_157 [1] : vector<16x32xf32> to vector<16xf32>
    %366 = vector.shape_cast %365 : vector<16xf32> to vector<16x1xf32>
    %cst_158 = arith.constant 3.200000e+01 : f32
    %367 = vector.broadcast %cst_158 : f32 to vector<16x1xf32>
    %368 = arith.divf %366, %367 : vector<16x1xf32>
    %cst_159 = arith.constant 9.99999996E-13 : f32
    %369 = vector.broadcast %cst_159 : f32 to vector<16x1xf32>
    %370 = arith.addf %368, %369 : vector<16x1xf32>
    %371 = math.rsqrt %370 : vector<16x1xf32>
    %372 = vector.broadcast %371 : vector<16x1xf32> to vector<16x32xf32>
    %373 = arith.mulf %363, %372 : vector<16x32xf32>
    %374 = vector.broadcast %355 : vector<1x32xf32> to vector<16x32xf32>
    %375 = arith.mulf %373, %374 : vector<16x32xf32>
    %376 = vector.broadcast %357 : vector<1x32xf32> to vector<16x32xf32>
    %377 = arith.addf %375, %376 : vector<16x32xf32>
    %378 = vector.extract_strided_slice %377 {offsets = [0, 0], sizes = [1, 32], strides = [1, 1]} : vector<16x32xf32> to vector<1x32xf32>
    %379 = vector.extract_strided_slice %377 {offsets = [8, 0], sizes = [1, 32], strides = [1, 1]} : vector<16x32xf32> to vector<1x32xf32>
    %380 = tpu.concatenate %378, %379 in 0 : vector<1x32xf32>, vector<1x32xf32> -> vector<2x32xf32>
    %c0_160 = arith.constant 0 : index
    %c0_161 = arith.constant 0 : index
    %381 = vector.load %arg18[%c0_160, %c0_161] : memref<32x32xf32, #tpu.memory_space<vmem>>, vector<32x32xf32>
    %cst_162 = arith.constant dense<0.000000e+00> : vector<2x32xf32>
    %382 = tpu.matmul %380, %381, %cst_162 {dimension_numbers = #tpu.dot_dimension_numbers<[1], [0], [0], [1], [0, 0, 1, 1], [], []>} : vector<2x32xf32>, vector<32x32xf32>, vector<2x32xf32> -> vector<2x32xf32>
    %c0_163 = arith.constant 0 : index
    %c0_164 = arith.constant 0 : index
    %383 = vector.load %arg19[%c0_163, %c0_164] : memref<1x32xf32, #tpu.memory_space<vmem>>, vector<1x32xf32>
    %384 = vector.broadcast %383 : vector<1x32xf32> to vector<2x32xf32>
    %385 = arith.addf %382, %384 : vector<2x32xf32>
    %386 = math.tanh %385 : vector<2x32xf32>
    %c0_165 = arith.constant 0 : index
    %c0_166 = arith.constant 0 : index
    %387 = vector.load %arg20[%c0_165, %c0_166] : memref<32x4xf32, #tpu.memory_space<vmem>>, vector<32x4xf32>
    %cst_167 = arith.constant dense<0.000000e+00> : vector<2x4xf32>
    %388 = tpu.matmul %386, %387, %cst_167 {dimension_numbers = #tpu.dot_dimension_numbers<[1], [0], [0], [1], [0, 0, 1, 1], [], []>} : vector<2x32xf32>, vector<32x4xf32>, vector<2x4xf32> -> vector<2x4xf32>
    %c0_168 = arith.constant 0 : index
    %c0_169 = arith.constant 0 : index
    %389 = vector.load %arg21[%c0_168, %c0_169] : memref<1x4xf32, #tpu.memory_space<vmem>>, vector<1x4xf32>
    %390 = vector.broadcast %389 : vector<1x4xf32> to vector<2x4xf32>
    %391 = arith.addf %388, %390 : vector<2x4xf32>
    %cst_170 = arith.constant dense<0xFF800000> : vector<2xf32>
    %392 = vector.multi_reduction <maximumf>, %391, %cst_170 [1] : vector<2x4xf32> to vector<2xf32>
    %393 = vector.shape_cast %392 : vector<2xf32> to vector<2x1xf32>
    %394 = vector.broadcast %393 : vector<2x1xf32> to vector<2x4xf32>
    %395 = arith.subf %391, %394 : vector<2x4xf32>
    %396 = math.exp %395 : vector<2x4xf32>
    %cst_171 = arith.constant dense<0.000000e+00> : vector<2xf32>
    %397 = vector.multi_reduction <add>, %396, %cst_171 [1] : vector<2x4xf32> to vector<2xf32>
    %398 = vector.shape_cast %397 : vector<2xf32> to vector<2x1xf32>
    %399 = math.log %398 : vector<2x1xf32>
    %400 = vector.broadcast %399 : vector<2x1xf32> to vector<2x4xf32>
    %401 = arith.subf %395, %400 : vector<2x4xf32>
    %c0_172 = arith.constant 0 : index
    %c0_173 = arith.constant 0 : index
    %402 = vector.load %arg3[%c0_172, %c0_173] : memref<2x1xi32, #tpu.memory_space<vmem>>, vector<2x1xi32>
    %403 = tpu.iota {dimensions = array<i32: 1>} : vector<2x4xi32>
    %404 = vector.broadcast %402 : vector<2x1xi32> to vector<2x4xi32>
    %405 = arith.cmpi eq, %403, %404 : vector<2x4xi32>
    %406 = arith.extui %405 : vector<2x4xi1> to vector<2x4xi32>
    %407 = arith.sitofp %406 : vector<2x4xi32> to vector<2x4xf32>
    %408 = arith.mulf %407, %401 : vector<2x4xf32>
    %cst_174 = arith.constant dense<0.000000e+00> : vector<2xf32>
    %409 = vector.multi_reduction <add>, %408, %cst_174 [1] : vector<2x4xf32> to vector<2xf32>
    %410 = vector.shape_cast %409 : vector<2xf32> to vector<2x1xf32>
    %cst_175 = arith.constant 0.000000e+00 : f32
    %411 = vector.broadcast %cst_175 : f32 to vector<2x1xf32>
    %412 = arith.subf %411, %410 : vector<2x1xf32>
    %cst_176 = arith.constant dense<0.000000e+00> : vector<1xf32>
    %413 = vector.multi_reduction <add>, %412, %cst_176 [0] : vector<2x1xf32> to vector<1xf32>
    %414 = vector.shape_cast %413 : vector<1xf32> to vector<1x1xf32>
    %cst_177 = arith.constant 5.000000e-01 : f32
    %415 = vector.broadcast %cst_177 : f32 to vector<1x1xf32>
    %416 = arith.mulf %414, %415 : vector<1x1xf32>
    %c0_178 = arith.constant 0 : index
    %c0_179 = arith.constant 0 : index
    %417 = vector.load %arg22[%c0_178, %c0_179] : memref<1x1xf32, #tpu.memory_space<vmem>>, vector<1x1xf32>
    tpu.vector_store %arg22[%c0_178, %c0_179], %416 {strides = array<i32>} : memref<1x1xf32, #tpu.memory_space<vmem>>, vector<1x1xf32>,
    %c0_180 = arith.constant 0 : index
    %c0_181 = arith.constant 0 : index
    %418 = vector.load %arg23[%c0_180, %c0_181] : memref<2x4xf32, #tpu.memory_space<vmem>>, vector<2x4xf32>
    tpu.vector_store %arg23[%c0_180, %c0_181], %391 {strides = array<i32>} : memref<2x4xf32, #tpu.memory_space<vmem>>, vector<2x4xf32>,
    return
  }
  func.func @transform_0(%arg0: i32) -> (i32, i32) {
    %c0_i32 = arith.constant 0 : i32
    %c0_i32_0 = arith.constant 0 : i32
    %c0_i32_1 = arith.constant 0 : i32
    return %c0_i32, %c0_i32_0 : i32, i32
  }
  func.func @transform_1(%arg0: i32) -> (i32, i32) {
    %c0_i32 = arith.constant 0 : i32
    %c0_i32_0 = arith.constant 0 : i32
    %c0_i32_1 = arith.constant 0 : i32
    return %c0_i32, %c0_i32_0 : i32, i32
  }
  func.func @transform_2(%arg0: i32) -> (i32, i32) {
    %c0_i32 = arith.constant 0 : i32
    %c0_i32_0 = arith.constant 0 : i32
    %c0_i32_1 = arith.constant 0 : i32
    return %c0_i32, %c0_i32_0 : i32, i32
  }
  func.func @transform_3(%arg0: i32) -> (i32, i32) {
    %c0_i32 = arith.constant 0 : i32
    %c0_i32_0 = arith.constant 0 : i32
    %c0_i32_1 = arith.constant 0 : i32
    return %c0_i32, %c0_i32_0 : i32, i32
  }
  func.func @transform_4(%arg0: i32) -> (i32, i32) {
    %c0_i32 = arith.constant 0 : i32
    %c0_i32_0 = arith.constant 0 : i32
    %c0_i32_1 = arith.constant 0 : i32
    return %c0_i32, %c0_i32_0 : i32, i32
  }
  func.func @transform_5(%arg0: i32) -> (i32, i32, i32) {
    %c0_i32 = arith.constant 0 : i32
    %c0_i32_0 = arith.constant 0 : i32
    %c0_i32_1 = arith.constant 0 : i32
    %c0_i32_2 = arith.constant 0 : i32
    return %c0_i32, %c0_i32_0, %c0_i32_1 : i32, i32, i32
  }
  func.func @transform_6(%arg0: i32) -> (i32, i32, i32) {
    %c0_i32 = arith.constant 0 : i32
    %c0_i32_0 = arith.constant 0 : i32
    %c0_i32_1 = arith.constant 0 : i32
    %c0_i32_2 = arith.constant 0 : i32
    return %c0_i32, %c0_i32_0, %c0_i32_1 : i32, i32, i32
  }
  func.func @transform_7(%arg0: i32) -> (i32, i32, i32) {
    %c0_i32 = arith.constant 0 : i32
    %c0_i32_0 = arith.constant 0 : i32
    %c0_i32_1 = arith.constant 0 : i32
    %c0_i32_2 = arith.constant 0 : i32
    return %c0_i32, %c0_i32_0, %c0_i32_1 : i32, i32, i32
  }
  func.func @transform_8(%arg0: i32) -> (i32, i32, i32) {
    %c0_i32 = arith.constant 0 : i32
    %c0_i32_0 = arith.constant 0 : i32
    %c0_i32_1 = arith.constant 0 : i32
    %c0_i32_2 = arith.constant 0 : i32
    return %c0_i32, %c0_i32_0, %c0_i32_1 : i32, i32, i32
  }
  func.func @transform_9(%arg0: i32) -> (i32, i32, i32) {
    %c0_i32 = arith.constant 0 : i32
    %c0_i32_0 = arith.constant 0 : i32
    %c0_i32_1 = arith.constant 0 : i32
    %c0_i32_2 = arith.constant 0 : i32
    return %c0_i32, %c0_i32_0, %c0_i32_1 : i32, i32, i32
  }
  func.func @transform_10(%arg0: i32) -> (i32, i32, i32) {
    %c0_i32 = arith.constant 0 : i32
    %c0_i32_0 = arith.constant 0 : i32
    %c0_i32_1 = arith.constant 0 : i32
    %c0_i32_2 = arith.constant 0 : i32
    return %c0_i32, %c0_i32_0, %c0_i32_1 : i32, i32, i32
  }
  func.func @transform_11(%arg0: i32) -> (i32, i32, i32) {
    %c0_i32 = arith.constant 0 : i32
    %c0_i32_0 = arith.constant 0 : i32
    %c0_i32_1 = arith.constant 0 : i32
    %c0_i32_2 = arith.constant 0 : i32
    return %c0_i32, %c0_i32_0, %c0_i32_1 : i32, i32, i32
  }
  func.func @transform_12(%arg0: i32) -> (i32, i32, i32) {
    %c0_i32 = arith.constant 0 : i32
    %c0_i32_0 = arith.constant 0 : i32
    %c0_i32_1 = arith.constant 0 : i32
    %c0_i32_2 = arith.constant 0 : i32
    return %c0_i32, %c0_i32_0, %c0_i32_1 : i32, i32, i32
  }
  func.func @transform_13(%arg0: i32) -> (i32, i32, i32) {
    %c0_i32 = arith.constant 0 : i32
    %c0_i32_0 = arith.constant 0 : i32
    %c0_i32_1 = arith.constant 0 : i32
    %c0_i32_2 = arith.constant 0 : i32
    return %c0_i32, %c0_i32_0, %c0_i32_1 : i32, i32, i32
  }
  func.func @transform_14(%arg0: i32) -> (i32, i32, i32) {
    %c0_i32 = arith.constant 0 : i32
    %c0_i32_0 = arith.constant 0 : i32
    %c0_i32_1 = arith.constant 0 : i32
    %c0_i32_2 = arith.constant 0 : i32
    return %c0_i32, %c0_i32_0, %c0_i32_1 : i32, i32, i32
  }
  func.func @transform_15(%arg0: i32) -> (i32, i32, i32) {
    %c0_i32 = arith.constant 0 : i32
    %c0_i32_0 = arith.constant 0 : i32
    %c0_i32_1 = arith.constant 0 : i32
    %c0_i32_2 = arith.constant 0 : i32
    return %c0_i32, %c0_i32_0, %c0_i32_1 : i32, i32, i32
  }
  func.func @transform_16(%arg0: i32) -> (i32, i32, i32) {
    %c0_i32 = arith.constant 0 : i32
    %c0_i32_0 = arith.constant 0 : i32
    %c0_i32_1 = arith.constant 0 : i32
    %c0_i32_2 = arith.constant 0 : i32
    return %c0_i32, %c0_i32_0, %c0_i32_1 : i32, i32, i32
  }
  func.func @transform_17(%arg0: i32) -> (i32, i32) {
    %c0_i32 = arith.constant 0 : i32
    %c0_i32_0 = arith.constant 0 : i32
    %c0_i32_1 = arith.constant 0 : i32
    return %c0_i32, %c0_i32_0 : i32, i32
  }
  func.func @transform_18(%arg0: i32) -> (i32, i32) {
    %c0_i32 = arith.constant 0 : i32
    %c0_i32_0 = arith.constant 0 : i32
    %c0_i32_1 = arith.constant 0 : i32
    return %c0_i32, %c0_i32_0 : i32, i32
  }
  func.func @transform_19(%arg0: i32) -> (i32, i32) {
    %c0_i32 = arith.constant 0 : i32
    %c0_i32_0 = arith.constant 0 : i32
    %c0_i32_1 = arith.constant 0 : i32
    return %c0_i32, %c0_i32_0 : i32, i32
  }
  func.func @transform_20(%arg0: i32) -> (i32, i32) {
    %c0_i32 = arith.constant 0 : i32
    %c0_i32_0 = arith.constant 0 : i32
    %c0_i32_1 = arith.constant 0 : i32
    return %c0_i32, %c0_i32_0 : i32, i32
  }
  func.func @transform_21(%arg0: i32) -> (i32, i32) {
    %c0_i32 = arith.constant 0 : i32
    %c0_i32_0 = arith.constant 0 : i32
    %c0_i32_1 = arith.constant 0 : i32
    return %c0_i32, %c0_i32_0 : i32, i32
  }
  func.func @transform_22(%arg0: i32) -> (i32, i32) {
    %c0_i32 = arith.constant 0 : i32
    %c0_i32_0 = arith.constant 0 : i32
    %c0_i32_1 = arith.constant 0 : i32
    return %c0_i32, %c0_i32_0 : i32, i32
  }
}

</mosaic_0001>

<llo_original>
// kernel: run.1
$region0: #{run.1}
  #allocation0 [shape = 'u32[]', space=smem, size = 0x4, offset = 0x4, fixed_abs, tag = 'smem constant byte address 0x4 - core index']
  #allocation1 [shape = 'u32[144,128]{1,0:T(1,128)}', space=vmem, size = 0x12000, scoped, tag = 'internal scratch']
  %s0 = inlined_call_operand.vmem [shape: f32[16,32], index: 0, kind: input, shape index: {}]
  %s1 = inlined_call_operand.vmem [shape: f32[2,8], index: 1, kind: input, shape index: {}]
  %s2 = inlined_call_operand.vmem [shape: s32[2,1], index: 2, kind: input, shape index: {}]
  %s3 = inlined_call_operand.vmem [shape: f32[1,32], index: 3, kind: input, shape index: {}]
  %s4 = inlined_call_operand.vmem [shape: f32[1,32], index: 4, kind: input, shape index: {}]
  %s5 = inlined_call_operand.vmem [shape: f32[2,32,96], index: 5, kind: input, shape index: {}]
  %s6 = inlined_call_operand.vmem [shape: f32[2,1,96], index: 6, kind: input, shape index: {}]
  %s7 = inlined_call_operand.vmem [shape: f32[2,32,32], index: 7, kind: input, shape index: {}]
  %s8 = inlined_call_operand.vmem [shape: f32[2,1,32], index: 8, kind: input, shape index: {}]
  %s9 = inlined_call_operand.vmem [shape: f32[2,1,32], index: 9, kind: input, shape index: {}]
  %s10 = inlined_call_operand.vmem [shape: f32[2,1,32], index: 10, kind: input, shape index: {}]
  %s11 = inlined_call_operand.vmem [shape: f32[2,32,64], index: 11, kind: input, shape index: {}]
  %s12 = inlined_call_operand.vmem [shape: f32[2,1,64], index: 12, kind: input, shape index: {}]
  %s13 = inlined_call_operand.vmem [shape: f32[2,64,32], index: 13, kind: input, shape index: {}]
  %s14 = inlined_call_operand.vmem [shape: f32[2,1,32], index: 14, kind: input, shape index: {}]
  %s15 = inlined_call_operand.vmem [shape: f32[2,1,32], index: 15, kind: input, shape index: {}]
  %s16 = inlined_call_operand.vmem [shape: f32[2,1,32], index: 16, kind: input, shape index: {}]
  %s17 = inlined_call_operand.vmem [shape: f32[32,32], index: 17, kind: input, shape index: {}]
  %s18 = inlined_call_operand.vmem [shape: f32[1,32], index: 18, kind: input, shape index: {}]
  %s19 = inlined_call_operand.vmem [shape: f32[32,4], index: 19, kind: input, shape index: {}]
  %s20 = inlined_call_operand.vmem [shape: f32[1,4], index: 20, kind: input, shape index: {}]
  %s21 = inlined_call_operand.hbm [shape: f32[1,1], index: 21, kind: output, shape index: {0}]
  %s22 = inlined_call_operand.hbm [shape: f32[2,4], index: 22, kind: output, shape index: {1}]
  %23 = xla_tuple %s21, %s22
  %s24 = sld [smem:[#allocation0]]
  $region102: #{run.1} parent=0
    _
  %s26 = ssub.s32 1, %s24
  %s27 = scalar_select 0, %s26, %s24
  $region1: #{run.1} parent=0
    #allocation2 [shape = 'u8[512]{0}', space=vmem, size = 0x400, scoped, tag = 'output window, operand 0, single buffered']
    #allocation3 [shape = 's32[1]{0}', space=sflag, size = 0x4, scoped, tag = 'scoped memory for run.1']
    #allocation4 [shape = 'u8[1024]{0}', space=vmem, size = 0x400, scoped, tag = 'output window, operand 1, single buffered']
    #allocation5 [shape = 's32[1]{0}', space=sflag, size = 0x4, scoped, tag = 'scoped memory for run.1']
    %28 = vsyncpa [#allocation3], 0
    %29 = vsyncpa [#allocation5], 0
    // Predicated region
    $region2: #{run.1} parent=1 // pred_check
      _
    $region3: #{run.1} parent=1 // pred_check_branch
      %31 = sbr.rel (0) target = $region5
    $region4: #{run.1} parent=1 // pred_region
      _
    $region5: #{run.1} parent=1 // pred_fallthru
      _
    // Predicated region
    $region6: #{run.1} parent=1 // pred_check
      _
    $region7: #{run.1} parent=1 // pred_check_branch
      %33 = sbr.rel (0) target = $region9
    $region8: #{run.1} parent=1 // pred_region
      _
    $region9: #{run.1} parent=1 // pred_fallthru
      _
    // Predicated region
    $region10: #{run.1} parent=1 // pred_check
      _
    $region11: #{run.1} parent=1 // pred_check_branch
      %35 = sbr.rel (0) target = $region13
    $region12: #{run.1} parent=1 // pred_region
      _
    $region13: #{run.1} parent=1 // pred_fallthru
      _
    // Predicated region
    $region14: #{run.1} parent=1 // pred_check
      _
    $region15: #{run.1} parent=1 // pred_check_branch
      %37 = sbr.rel (0) target = $region17
    $region16: #{run.1} parent=1 // pred_region
      _
    $region17: #{run.1} parent=1 // pred_fallthru
      _
    // Predicated region
    $region18: #{run.1} parent=1 // pred_check
      _
    $region19: #{run.1} parent=1 // pred_check_branch
      %39 = sbr.rel (0) target = $region21
    $region20: #{run.1} parent=1 // pred_region
      _
    $region21: #{run.1} parent=1 // pred_fallthru
      _
    // Predicated region
    $region22: #{run.1} parent=1 // pred_check
      _
    $region23: #{run.1} parent=1 // pred_check_branch
      %41 = sbr.rel (0) target = $region25
    $region24: #{run.1} parent=1 // pred_region
      _
    $region25: #{run.1} parent=1 // pred_fallthru
      _
    // Predicated region
    $region26: #{run.1} parent=1 // pred_check
      _
    $region27: #{run.1} parent=1 // pred_check_branch
      %43 = sbr.rel (0) target = $region29
    $region28: #{run.1} parent=1 // pred_region
      _
    $region29: #{run.1} parent=1 // pred_fallthru
      _
    // Predicated region
    $region30: #{run.1} parent=1 // pred_check
      _
    $region31: #{run.1} parent=1 // pred_check_branch
      %45 = sbr.rel (0) target = $region33
    $region32: #{run.1} parent=1 // pred_region
      _
    $region33: #{run.1} parent=1 // pred_fallthru
      _
    // Predicated region
    $region34: #{run.1} parent=1 // pred_check
      _
    $region35: #{run.1} parent=1 // pred_check_branch
      %47 = sbr.rel (0) target = $region37
    $region36: #{run.1} parent=1 // pred_region
      _
    $region37: #{run.1} parent=1 // pred_fallthru
      _
    // Predicated region
    $region38: #{run.1} parent=1 // pred_check
      _
    $region39: #{run.1} parent=1 // pred_check_branch
      %49 = sbr.rel (0) target = $region41
    $region40: #{run.1} parent=1 // pred_region
      _
    $region41: #{run.1} parent=1 // pred_fallthru
      _
    // Predicated region
    $region42: #{run.1} parent=1 // pred_check
      _
    $region43: #{run.1} parent=1 // pred_check_branch
      %51 = sbr.rel (0) target = $region45
    $region44: #{run.1} parent=1 // pred_region
      _
    $region45: #{run.1} parent=1 // pred_fallthru
      _
    // Predicated region
    $region46: #{run.1} parent=1 // pred_check
      _
    $region47: #{run.1} parent=1 // pred_check_branch
      %53 = sbr.rel (0) target = $region49
    $region48: #{run.1} parent=1 // pred_region
      _
    $region49: #{run.1} parent=1 // pred_fallthru
      _
    // Predicated region
    $region50: #{run.1} parent=1 // pred_check
      _
    $region51: #{run.1} parent=1 // pred_check_branch
      %55 = sbr.rel (0) target = $region53
    $region52: #{run.1} parent=1 // pred_region
      _
    $region53: #{run.1} parent=1 // pred_fallthru
      _
    // Predicated region
    $region54: #{run.1} parent=1 // pred_check
      _
    $region55: #{run.1} parent=1 // pred_check_branch
      %57 = sbr.rel (0) target = $region57
    $region56: #{run.1} parent=1 // pred_region
      _
    $region57: #{run.1} parent=1 // pred_fallthru
      _
    // Predicated region
    $region58: #{run.1} parent=1 // pred_check
      _
    $region59: #{run.1} parent=1 // pred_check_branch
      %59 = sbr.rel (0) target = $region61
    $region60: #{run.1} parent=1 // pred_region
      _
    $region61: #{run.1} parent=1 // pred_fallthru
      _
    // Predicated region
    $region62: #{run.1} parent=1 // pred_check
      _
    $region63: #{run.1} parent=1 // pred_check_branch
      %61 = sbr.rel (0) target = $region65
    $region64: #{run.1} parent=1 // pred_region
      _
    $region65: #{run.1} parent=1 // pred_fallthru
      _
    // Predicated region
    $region66: #{run.1} parent=1 // pred_check
      _
    $region67: #{run.1} parent=1 // pred_check_branch
      %63 = sbr.rel (0) target = $region69
    $region68: #{run.1} parent=1 // pred_region
      _
    $region69: #{run.1} parent=1 // pred_fallthru
      _
    // Predicated region
    $region70: #{run.1} parent=1 // pred_check
      _
    $region71: #{run.1} parent=1 // pred_check_branch
      %65 = sbr.rel (0) target = $region73
    $region72: #{run.1} parent=1 // pred_region
      _
    $region73: #{run.1} parent=1 // pred_fallthru
      _
    // Predicated region
    $region74: #{run.1} parent=1 // pred_check
      _
    $region75: #{run.1} parent=1 // pred_check_branch
      %67 = sbr.rel (0) target = $region77
    $region76: #{run.1} parent=1 // pred_region
      _
    $region77: #{run.1} parent=1 // pred_fallthru
      _
    // Predicated region
    $region78: #{run.1} parent=1 // pred_check
      _
    $region79: #{run.1} parent=1 // pred_check_branch
      %69 = sbr.rel (0) target = $region81
    $region80: #{run.1} parent=1 // pred_region
      _
    $region81: #{run.1} parent=1 // pred_fallthru
      _
    // Predicated region
    $region82: #{run.1} parent=1 // pred_check
      _
    $region83: #{run.1} parent=1 // pred_check_branch
      %71 = sbr.rel (0) target = $region85
    $region84: #{run.1} parent=1 // pred_region
      _
    $region85: #{run.1} parent=1 // pred_fallthru
      _
    %v72 = vld [vmem:[%s0] sm:$0xff]
    %v73 = vld [vmem:[%s0 + $0x8] sm:$0xff]
    %v74 = vld [vmem:[%s3] sm:$0x1]
    %v75 = vld [vmem:[%s4] sm:$0x1]
    %vm76 = vcmask 261120
    %v77 = vsel %vm76, %v72, 0.0
    %78 = vadd.xlane.f32.xlu0 %v77
    %v79 = vpop.xlane.xlu0 %78
    %v80 = vsel %vm76, %v73, 0.0
    %81 = vadd.xlane.f32.xlu0 %v80
    %v82 = vpop.xlane.xlu0 %81
    %v83 = vrcp.pop 32.0
    %v84 = vmul.f32 %v79, %v83
    %v85 = vmul.f32 %v82, %v83
    %v86 = vsub.f32 %v72, %v84
    %v87 = vsub.f32 %v73, %v85
    %v88 = vmul.f32 %v86, %v86
    %v89 = vmul.f32 %v87, %v87
    %v90 = vsel %vm76, %v88, 0.0
    %91 = vadd.xlane.f32.xlu0 %v90
    %v92 = vpop.xlane.xlu0 %91
    %v93 = vsel %vm76, %v89, 0.0
    %94 = vadd.xlane.f32.xlu0 %v93
    %v95 = vpop.xlane.xlu0 %94
    %v96 = vmul.f32 %v92, %v83
    %v97 = vmul.f32 %v95, %v83
    %v98 = vadd.f32 %v96, 1e-12
    %v99 = vadd.f32 %v97, 1e-12
    %v100 = vrsqrt.pop %v98
    %v101 = vrsqrt.pop %v99
    %v102 = vmul.f32 %v86, %v100
    %v103 = vmul.f32 %v87, %v101
    %v105 = vlaneseq
    %v106 = vshrl.u32 %v105, 7
    %v107 = vsub.s32 0, %v106
    %v108 = vrot.slane %v74, %v107
    %v110 = vmul.f32 %v102, %v108
    %v111 = vmul.f32 %v103, %v108
    %v113 = vlaneseq
    %v114 = vshrl.u32 %v113, 7
    %v115 = vsub.s32 0, %v114
    %v116 = vrot.slane %v75, %v115
    %v118 = vadd.f32 %v110, %v116
    %v119 = vadd.f32 %v111, %v116
    %v120 = vld [vmem:[%s1] sm:$0x3]
    %v121 = vsub.f32 1.0, %v120
    %v122 = vmul.f32 %v121, -10000.0
    %v123 = vld [vmem:[%s5] sm:$0xff]
    %v124 = vld [vmem:[%s5 + $0x8] sm:$0xff]
    %v125 = vld [vmem:[%s5 + $0x10] sm:$0xff]
    %v126 = vld [vmem:[%s5 + $0x18] sm:$0xff]
    %v127 = vld [vmem:[%s6] sm:$0x1]
    %v129 = vlaneseq
    %v130 = vshrl.u32 %v129, 7
    %v131 = vsub.s32 0, %v130
    %v132 = vrot.slane %v127, %v131
    %v135 = vsel %vm76, %v118, 0
    %v138 = vsel %vm76, %v119, 0
    %140 = vmatprep.subr.mxu0 0.0
    %141 = vmatpush1.msra.mxu0 %v123
    %142 = vmatprep.subr.mxu0 0.0
    %143 = vmatpush1.msra.mxu0 %v124
    %144 = vmatprep.subr.mxu0 0.0
    %145 = vmatpush1.msra.mxu0 %v125
    %146 = vmatprep.subr.mxu0 0.0
    %147 = vmatpush1.msra.mxu0 %v126
    %148 = vmatprep.subr.mxu0 0.0
    %149 = vmatpush1.msra.mxu0 0.0
    %150 = vmatprep.subr.mxu0 0.0
    %151 = vmatpush1.msra.mxu0 0.0
    %152 = vmatprep.subr.mxu0 0.0
    %153 = vmatpush1.msra.mxu0 0.0
    %154 = vmatprep.subr.mxu0 0.0
    %155 = vmatpush1.msra.mxu0 0.0
    %156 = vmatprep.subr.mxu0 0.0
    %157 = vmatpush1.msra.mxu0 0.0
    %158 = vmatprep.subr.mxu0 0.0
    %159 = vmatpush1.msra.mxu0 0.0
    %160 = vmatprep.subr.mxu0 0.0
    %161 = vmatpush1.msra.mxu0 0.0
    %162 = vmatprep.subr.mxu0 0.0
    %163 = vmatpush1.msra.mxu0 0.0
    %164 = vmatprep.subr.mxu0 0.0
    %165 = vmatpush1.msra.mxu0 0.0
    %166 = vmatprep.subr.mxu0 0.0
    %167 = vmatpush1.msra.mxu0 0.0
    %168 = vmatprep.subr.mxu0 0.0
    %169 = vmatpush1.msra.mxu0 0.0
    %170 = vmatprep.subr.mxu0 0.0
    %171 = vmatpush1.msra.mxu0 0.0
    %172 = vmatprep.subr.mxu0 0.0
    %173 = vmatpush1.msra.mxu0 0.0
    %174 = vmatprep.subr.mxu0 0.0
    %175 = vmatpush1.msra.mxu0 0.0
    %176 = vmatprep.subr.mxu0 0.0
    %177 = vmatpush1.msra.mxu0 0.0
    %178 = vmatprep.subr.mxu0 0.0
    %179 = vmatpush1.msra.mxu0 0.0
    %180 = vmatprep.subr.mxu0 0.0
    %181 = vmatpush1.msra.mxu0 0.0
    %182 = vmatprep.subr.mxu0 0.0
    %183 = vmatpush1.msra.mxu0 0.0
    %184 = vmatprep.subr.mxu0 0.0
    %185 = vmatpush1.msra.mxu0 0.0
    %186 = vmatprep.subr.mxu0 0.0
    %187 = vmatpush1.msra.mxu0 0.0
    %188 = vmatprep.subr.mxu0 0.0
    %189 = vmatpush1.msra.mxu0 0.0
    %190 = vmatprep.subr.mxu0 0.0
    %191 = vmatpush1.msra.mxu0 0.0
    %192 = vmatprep.subr.mxu0 0.0
    %193 = vmatpush1.msra.mxu0 0.0
    %194 = vmatprep.subr.mxu0 0.0
    %195 = vmatpush1.msra.mxu0 0.0
    %196 = vmatprep.subr.mxu0 0.0
    %197 = vmatpush1.msra.mxu0 0.0
    %198 = vmatprep.subr.mxu0 0.0
    %199 = vmatpush1.msra.mxu0 0.0
    %200 = vmatprep.subr.mxu0 0.0
    %201 = vmatpush1.msra.mxu0 0.0
    %202 = vmatprep.subr.mxu0 0.0
    %203 = vmatpush1.msra.mxu0 0.0
    %204 = vmatprep.mubr.f32.mxu0 0.0
    %205 = vmatmul.mubr.f32.gmra.mrb[0].mxu0 %v135
    %v206 = vpop.f32.mrb[0].mxu0
    %v207 = vadd.f32 %v132, %v206
    %v208 = vpop.f32.mrb[0].mxu0
    %209 = vmatprep.mubr.f32.mxu0 0.0
    %210 = vmatmul.mubr.f32.gmra.mrb[0].mxu0 %v138
    %v211 = vpop.f32.mrb[0].mxu0
    %v212 = vadd.f32 %v132, %v211
    %v213 = vpop.f32.mrb[0].mxu0
    %214 = vdwg.mxu0
    %216 = vrot.lane.b32.xlu0 %v207, 96
    %v217 = vpop.permute.xlu0 %216
    %vm218 = vcmask 130048
    %v219 = vsel %vm218, %v207, 0
    %v221 = vsel %vm218, %v217, 0
    %223 = vmatprep.subr.mxu0 0.0
    %224 = vmatpush1.xpose.msra.mxu0 %v221
    %225 = vmatprep.subr.mxu0 0.0
    %226 = vmatpush1.xpose.msra.mxu0 0.0
    %227 = vmatprep.subr.mxu0 0.0
    %228 = vmatpush1.xpose.msra.mxu0 0.0
    %229 = vmatprep.subr.mxu0 0.0
    %230 = vmatpush1.xpose.msra.mxu0 0.0
    %231 = vmatprep.subr.mxu0 0.0
    %232 = vmatpush1.xpose.msra.mxu0 0.0
    %233 = vmatprep.subr.mxu0 0.0
    %234 = vmatpush1.xpose.msra.mxu0 0.0
    %235 = vmatprep.subr.mxu0 0.0
    %236 = vmatpush1.xpose.msra.mxu0 0.0
    %237 = vmatprep.subr.mxu0 0.0
    %238 = vmatpush1.xpose.msra.mxu0 0.0
    %239 = vmatprep.subr.mxu0 0.0
    %240 = vmatpush1.xpose.msra.mxu0 0.0
    %241 = vmatprep.subr.mxu0 0.0
    %242 = vmatpush1.xpose.msra.mxu0 0.0
    %243 = vmatprep.subr.mxu0 0.0
    %244 = vmatpush1.xpose.msra.mxu0 0.0
    %245 = vmatprep.subr.mxu0 0.0
    %246 = vmatpush1.xpose.msra.mxu0 0.0
    %247 = vmatprep.subr.mxu0 0.0
    %248 = vmatpush1.xpose.msra.mxu0 0.0
    %249 = vmatprep.subr.mxu0 0.0
    %250 = vmatpush1.xpose.msra.mxu0 0.0
    %251 = vmatprep.subr.mxu0 0.0
    %252 = vmatpush1.xpose.msra.mxu0 0.0
    %253 = vmatprep.subr.mxu0 0.0
    %254 = vmatpush1.xpose.msra.mxu0 0.0
    %255 = vmatprep.subr.mxu0 0.0
    %256 = vmatpush1.xpose.msra.mxu0 0.0
    %257 = vmatprep.subr.mxu0 0.0
    %258 = vmatpush1.xpose.msra.mxu0 0.0
    %259 = vmatprep.subr.mxu0 0.0
    %260 = vmatpush1.xpose.msra.mxu0 0.0
    %261 = vmatprep.subr.mxu0 0.0
    %262 = vmatpush1.xpose.msra.mxu0 0.0
    %263 = vmatprep.subr.mxu0 0.0
    %264 = vmatpush1.xpose.msra.mxu0 0.0
    %265 = vmatprep.subr.mxu0 0.0
    %266 = vmatpush1.xpose.msra.mxu0 0.0
    %267 = vmatprep.subr.mxu0 0.0
    %268 = vmatpush1.xpose.msra.mxu0 0.0
    %269 = vmatprep.subr.mxu0 0.0
    %270 = vmatpush1.xpose.msra.mxu0 0.0
    %271 = vmatprep.subr.mxu0 0.0
    %272 = vmatpush1.xpose.msra.mxu0 0.0
    %273 = vmatprep.subr.mxu0 0.0
    %274 = vmatpush1.xpose.msra.mxu0 0.0
    %275 = vmatprep.subr.mxu0 0.0
    %276 = vmatpush1.xpose.msra.mxu0 0.0
    %277 = vmatprep.subr.mxu0 0.0
    %278 = vmatpush1.xpose.msra.mxu0 0.0
    %279 = vmatprep.subr.mxu0 0.0
    %280 = vmatpush1.xpose.msra.mxu0 0.0
    %281 = vmatprep.subr.mxu0 0.0
    %282 = vmatpush1.xpose.msra.mxu0 0.0
    %283 = vmatprep.subr.mxu0 0.0
    %284 = vmatpush1.xpose.msra.mxu0 0.0
    %285 = vmatprep.subr.mxu0 0.0
    %286 = vmatpush1.xpose.msra.mxu0 0.0
    %287 = vmatprep.mubr.f32.mxu0 0.0
    %288 = vmatmul.mubr.f32.gmra.mrb[0].mxu0 %v219
    %v289 = vpop.f32.mrb[0].mxu0
    %v290 = vadd.f32 0.0, %v289
    %v291 = vpop.f32.mrb[0].mxu0
    %292 = vdwg.mxu0
    %v293 = vmul.f32 %v290, 0.25
    %v294 = vlaneseq
    %v295 = vshrl.u32 %v294, 7
    %v296 = vsub.s32 0, %v295
    %v297 = vrot.slane %v122, %v296
    %v298 = vadd.f32 %v293, %v297
    %vm299 = vcmask 64512
    %v300 = vsel %vm299, %v298, -inf
    %301 = vmax.xlane.f32.xlu0 %v300
    %v302 = vpop.xlane.xlu0 %301
    %v303 = vsub.f32 %v298, %v302
    %v304 = vmul.f32 %v303, 1.442695
    %v305 = vpow.pop %v304
    %v306 = vsel %vm299, %v305, 0.0
    %307 = vadd.xlane.f32.xlu0 %v306
    %v308 = vpop.xlane.xlu0 %307
    %v309 = vrcp.pop %v308
    %v310 = vmul.f32 %v305, %v309
    %311 = vrot.lane.b32.xlu0 %v207, 64
    %v312 = vpop.permute.xlu0 %311
    %v315 = vsel %vm299, %v310, 0
    %317 = vmatprep.subr.mxu0 0.0
    %318 = vmatpush1.msra.mxu0 %v312
    %319 = vmatprep.subr.mxu0 0.0
    %320 = vmatpush1.msra.mxu0 0.0
    %321 = vmatprep.subr.mxu0 0.0
    %322 = vmatpush1.msra.mxu0 0.0
    %323 = vmatprep.subr.mxu0 0.0
    %324 = vmatpush1.msra.mxu0 0.0
    %325 = vmatprep.subr.mxu0 0.0
    %326 = vmatpush1.msra.mxu0 0.0
    %327 = vmatprep.subr.mxu0 0.0
    %328 = vmatpush1.msra.mxu0 0.0
    %329 = vmatprep.subr.mxu0 0.0
    %330 = vmatpush1.msra.mxu0 0.0
    %331 = vmatprep.subr.mxu0 0.0
    %332 = vmatpush1.msra.mxu0 0.0
    %333 = vmatprep.subr.mxu0 0.0
    %334 = vmatpush1.msra.mxu0 0.0
    %335 = vmatprep.subr.mxu0 0.0
    %336 = vmatpush1.msra.mxu0 0.0
    %337 = vmatprep.subr.mxu0 0.0
    %338 = vmatpush1.msra.mxu0 0.0
    %339 = vmatprep.subr.mxu0 0.0
    %340 = vmatpush1.msra.mxu0 0.0
    %341 = vmatprep.subr.mxu0 0.0
    %342 = vmatpush1.msra.mxu0 0.0
    %343 = vmatprep.subr.mxu0 0.0
    %344 = vmatpush1.msra.mxu0 0.0
    %345 = vmatprep.subr.mxu0 0.0
    %346 = vmatpush1.msra.mxu0 0.0
    %347 = vmatprep.subr.mxu0 0.0
    %348 = vmatpush1.msra.mxu0 0.0
    %349 = vmatprep.subr.mxu0 0.0
    %350 = vmatpush1.msra.mxu0 0.0
    %351 = vmatprep.subr.mxu0 0.0
    %352 = vmatpush1.msra.mxu0 0.0
    %353 = vmatprep.subr.mxu0 0.0
    %354 = vmatpush1.msra.mxu0 0.0
    %355 = vmatprep.subr.mxu0 0.0
    %356 = vmatpush1.msra.mxu0 0.0
    %357 = vmatprep.subr.mxu0 0.0
    %358 = vmatpush1.msra.mxu0 0.0
    %359 = vmatprep.subr.mxu0 0.0
    %360 = vmatpush1.msra.mxu0 0.0
    %361 = vmatprep.subr.mxu0 0.0
    %362 = vmatpush1.msra.mxu0 0.0
    %363 = vmatprep.subr.mxu0 0.0
    %364 = vmatpush1.msra.mxu0 0.0
    %365 = vmatprep.subr.mxu0 0.0
    %366 = vmatpush1.msra.mxu0 0.0
    %367 = vmatprep.subr.mxu0 0.0
    %368 = vmatpush1.msra.mxu0 0.0
    %369 = vmatprep.subr.mxu0 0.0
    %370 = vmatpush1.msra.mxu0 0.0
    %371 = vmatprep.subr.mxu0 0.0
    %372 = vmatpush1.msra.mxu0 0.0
    %373 = vmatprep.subr.mxu0 0.0
    %374 = vmatpush1.msra.mxu0 0.0
    %375 = vmatprep.subr.mxu0 0.0
    %376 = vmatpush1.msra.mxu0 0.0
    %377 = vmatprep.subr.mxu0 0.0
    %378 = vmatpush1.msra.mxu0 0.0
    %379 = vmatprep.subr.mxu0 0.0
    %380 = vmatpush1.msra.mxu0 0.0
    %381 = vmatprep.mubr.f32.mxu0 0.0
    %382 = vmatmul.mubr.f32.gmra.mrb[0].mxu0 %v315
    %v383 = vpop.f32.mrb[0].mxu0
    %v384 = vadd.f32 0.0, %v383
    %v385 = vpop.f32.mrb[0].mxu0
    %386 = vdwg.mxu0
    %387 = vrot.lane.b32.xlu0 %v207, 112
    %v388 = vpop.permute.xlu0 %387
    %389 = vrot.lane.b32.xlu0 %v207, 80
    %v390 = vpop.permute.xlu0 %389
    %v391 = vsel %vm218, %v388, 0
    %v393 = vsel %vm218, %v390, 0
    %395 = vmatprep.subr.mxu0 0.0
    %396 = vmatpush1.xpose.msra.mxu0 %v393
    %397 = vmatprep.subr.mxu0 0.0
    %398 = vmatpush1.xpose.msra.mxu0 0.0
    %399 = vmatprep.subr.mxu0 0.0
    %400 = vmatpush1.xpose.msra.mxu0 0.0
    %401 = vmatprep.subr.mxu0 0.0
    %402 = vmatpush1.xpose.msra.mxu0 0.0
    %403 = vmatprep.subr.mxu0 0.0
    %404 = vmatpush1.xpose.msra.mxu0 0.0
    %405 = vmatprep.subr.mxu0 0.0
    %406 = vmatpush1.xpose.msra.mxu0 0.0
    %407 = vmatprep.subr.mxu0 0.0
    %408 = vmatpush1.xpose.msra.mxu0 0.0
    %409 = vmatprep.subr.mxu0 0.0
    %410 = vmatpush1.xpose.msra.mxu0 0.0
    %411 = vmatprep.subr.mxu0 0.0
    %412 = vmatpush1.xpose.msra.mxu0 0.0
    %413 = vmatprep.subr.mxu0 0.0
    %414 = vmatpush1.xpose.msra.mxu0 0.0
    %415 = vmatprep.subr.mxu0 0.0
    %416 = vmatpush1.xpose.msra.mxu0 0.0
    %417 = vmatprep.subr.mxu0 0.0
    %418 = vmatpush1.xpose.msra.mxu0 0.0
    %419 = vmatprep.subr.mxu0 0.0
    %420 = vmatpush1.xpose.msra.mxu0 0.0
    %421 = vmatprep.subr.mxu0 0.0
    %422 = vmatpush1.xpose.msra.mxu0 0.0
    %423 = vmatprep.subr.mxu0 0.0
    %424 = vmatpush1.xpose.msra.mxu0 0.0
    %425 = vmatprep.subr.mxu0 0.0
    %426 = vmatpush1.xpose.msra.mxu0 0.0
    %427 = vmatprep.subr.mxu0 0.0
    %428 = vmatpush1.xpose.msra.mxu0 0.0
    %429 = vmatprep.subr.mxu0 0.0
    %430 = vmatpush1.xpose.msra.mxu0 0.0
    %431 = vmatprep.subr.mxu0 0.0
    %432 = vmatpush1.xpose.msra.mxu0 0.0
    %433 = vmatprep.subr.mxu0 0.0
    %434 = vmatpush1.xpose.msra.mxu0 0.0
    %435 = vmatprep.subr.mxu0 0.0
    %436 = vmatpush1.xpose.msra.mxu0 0.0
    %437 = vmatprep.subr.mxu0 0.0
    %438 = vmatpush1.xpose.msra.mxu0 0.0
    %439 = vmatprep.subr.mxu0 0.0
    %440 = vmatpush1.xpose.msra.mxu0 0.0
    %441 = vmatprep.subr.mxu0 0.0
    %442 = vmatpush1.xpose.msra.mxu0 0.0
    %443 = vmatprep.subr.mxu0 0.0
    %444 = vmatpush1.xpose.msra.mxu0 0.0
    %445 = vmatprep.subr.mxu0 0.0
    %446 = vmatpush1.xpose.msra.mxu0 0.0
    %447 = vmatprep.subr.mxu0 0.0
    %448 = vmatpush1.xpose.msra.mxu0 0.0
    %449 = vmatprep.subr.mxu0 0.0
    %450 = vmatpush1.xpose.msra.mxu0 0.0
    %451 = vmatprep.subr.mxu0 0.0
    %452 = vmatpush1.xpose.msra.mxu0 0.0
    %453 = vmatprep.subr.mxu0 0.0
    %454 = vmatpush1.xpose.msra.mxu0 0.0
    %455 = vmatprep.subr.mxu0 0.0
    %456 = vmatpush1.xpose.msra.mxu0 0.0
    %457 = vmatprep.subr.mxu0 0.0
    %458 = vmatpush1.xpose.msra.mxu0 0.0
    %459 = vmatprep.mubr.f32.mxu0 0.0
    %460 = vmatmul.mubr.f32.gmra.mrb[0].mxu0 %v391
    %v461 = vpop.f32.mrb[0].mxu0
    %v462 = vadd.f32 0.0, %v461
    %v463 = vpop.f32.mrb[0].mxu0
    %464 = vdwg.mxu0
    %v465 = vmul.f32 %v462, 0.25
    %v466 = vadd.f32 %v465, %v297
    %v467 = vsel %vm299, %v466, -inf
    %468 = vmax.xlane.f32.xlu0 %v467
    %v469 = vpop.xlane.xlu0 %468
    %v470 = vsub.f32 %v466, %v469
    %v471 = vmul.f32 %v470, 1.442695
    %v472 = vpow.pop %v471
    %v473 = vsel %vm299, %v472, 0.0
    %474 = vadd.xlane.f32.xlu0 %v473
    %v475 = vpop.xlane.xlu0 %474
    %v476 = vrcp.pop %v475
    %v477 = vmul.f32 %v472, %v476
    %478 = vrot.lane.b32.xlu0 %v207, 48
    %v479 = vpop.permute.xlu0 %478
    %v482 = vsel %vm299, %v477, 0
    %484 = vmatprep.subr.mxu0 0.0
    %485 = vmatpush1.msra.mxu0 %v479
    %486 = vmatprep.subr.mxu0 0.0
    %487 = vmatpush1.msra.mxu0 0.0
    %488 = vmatprep.subr.mxu0 0.0
    %489 = vmatpush1.msra.mxu0 0.0
    %490 = vmatprep.subr.mxu0 0.0
    %491 = vmatpush1.msra.mxu0 0.0
    %492 = vmatprep.subr.mxu0 0.0
    %493 = vmatpush1.msra.mxu0 0.0
    %494 = vmatprep.subr.mxu0 0.0
    %495 = vmatpush1.msra.mxu0 0.0
    %496 = vmatprep.subr.mxu0 0.0
    %497 = vmatpush1.msra.mxu0 0.0
    %498 = vmatprep.subr.mxu0 0.0
    %499 = vmatpush1.msra.mxu0 0.0
    %500 = vmatprep.subr.mxu0 0.0
    %501 = vmatpush1.msra.mxu0 0.0
    %502 = vmatprep.subr.mxu0 0.0
    %503 = vmatpush1.msra.mxu0 0.0
    %504 = vmatprep.subr.mxu0 0.0
    %505 = vmatpush1.msra.mxu0 0.0
    %506 = vmatprep.subr.mxu0 0.0
    %507 = vmatpush1.msra.mxu0 0.0
    %508 = vmatprep.subr.mxu0 0.0
    %509 = vmatpush1.msra.mxu0 0.0
    %510 = vmatprep.subr.mxu0 0.0
    %511 = vmatpush1.msra.mxu0 0.0
    %512 = vmatprep.subr.mxu0 0.0
    %513 = vmatpush1.msra.mxu0 0.0
    %514 = vmatprep.subr.mxu0 0.0
    %515 = vmatpush1.msra.mxu0 0.0
    %516 = vmatprep.subr.mxu0 0.0
    %517 = vmatpush1.msra.mxu0 0.0
    %518 = vmatprep.subr.mxu0 0.0
    %519 = vmatpush1.msra.mxu0 0.0
    %520 = vmatprep.subr.mxu0 0.0
    %521 = vmatpush1.msra.mxu0 0.0
    %522 = vmatprep.subr.mxu0 0.0
    %523 = vmatpush1.msra.mxu0 0.0
    %524 = vmatprep.subr.mxu0 0.0
    %525 = vmatpush1.msra.mxu0 0.0
    %526 = vmatprep.subr.mxu0 0.0
    %527 = vmatpush1.msra.mxu0 0.0
    %528 = vmatprep.subr.mxu0 0.0
    %529 = vmatpush1.msra.mxu0 0.0
    %530 = vmatprep.subr.mxu0 0.0
    %531 = vmatpush1.msra.mxu0 0.0
    %532 = vmatprep.subr.mxu0 0.0
    %533 = vmatpush1.msra.mxu0 0.0
    %534 = vmatprep.subr.mxu0 0.0
    %535 = vmatpush1.msra.mxu0 0.0
    %536 = vmatprep.subr.mxu0 0.0
    %537 = vmatpush1.msra.mxu0 0.0
    %538 = vmatprep.subr.mxu0 0.0
    %539 = vmatpush1.msra.mxu0 0.0
    %540 = vmatprep.subr.mxu0 0.0
    %541 = vmatpush1.msra.mxu0 0.0
    %542 = vmatprep.subr.mxu0 0.0
    %543 = vmatpush1.msra.mxu0 0.0
    %544 = vmatprep.subr.mxu0 0.0
    %545 = vmatpush1.msra.mxu0 0.0
    %546 = vmatprep.subr.mxu0 0.0
    %547 = vmatpush1.msra.mxu0 0.0
    %548 = vmatprep.mubr.f32.mxu0 0.0
    %549 = vmatmul.mubr.f32.gmra.mrb[0].mxu0 %v482
    %v550 = vpop.f32.mrb[0].mxu0
    %v551 = vadd.f32 0.0, %v550
    %v552 = vpop.f32.mrb[0].mxu0
    %553 = vdwg.mxu0
    %555 = vrot.lane.b32.xlu0 %v551, 16
    %v556 = vpop.permute.xlu0 %555
    %v558 = vsel %vm218, %v384, %v556
    %560 = vrot.lane.b32.xlu0 %v212, 96
    %v561 = vpop.permute.xlu0 %560
    %v562 = vsel %vm218, %v212, 0
    %v564 = vsel %vm218, %v561, 0
    %566 = vmatprep.subr.mxu0 0.0
    %567 = vmatpush1.xpose.msra.mxu0 %v564
    %568 = vmatprep.subr.mxu0 0.0
    %569 = vmatpush1.xpose.msra.mxu0 0.0
    %570 = vmatprep.subr.mxu0 0.0
    %571 = vmatpush1.xpose.msra.mxu0 0.0
    %572 = vmatprep.subr.mxu0 0.0
    %573 = vmatpush1.xpose.msra.mxu0 0.0
    %574 = vmatprep.subr.mxu0 0.0
    %575 = vmatpush1.xpose.msra.mxu0 0.0
    %576 = vmatprep.subr.mxu0 0.0
    %577 = vmatpush1.xpose.msra.mxu0 0.0
    %578 = vmatprep.subr.mxu0 0.0
    %579 = vmatpush1.xpose.msra.mxu0 0.0
    %580 = vmatprep.subr.mxu0 0.0
    %581 = vmatpush1.xpose.msra.mxu0 0.0
    %582 = vmatprep.subr.mxu0 0.0
    %583 = vmatpush1.xpose.msra.mxu0 0.0
    %584 = vmatprep.subr.mxu0 0.0
    %585 = vmatpush1.xpose.msra.mxu0 0.0
    %586 = vmatprep.subr.mxu0 0.0
    %587 = vmatpush1.xpose.msra.mxu0 0.0
    %588 = vmatprep.subr.mxu0 0.0
    %589 = vmatpush1.xpose.msra.mxu0 0.0
    %590 = vmatprep.subr.mxu0 0.0
    %591 = vmatpush1.xpose.msra.mxu0 0.0
    %592 = vmatprep.subr.mxu0 0.0
    %593 = vmatpush1.xpose.msra.mxu0 0.0
    %594 = vmatprep.subr.mxu0 0.0
    %595 = vmatpush1.xpose.msra.mxu0 0.0
    %596 = vmatprep.subr.mxu0 0.0
    %597 = vmatpush1.xpose.msra.mxu0 0.0
    %598 = vmatprep.subr.mxu0 0.0
    %599 = vmatpush1.xpose.msra.mxu0 0.0
    %600 = vmatprep.subr.mxu0 0.0
    %601 = vmatpush1.xpose.msra.mxu0 0.0
    %602 = vmatprep.subr.mxu0 0.0
    %603 = vmatpush1.xpose.msra.mxu0 0.0
    %604 = vmatprep.subr.mxu0 0.0
    %605 = vmatpush1.xpose.msra.mxu0 0.0
    %606 = vmatprep.subr.mxu0 0.0
    %607 = vmatpush1.xpose.msra.mxu0 0.0
    %608 = vmatprep.subr.mxu0 0.0
    %609 = vmatpush1.xpose.msra.mxu0 0.0
    %610 = vmatprep.subr.mxu0 0.0
    %611 = vmatpush1.xpose.msra.mxu0 0.0
    %612 = vmatprep.subr.mxu0 0.0
    %613 = vmatpush1.xpose.msra.mxu0 0.0
    %614 = vmatprep.subr.mxu0 0.0
    %615 = vmatpush1.xpose.msra.mxu0 0.0
    %616 = vmatprep.subr.mxu0 0.0
    %617 = vmatpush1.xpose.msra.mxu0 0.0
    %618 = vmatprep.subr.mxu0 0.0
    %619 = vmatpush1.xpose.msra.mxu0 0.0
    %620 = vmatprep.subr.mxu0 0.0
    %621 = vmatpush1.xpose.msra.mxu0 0.0
    %622 = vmatprep.subr.mxu0 0.0
    %623 = vmatpush1.xpose.msra.mxu0 0.0
    %624 = vmatprep.subr.mxu0 0.0
    %625 = vmatpush1.xpose.msra.mxu0 0.0
    %626 = vmatprep.subr.mxu0 0.0
    %627 = vmatpush1.xpose.msra.mxu0 0.0
    %628 = vmatprep.subr.mxu0 0.0
    %629 = vmatpush1.xpose.msra.mxu0 0.0
    %630 = vmatprep.mubr.f32.mxu0 0.0
    %631 = vmatmul.mubr.f32.gmra.mrb[0].mxu0 %v562
    %v632 = vpop.f32.mrb[0].mxu0
    %v633 = vadd.f32 0.0, %v632
    %v634 = vpop.f32.mrb[0].mxu0
    %635 = vdwg.mxu0
    %v636 = vmul.f32 %v633, 0.25
    %v637 = vlaneseq
    %v638 = vshrl.u32 %v637, 7
    %v639 = vsub.s32 1, %v638
    %v640 = vrot.slane %v122, %v639
    %v641 = vadd.f32 %v636, %v640
    %v642 = vsel %vm299, %v641, -inf
    %643 = vmax.xlane.f32.xlu0 %v642
    %v644 = vpop.xlane.xlu0 %643
    %v645 = vsub.f32 %v641, %v644
    %v646 = vmul.f32 %v645, 1.442695
    %v647 = vpow.pop %v646
    %v648 = vsel %vm299, %v647, 0.0
    %649 = vadd.xlane.f32.xlu0 %v648
    %v650 = vpop.xlane.xlu0 %649
    %v651 = vrcp.pop %v650
    %v652 = vmul.f32 %v647, %v651
    %653 = vrot.lane.b32.xlu0 %v212, 64
    %v654 = vpop.permute.xlu0 %653
    %v657 = vsel %vm299, %v652, 0
    %659 = vmatprep.subr.mxu0 0.0
    %660 = vmatpush1.msra.mxu0 %v654
    %661 = vmatprep.subr.mxu0 0.0
    %662 = vmatpush1.msra.mxu0 0.0
    %663 = vmatprep.subr.mxu0 0.0
    %664 = vmatpush1.msra.mxu0 0.0
    %665 = vmatprep.subr.mxu0 0.0
    %666 = vmatpush1.msra.mxu0 0.0
    %667 = vmatprep.subr.mxu0 0.0
    %668 = vmatpush1.msra.mxu0 0.0
    %669 = vmatprep.subr.mxu0 0.0
    %670 = vmatpush1.msra.mxu0 0.0
    %671 = vmatprep.subr.mxu0 0.0
    %672 = vmatpush1.msra.mxu0 0.0
    %673 = vmatprep.subr.mxu0 0.0
    %674 = vmatpush1.msra.mxu0 0.0
    %675 = vmatprep.subr.mxu0 0.0
    %676 = vmatpush1.msra.mxu0 0.0
    %677 = vmatprep.subr.mxu0 0.0
    %678 = vmatpush1.msra.mxu0 0.0
    %679 = vmatprep.subr.mxu0 0.0
    %680 = vmatpush1.msra.mxu0 0.0
    %681 = vmatprep.subr.mxu0 0.0
    %682 = vmatpush1.msra.mxu0 0.0
    %683 = vmatprep.subr.mxu0 0.0
    %684 = vmatpush1.msra.mxu0 0.0
    %685 = vmatprep.subr.mxu0 0.0
    %686 = vmatpush1.msra.mxu0 0.0
    %687 = vmatprep.subr.mxu0 0.0
    %688 = vmatpush1.msra.mxu0 0.0
    %689 = vmatprep.subr.mxu0 0.0
    %690 = vmatpush1.msra.mxu0 0.0
    %691 = vmatprep.subr.mxu0 0.0
    %692 = vmatpush1.msra.mxu0 0.0
    %693 = vmatprep.subr.mxu0 0.0
    %694 = vmatpush1.msra.mxu0 0.0
    %695 = vmatprep.subr.mxu0 0.0
    %696 = vmatpush1.msra.mxu0 0.0
    %697 = vmatprep.subr.mxu0 0.0
    %698 = vmatpush1.msra.mxu0 0.0
    %699 = vmatprep.subr.mxu0 0.0
    %700 = vmatpush1.msra.mxu0 0.0
    %701 = vmatprep.subr.mxu0 0.0
    %702 = vmatpush1.msra.mxu0 0.0
    %703 = vmatprep.subr.mxu0 0.0
    %704 = vmatpush1.msra.mxu0 0.0
    %705 = vmatprep.subr.mxu0 0.0
    %706 = vmatpush1.msra.mxu0 0.0
    %707 = vmatprep.subr.mxu0 0.0
    %708 = vmatpush1.msra.mxu0 0.0
    %709 = vmatprep.subr.mxu0 0.0
    %710 = vmatpush1.msra.mxu0 0.0
    %711 = vmatprep.subr.mxu0 0.0
    %712 = vmatpush1.msra.mxu0 0.0
    %713 = vmatprep.subr.mxu0 0.0
    %714 = vmatpush1.msra.mxu0 0.0
    %715 = vmatprep.subr.mxu0 0.0
    %716 = vmatpush1.msra.mxu0 0.0
    %717 = vmatprep.subr.mxu0 0.0
    %718 = vmatpush1.msra.mxu0 0.0
    %719 = vmatprep.subr.mxu0 0.0
    %720 = vmatpush1.msra.mxu0 0.0
    %721 = vmatprep.subr.mxu0 0.0
    %722 = vmatpush1.msra.mxu0 0.0
    %723 = vmatprep.mubr.f32.mxu0 0.0
    %724 = vmatmul.mubr.f32.gmra.mrb[0].mxu0 %v657
    %v725 = vpop.f32.mrb[0].mxu0
    %v726 = vadd.f32 0.0, %v725
    %v727 = vpop.f32.mrb[0].mxu0
    %728 = vdwg.mxu0
    %729 = vrot.lane.b32.xlu0 %v212, 112
    %v730 = vpop.permute.xlu0 %729
    %731 = vrot.lane.b32.xlu0 %v212, 80
    %v732 = vpop.permute.xlu0 %731
    %v733 = vsel %vm218, %v730, 0
    %v735 = vsel %vm218, %v732, 0
    %737 = vmatprep.subr.mxu0 0.0
    %738 = vmatpush1.xpose.msra.mxu0 %v735
    %739 = vmatprep.subr.mxu0 0.0
    %740 = vmatpush1.xpose.msra.mxu0 0.0
    %741 = vmatprep.subr.mxu0 0.0
    %742 = vmatpush1.xpose.msra.mxu0 0.0
    %743 = vmatprep.subr.mxu0 0.0
    %744 = vmatpush1.xpose.msra.mxu0 0.0
    %745 = vmatprep.subr.mxu0 0.0
    %746 = vmatpush1.xpose.msra.mxu0 0.0
    %747 = vmatprep.subr.mxu0 0.0
    %748 = vmatpush1.xpose.msra.mxu0 0.0
    %749 = vmatprep.subr.mxu0 0.0
    %750 = vmatpush1.xpose.msra.mxu0 0.0
    %751 = vmatprep.subr.mxu0 0.0
    %752 = vmatpush1.xpose.msra.mxu0 0.0
    %753 = vmatprep.subr.mxu0 0.0
    %754 = vmatpush1.xpose.msra.mxu0 0.0
    %755 = vmatprep.subr.mxu0 0.0
    %756 = vmatpush1.xpose.msra.mxu0 0.0
    %757 = vmatprep.subr.mxu0 0.0
    %758 = vmatpush1.xpose.msra.mxu0 0.0
    %759 = vmatprep.subr.mxu0 0.0
    %760 = vmatpush1.xpose.msra.mxu0 0.0
    %761 = vmatprep.subr.mxu0 0.0
    %762 = vmatpush1.xpose.msra.mxu0 0.0
    %763 = vmatprep.subr.mxu0 0.0
    %764 = vmatpush1.xpose.msra.mxu0 0.0
    %765 = vmatprep.subr.mxu0 0.0
    %766 = vmatpush1.xpose.msra.mxu0 0.0
    %767 = vmatprep.subr.mxu0 0.0
    %768 = vmatpush1.xpose.msra.mxu0 0.0
    %769 = vmatprep.subr.mxu0 0.0
    %770 = vmatpush1.xpose.msra.mxu0 0.0
    %771 = vmatprep.subr.mxu0 0.0
    %772 = vmatpush1.xpose.msra.mxu0 0.0
    %773 = vmatprep.subr.mxu0 0.0
    %774 = vmatpush1.xpose.msra.mxu0 0.0
    %775 = vmatprep.subr.mxu0 0.0
    %776 = vmatpush1.xpose.msra.mxu0 0.0
    %777 = vmatprep.subr.mxu0 0.0
    %778 = vmatpush1.xpose.msra.mxu0 0.0
    %779 = vmatprep.subr.mxu0 0.0
    %780 = vmatpush1.xpose.msra.mxu0 0.0
    %781 = vmatprep.subr.mxu0 0.0
    %782 = vmatpush1.xpose.msra.mxu0 0.0
    %783 = vmatprep.subr.mxu0 0.0
    %784 = vmatpush1.xpose.msra.mxu0 0.0
    %785 = vmatprep.subr.mxu0 0.0
    %786 = vmatpush1.xpose.msra.mxu0 0.0
    %787 = vmatprep.subr.mxu0 0.0
    %788 = vmatpush1.xpose.msra.mxu0 0.0
    %789 = vmatprep.subr.mxu0 0.0
    %790 = vmatpush1.xpose.msra.mxu0 0.0
    %791 = vmatprep.subr.mxu0 0.0
    %792 = vmatpush1.xpose.msra.mxu0 0.0
    %793 = vmatprep.subr.mxu0 0.0
    %794 = vmatpush1.xpose.msra.mxu0 0.0
    %795 = vmatprep.subr.mxu0 0.0
    %796 = vmatpush1.xpose.msra.mxu0 0.0
    %797 = vmatprep.subr.mxu0 0.0
    %798 = vmatpush1.xpose.msra.mxu0 0.0
    %799 = vmatprep.subr.mxu0 0.0
    %800 = vmatpush1.xpose.msra.mxu0 0.0
    %801 = vmatprep.mubr.f32.mxu0 0.0
    %802 = vmatmul.mubr.f32.gmra.mrb[0].mxu0 %v733
    %v803 = vpop.f32.mrb[0].mxu0
    %v804 = vadd.f32 0.0, %v803
    %v805 = vpop.f32.mrb[0].mxu0
    %806 = vdwg.mxu0
    %v807 = vmul.f32 %v804, 0.25
    %v808 = vadd.f32 %v807, %v640
    %v809 = vsel %vm299, %v808, -inf
    %810 = vmax.xlane.f32.xlu0 %v809
    %v811 = vpop.xlane.xlu0 %810
    %v812 = vsub.f32 %v808, %v811
    %v813 = vmul.f32 %v812, 1.442695
    %v814 = vpow.pop %v813
    %v815 = vsel %vm299, %v814, 0.0
    %816 = vadd.xlane.f32.xlu0 %v815
    %v817 = vpop.xlane.xlu0 %816
    %v818 = vrcp.pop %v817
    %v819 = vmul.f32 %v814, %v818
    %820 = vrot.lane.b32.xlu0 %v212, 48
    %v821 = vpop.permute.xlu0 %820
    %v824 = vsel %vm299, %v819, 0
    %826 = vmatprep.subr.mxu0 0.0
    %827 = vmatpush1.msra.mxu0 %v821
    %828 = vmatprep.subr.mxu0 0.0
    %829 = vmatpush1.msra.mxu0 0.0
    %830 = vmatprep.subr.mxu0 0.0
    %831 = vmatpush1.msra.mxu0 0.0
    %832 = vmatprep.subr.mxu0 0.0
    %833 = vmatpush1.msra.mxu0 0.0
    %834 = vmatprep.subr.mxu0 0.0
    %835 = vmatpush1.msra.mxu0 0.0
    %836 = vmatprep.subr.mxu0 0.0
    %837 = vmatpush1.msra.mxu0 0.0
    %838 = vmatprep.subr.mxu0 0.0
    %839 = vmatpush1.msra.mxu0 0.0
    %840 = vmatprep.subr.mxu0 0.0
    %841 = vmatpush1.msra.mxu0 0.0
    %842 = vmatprep.subr.mxu0 0.0
    %843 = vmatpush1.msra.mxu0 0.0
    %844 = vmatprep.subr.mxu0 0.0
    %845 = vmatpush1.msra.mxu0 0.0
    %846 = vmatprep.subr.mxu0 0.0
    %847 = vmatpush1.msra.mxu0 0.0
    %848 = vmatprep.subr.mxu0 0.0
    %849 = vmatpush1.msra.mxu0 0.0
    %850 = vmatprep.subr.mxu0 0.0
    %851 = vmatpush1.msra.mxu0 0.0
    %852 = vmatprep.subr.mxu0 0.0
    %853 = vmatpush1.msra.mxu0 0.0
    %854 = vmatprep.subr.mxu0 0.0
    %855 = vmatpush1.msra.mxu0 0.0
    %856 = vmatprep.subr.mxu0 0.0
    %857 = vmatpush1.msra.mxu0 0.0
    %858 = vmatprep.subr.mxu0 0.0
    %859 = vmatpush1.msra.mxu0 0.0
    %860 = vmatprep.subr.mxu0 0.0
    %861 = vmatpush1.msra.mxu0 0.0
    %862 = vmatprep.subr.mxu0 0.0
    %863 = vmatpush1.msra.mxu0 0.0
    %864 = vmatprep.subr.mxu0 0.0
    %865 = vmatpush1.msra.mxu0 0.0
    %866 = vmatprep.subr.mxu0 0.0
    %867 = vmatpush1.msra.mxu0 0.0
    %868 = vmatprep.subr.mxu0 0.0
    %869 = vmatpush1.msra.mxu0 0.0
    %870 = vmatprep.subr.mxu0 0.0
    %871 = vmatpush1.msra.mxu0 0.0
    %872 = vmatprep.subr.mxu0 0.0
    %873 = vmatpush1.msra.mxu0 0.0
    %874 = vmatprep.subr.mxu0 0.0
    %875 = vmatpush1.msra.mxu0 0.0
    %876 = vmatprep.subr.mxu0 0.0
    %877 = vmatpush1.msra.mxu0 0.0
    %878 = vmatprep.subr.mxu0 0.0
    %879 = vmatpush1.msra.mxu0 0.0
    %880 = vmatprep.subr.mxu0 0.0
    %881 = vmatpush1.msra.mxu0 0.0
    %882 = vmatprep.subr.mxu0 0.0
    %883 = vmatpush1.msra.mxu0 0.0
    %884 = vmatprep.subr.mxu0 0.0
    %885 = vmatpush1.msra.mxu0 0.0
    %886 = vmatprep.subr.mxu0 0.0
    %887 = vmatpush1.msra.mxu0 0.0
    %888 = vmatprep.subr.mxu0 0.0
    %889 = vmatpush1.msra.mxu0 0.0
    %890 = vmatprep.mubr.f32.mxu0 0.0
    %891 = vmatmul.mubr.f32.gmra.mrb[0].mxu0 %v824
    %v892 = vpop.f32.mrb[0].mxu0
    %v893 = vadd.f32 0.0, %v892
    %v894 = vpop.f32.mrb[0].mxu0
    %895 = vdwg.mxu0
    %897 = vrot.lane.b32.xlu0 %v893, 16
    %v898 = vpop.permute.xlu0 %897
    %v900 = vsel %vm218, %v726, %v898
    %v901 = vld [vmem:[%s7] sm:$0xff]
    %v902 = vld [vmem:[%s7 + $0x8] sm:$0xff]
    %v903 = vld [vmem:[%s7 + $0x10] sm:$0xff]
    %v904 = vld [vmem:[%s7 + $0x18] sm:$0xff]
    %v905 = vld [vmem:[%s8] sm:$0x1]
    %v907 = vlaneseq
    %v908 = vshrl.u32 %v907, 7
    %v909 = vsub.s32 0, %v908
    %v910 = vrot.slane %v905, %v909
    %v913 = vsel %vm76, %v558, 0
    %v916 = vsel %vm76, %v900, 0
    %918 = vmatprep.subr.mxu0 0.0
    %919 = vmatpush1.msra.mxu0 %v901
    %920 = vmatprep.subr.mxu0 0.0
    %921 = vmatpush1.msra.mxu0 %v902
    %922 = vmatprep.subr.mxu0 0.0
    %923 = vmatpush1.msra.mxu0 %v903
    %924 = vmatprep.subr.mxu0 0.0
    %925 = vmatpush1.msra.mxu0 %v904
    %926 = vmatprep.subr.mxu0 0.0
    %927 = vmatpush1.msra.mxu0 0.0
    %928 = vmatprep.subr.mxu0 0.0
    %929 = vmatpush1.msra.mxu0 0.0
    %930 = vmatprep.subr.mxu0 0.0
    %931 = vmatpush1.msra.mxu0 0.0
    %932 = vmatprep.subr.mxu0 0.0
    %933 = vmatpush1.msra.mxu0 0.0
    %934 = vmatprep.subr.mxu0 0.0
    %935 = vmatpush1.msra.mxu0 0.0
    %936 = vmatprep.subr.mxu0 0.0
    %937 = vmatpush1.msra.mxu0 0.0
    %938 = vmatprep.subr.mxu0 0.0
    %939 = vmatpush1.msra.mxu0 0.0
    %940 = vmatprep.subr.mxu0 0.0
    %941 = vmatpush1.msra.mxu0 0.0
    %942 = vmatprep.subr.mxu0 0.0
    %943 = vmatpush1.msra.mxu0 0.0
    %944 = vmatprep.subr.mxu0 0.0
    %945 = vmatpush1.msra.mxu0 0.0
    %946 = vmatprep.subr.mxu0 0.0
    %947 = vmatpush1.msra.mxu0 0.0
    %948 = vmatprep.subr.mxu0 0.0
    %949 = vmatpush1.msra.mxu0 0.0
    %950 = vmatprep.subr.mxu0 0.0
    %951 = vmatpush1.msra.mxu0 0.0
    %952 = vmatprep.subr.mxu0 0.0
    %953 = vmatpush1.msra.mxu0 0.0
    %954 = vmatprep.subr.mxu0 0.0
    %955 = vmatpush1.msra.mxu0 0.0
    %956 = vmatprep.subr.mxu0 0.0
    %957 = vmatpush1.msra.mxu0 0.0
    %958 = vmatprep.subr.mxu0 0.0
    %959 = vmatpush1.msra.mxu0 0.0
    %960 = vmatprep.subr.mxu0 0.0
    %961 = vmatpush1.msra.mxu0 0.0
    %962 = vmatprep.subr.mxu0 0.0
    %963 = vmatpush1.msra.mxu0 0.0
    %964 = vmatprep.subr.mxu0 0.0
    %965 = vmatpush1.msra.mxu0 0.0
    %966 = vmatprep.subr.mxu0 0.0
    %967 = vmatpush1.msra.mxu0 0.0
    %968 = vmatprep.subr.mxu0 0.0
    %969 = vmatpush1.msra.mxu0 0.0
    %970 = vmatprep.subr.mxu0 0.0
    %971 = vmatpush1.msra.mxu0 0.0
    %972 = vmatprep.subr.mxu0 0.0
    %973 = vmatpush1.msra.mxu0 0.0
    %974 = vmatprep.subr.mxu0 0.0
    %975 = vmatpush1.msra.mxu0 0.0
    %976 = vmatprep.subr.mxu0 0.0
    %977 = vmatpush1.msra.mxu0 0.0
    %978 = vmatprep.subr.mxu0 0.0
    %979 = vmatpush1.msra.mxu0 0.0
    %980 = vmatprep.subr.mxu0 0.0
    %981 = vmatpush1.msra.mxu0 0.0
    %982 = vmatprep.mubr.f32.mxu0 0.0
    %983 = vmatmul.mubr.f32.gmra.mrb[0].mxu0 %v913
    %v984 = vpop.f32.mrb[0].mxu0
    %v985 = vadd.f32 %v910, %v984
    %v986 = vpop.f32.mrb[0].mxu0
    %987 = vmatprep.mubr.f32.mxu0 0.0
    %988 = vmatmul.mubr.f32.gmra.mrb[0].mxu0 %v916
    %v989 = vpop.f32.mrb[0].mxu0
    %v990 = vadd.f32 %v910, %v989
    %v991 = vpop.f32.mrb[0].mxu0
    %992 = vdwg.mxu0
    %v993 = vadd.f32 %v985, %v118
    %v994 = vadd.f32 %v990, %v119
    %v995 = vld [vmem:[%s9] sm:$0x1]
    %v996 = vld [vmem:[%s10] sm:$0x1]
    %v997 = vsel %vm76, %v993, 0.0
    %998 = vadd.xlane.f32.xlu0 %v997
    %v999 = vpop.xlane.xlu0 %998
    %v1000 = vsel %vm76, %v994, 0.0
    %1001 = vadd.xlane.f32.xlu0 %v1000
    %v1002 = vpop.xlane.xlu0 %1001
    %v1003 = vmul.f32 %v999, %v83
    %v1004 = vmul.f32 %v1002, %v83
    %v1005 = vsub.f32 %v993, %v1003
    %v1006 = vsub.f32 %v994, %v1004
    %v1007 = vmul.f32 %v1005, %v1005
    %v1008 = vmul.f32 %v1006, %v1006
    %v1009 = vsel %vm76, %v1007, 0.0
    %1010 = vadd.xlane.f32.xlu0 %v1009
    %v1011 = vpop.xlane.xlu0 %1010
    %v1012 = vsel %vm76, %v1008, 0.0
    %1013 = vadd.xlane.f32.xlu0 %v1012
    %v1014 = vpop.xlane.xlu0 %1013
    %v1015 = vmul.f32 %v1011, %v83
    %v1016 = vmul.f32 %v1014, %v83
    %v1017 = vadd.f32 %v1015, 1e-12
    %v1018 = vadd.f32 %v1016, 1e-12
    %v1019 = vrsqrt.pop %v1017
    %v1020 = vrsqrt.pop %v1018
    %v1021 = vmul.f32 %v1005, %v1019
    %v1022 = vmul.f32 %v1006, %v1020
    %v1024 = vlaneseq
    %v1025 = vshrl.u32 %v1024, 7
    %v1026 = vsub.s32 0, %v1025
    %v1027 = vrot.slane %v995, %v1026
    %v1029 = vmul.f32 %v1021, %v1027
    %v1030 = vmul.f32 %v1022, %v1027
    %v1032 = vlaneseq
    %v1033 = vshrl.u32 %v1032, 7
    %v1034 = vsub.s32 0, %v1033
    %v1035 = vrot.slane %v996, %v1034
    %v1037 = vadd.f32 %v1029, %v1035
    %v1038 = vadd.f32 %v1030, %v1035
    %v1039 = vld [vmem:[%s11] sm:$0xff]
    %v1040 = vld [vmem:[%s11 + $0x8] sm:$0xff]
    %v1041 = vld [vmem:[%s11 + $0x10] sm:$0xff]
    %v1042 = vld [vmem:[%s11 + $0x18] sm:$0xff]
    %v1043 = vld [vmem:[%s12] sm:$0x1]
    %v1045 = vlaneseq
    %v1046 = vshrl.u32 %v1045, 7
    %v1047 = vsub.s32 0, %v1046
    %v1048 = vrot.slane %v1043, %v1047
    %v1051 = vsel %vm76, %v1037, 0
    %v1054 = vsel %vm76, %v1038, 0
    %1056 = vmatprep.subr.mxu0 0.0
    %1057 = vmatpush1.msra.mxu0 %v1039
    %1058 = vmatprep.subr.mxu0 0.0
    %1059 = vmatpush1.msra.mxu0 %v1040
    %1060 = vmatprep.subr.mxu0 0.0
    %1061 = vmatpush1.msra.mxu0 %v1041
    %1062 = vmatprep.subr.mxu0 0.0
    %1063 = vmatpush1.msra.mxu0 %v1042
    %1064 = vmatprep.subr.mxu0 0.0
    %1065 = vmatpush1.msra.mxu0 0.0
    %1066 = vmatprep.subr.mxu0 0.0
    %1067 = vmatpush1.msra.mxu0 0.0
    %1068 = vmatprep.subr.mxu0 0.0
    %1069 = vmatpush1.msra.mxu0 0.0
    %1070 = vmatprep.subr.mxu0 0.0
    %1071 = vmatpush1.msra.mxu0 0.0
    %1072 = vmatprep.subr.mxu0 0.0
    %1073 = vmatpush1.msra.mxu0 0.0
    %1074 = vmatprep.subr.mxu0 0.0
    %1075 = vmatpush1.msra.mxu0 0.0
    %1076 = vmatprep.subr.mxu0 0.0
    %1077 = vmatpush1.msra.mxu0 0.0
    %1078 = vmatprep.subr.mxu0 0.0
    %1079 = vmatpush1.msra.mxu0 0.0
    %1080 = vmatprep.subr.mxu0 0.0
    %1081 = vmatpush1.msra.mxu0 0.0
    %1082 = vmatprep.subr.mxu0 0.0
    %1083 = vmatpush1.msra.mxu0 0.0
    %1084 = vmatprep.subr.mxu0 0.0
    %1085 = vmatpush1.msra.mxu0 0.0
    %1086 = vmatprep.subr.mxu0 0.0
    %1087 = vmatpush1.msra.mxu0 0.0
    %1088 = vmatprep.subr.mxu0 0.0
    %1089 = vmatpush1.msra.mxu0 0.0
    %1090 = vmatprep.subr.mxu0 0.0
    %1091 = vmatpush1.msra.mxu0 0.0
    %1092 = vmatprep.subr.mxu0 0.0
    %1093 = vmatpush1.msra.mxu0 0.0
    %1094 = vmatprep.subr.mxu0 0.0
    %1095 = vmatpush1.msra.mxu0 0.0
    %1096 = vmatprep.subr.mxu0 0.0
    %1097 = vmatpush1.msra.mxu0 0.0
    %1098 = vmatprep.subr.mxu0 0.0
    %1099 = vmatpush1.msra.mxu0 0.0
    %1100 = vmatprep.subr.mxu0 0.0
    %1101 = vmatpush1.msra.mxu0 0.0
    %1102 = vmatprep.subr.mxu0 0.0
    %1103 = vmatpush1.msra.mxu0 0.0
    %1104 = vmatprep.subr.mxu0 0.0
    %1105 = vmatpush1.msra.mxu0 0.0
    %1106 = vmatprep.subr.mxu0 0.0
    %1107 = vmatpush1.msra.mxu0 0.0
    %1108 = vmatprep.subr.mxu0 0.0
    %1109 = vmatpush1.msra.mxu0 0.0
    %1110 = vmatprep.subr.mxu0 0.0
    %1111 = vmatpush1.msra.mxu0 0.0
    %1112 = vmatprep.subr.mxu0 0.0
    %1113 = vmatpush1.msra.mxu0 0.0
    %1114 = vmatprep.subr.mxu0 0.0
    %1115 = vmatpush1.msra.mxu0 0.0
    %1116 = vmatprep.subr.mxu0 0.0
    %1117 = vmatpush1.msra.mxu0 0.0
    %1118 = vmatprep.subr.mxu0 0.0
    %1119 = vmatpush1.msra.mxu0 0.0
    %1120 = vmatprep.mubr.f32.mxu0 0.0
    %1121 = vmatmul.mubr.f32.gmra.mrb[0].mxu0 %v1051
    %v1122 = vpop.f32.mrb[0].mxu0
    %v1123 = vadd.f32 %v1048, %v1122
    %v1124 = vpop.f32.mrb[0].mxu0
    %1125 = vmatprep.mubr.f32.mxu0 0.0
    %1126 = vmatmul.mubr.f32.gmra.mrb[0].mxu0 %v1054
    %v1127 = vpop.f32.mrb[0].mxu0
    %v1128 = vadd.f32 %v1048, %v1127
    %v1129 = vpop.f32.mrb[0].mxu0
    %1130 = vdwg.mxu0
    %v1131 = vmul.f32 %v1123, 0.5
    %v1132 = vmul.f32 %v1128, 0.5
    %v1133 = vmul.f32 %v1123, 0.044715
    %v1134 = vmul.f32 %v1128, 0.044715
    %v1135 = vmul.f32 %v1133, %v1123
    %v1136 = vmul.f32 %v1134, %v1128
    %v1137 = vmul.f32 %v1135, %v1123
    %v1138 = vmul.f32 %v1136, %v1128
    %v1139 = vadd.f32 %v1123, %v1137
    %v1140 = vadd.f32 %v1128, %v1138
    %v1141 = vmul.f32 %v1139, 0.7978846
    %v1142 = vmul.f32 %v1140, 0.7978846
    %v1143 = vtanh.pop %v1141
    %v1144 = vtanh.pop %v1142
    %v1145 = vadd.f32 %v1143, 1.0
    %v1146 = vadd.f32 %v1144, 1.0
    %v1147 = vmul.f32 %v1131, %v1145
    %v1148 = vmul.f32 %v1132, %v1146
    %v1149 = vld [vmem:[%s13] sm:$0xff]
    %v1150 = vld [vmem:[%s13 + $0x8] sm:$0xff]
    %v1151 = vld [vmem:[%s13 + $0x10] sm:$0xff]
    %v1152 = vld [vmem:[%s13 + $0x18] sm:$0xff]
    %v1153 = vld [vmem:[%s13 + $0x20] sm:$0xff]
    %v1154 = vld [vmem:[%s13 + $0x28] sm:$0xff]
    %v1155 = vld [vmem:[%s13 + $0x30] sm:$0xff]
    %v1156 = vld [vmem:[%s13 + $0x38] sm:$0xff]
    %v1157 = vld [vmem:[%s14] sm:$0x1]
    %v1159 = vlaneseq
    %v1160 = vshrl.u32 %v1159, 7
    %v1161 = vsub.s32 0, %v1160
    %v1162 = vrot.slane %v1157, %v1161
    %vm1164 = vcmask 523264
    %v1166 = vsel %vm1164, %v1147, 0
    %v1169 = vsel %vm1164, %v1148, 0
    %1171 = vmatprep.subr.mxu0 0.0
    %1172 = vmatpush1.msra.mxu0 %v1149
    %1173 = vmatprep.subr.mxu0 0.0
    %1174 = vmatpush1.msra.mxu0 %v1150
    %1175 = vmatprep.subr.mxu0 0.0
    %1176 = vmatpush1.msra.mxu0 %v1151
    %1177 = vmatprep.subr.mxu0 0.0
    %1178 = vmatpush1.msra.mxu0 %v1152
    %1179 = vmatprep.subr.mxu0 0.0
    %1180 = vmatpush1.msra.mxu0 %v1153
    %1181 = vmatprep.subr.mxu0 0.0
    %1182 = vmatpush1.msra.mxu0 %v1154
    %1183 = vmatprep.subr.mxu0 0.0
    %1184 = vmatpush1.msra.mxu0 %v1155
    %1185 = vmatprep.subr.mxu0 0.0
    %1186 = vmatpush1.msra.mxu0 %v1156
    %1187 = vmatprep.subr.mxu0 0.0
    %1188 = vmatpush1.msra.mxu0 0.0
    %1189 = vmatprep.subr.mxu0 0.0
    %1190 = vmatpush1.msra.mxu0 0.0
    %1191 = vmatprep.subr.mxu0 0.0
    %1192 = vmatpush1.msra.mxu0 0.0
    %1193 = vmatprep.subr.mxu0 0.0
    %1194 = vmatpush1.msra.mxu0 0.0
    %1195 = vmatprep.subr.mxu0 0.0
    %1196 = vmatpush1.msra.mxu0 0.0
    %1197 = vmatprep.subr.mxu0 0.0
    %1198 = vmatpush1.msra.mxu0 0.0
    %1199 = vmatprep.subr.mxu0 0.0
    %1200 = vmatpush1.msra.mxu0 0.0
    %1201 = vmatprep.subr.mxu0 0.0
    %1202 = vmatpush1.msra.mxu0 0.0
    %1203 = vmatprep.subr.mxu0 0.0
    %1204 = vmatpush1.msra.mxu0 0.0
    %1205 = vmatprep.subr.mxu0 0.0
    %1206 = vmatpush1.msra.mxu0 0.0
    %1207 = vmatprep.subr.mxu0 0.0
    %1208 = vmatpush1.msra.mxu0 0.0
    %1209 = vmatprep.subr.mxu0 0.0
    %1210 = vmatpush1.msra.mxu0 0.0
    %1211 = vmatprep.subr.mxu0 0.0
    %1212 = vmatpush1.msra.mxu0 0.0
    %1213 = vmatprep.subr.mxu0 0.0
    %1214 = vmatpush1.msra.mxu0 0.0
    %1215 = vmatprep.subr.mxu0 0.0
    %1216 = vmatpush1.msra.mxu0 0.0
    %1217 = vmatprep.subr.mxu0 0.0
    %1218 = vmatpush1.msra.mxu0 0.0
    %1219 = vmatprep.subr.mxu0 0.0
    %1220 = vmatpush1.msra.mxu0 0.0
    %1221 = vmatprep.subr.mxu0 0.0
    %1222 = vmatpush1.msra.mxu0 0.0
    %1223 = vmatprep.subr.mxu0 0.0
    %1224 = vmatpush1.msra.mxu0 0.0
    %1225 = vmatprep.subr.mxu0 0.0
    %1226 = vmatpush1.msra.mxu0 0.0
    %1227 = vmatprep.subr.mxu0 0.0
    %1228 = vmatpush1.msra.mxu0 0.0
    %1229 = vmatprep.subr.mxu0 0.0
    %1230 = vmatpush1.msra.mxu0 0.0
    %1231 = vmatprep.subr.mxu0 0.0
    %1232 = vmatpush1.msra.mxu0 0.0
    %1233 = vmatprep.subr.mxu0 0.0
    %1234 = vmatpush1.msra.mxu0 0.0
    %1235 = vmatprep.mubr.f32.mxu0 0.0
    %1236 = vmatmul.mubr.f32.gmra.mrb[0].mxu0 %v1166
    %v1237 = vpop.f32.mrb[0].mxu0
    %v1238 = vadd.f32 %v1162, %v1237
    %v1239 = vpop.f32.mrb[0].mxu0
    %1240 = vmatprep.mubr.f32.mxu0 0.0
    %1241 = vmatmul.mubr.f32.gmra.mrb[0].mxu0 %v1169
    %v1242 = vpop.f32.mrb[0].mxu0
    %v1243 = vadd.f32 %v1162, %v1242
    %v1244 = vpop.f32.mrb[0].mxu0
    %1245 = vdwg.mxu0
    %v1246 = vadd.f32 %v1238, %v1037
    %v1247 = vadd.f32 %v1243, %v1038
    %v1248 = vld [vmem:[%s15] sm:$0x1]
    %v1249 = vld [vmem:[%s16] sm:$0x1]
    %v1250 = vsel %vm76, %v1246, 0.0
    %1251 = vadd.xlane.f32.xlu0 %v1250
    %v1252 = vpop.xlane.xlu0 %1251
    %v1253 = vsel %vm76, %v1247, 0.0
    %1254 = vadd.xlane.f32.xlu0 %v1253
    %v1255 = vpop.xlane.xlu0 %1254
    %v1256 = vmul.f32 %v1252, %v83
    %v1257 = vmul.f32 %v1255, %v83
    %v1258 = vsub.f32 %v1246, %v1256
    %v1259 = vsub.f32 %v1247, %v1257
    %v1260 = vmul.f32 %v1258, %v1258
    %v1261 = vmul.f32 %v1259, %v1259
    %v1262 = vsel %vm76, %v1260, 0.0
    %1263 = vadd.xlane.f32.xlu0 %v1262
    %v1264 = vpop.xlane.xlu0 %1263
    %v1265 = vsel %vm76, %v1261, 0.0
    %1266 = vadd.xlane.f32.xlu0 %v1265
    %v1267 = vpop.xlane.xlu0 %1266
    %v1268 = vmul.f32 %v1264, %v83
    %v1269 = vmul.f32 %v1267, %v83
    %v1270 = vadd.f32 %v1268, 1e-12
    %v1271 = vadd.f32 %v1269, 1e-12
    %v1272 = vrsqrt.pop %v1270
    %v1273 = vrsqrt.pop %v1271
    %v1274 = vmul.f32 %v1258, %v1272
    %v1275 = vmul.f32 %v1259, %v1273
    %v1277 = vlaneseq
    %v1278 = vshrl.u32 %v1277, 7
    %v1279 = vsub.s32 0, %v1278
    %v1280 = vrot.slane %v1248, %v1279
    %v1282 = vmul.f32 %v1274, %v1280
    %v1283 = vmul.f32 %v1275, %v1280
    %v1285 = vlaneseq
    %v1286 = vshrl.u32 %v1285, 7
    %v1287 = vsub.s32 0, %v1286
    %v1288 = vrot.slane %v1249, %v1287
    %v1290 = vadd.f32 %v1282, %v1288
    %v1291 = vadd.f32 %v1283, %v1288
    %s1292 = scalar_lea.vmem %s5, 32
    %v1293 = vld [vmem:[%s1292] sm:$0xff]
    %v1294 = vld [vmem:[%s1292 + $0x8] sm:$0xff]
    %v1295 = vld [vmem:[%s1292 + $0x10] sm:$0xff]
    %v1296 = vld [vmem:[%s1292 + $0x18] sm:$0xff]
    %s1297 = scalar_lea.vmem %s6, 1
    %v1298 = vld [vmem:[%s1297] sm:$0x1]
    %v1300 = vlaneseq
    %v1301 = vshrl.u32 %v1300, 7
    %v1302 = vsub.s32 0, %v1301
    %v1303 = vrot.slane %v1298, %v1302
    %v1306 = vsel %vm76, %v1290, 0
    %v1309 = vsel %vm76, %v1291, 0
    %1311 = vmatprep.subr.mxu0 0.0
    %1312 = vmatpush1.msra.mxu0 %v1293
    %1313 = vmatprep.subr.mxu0 0.0
    %1314 = vmatpush1.msra.mxu0 %v1294
    %1315 = vmatprep.subr.mxu0 0.0
    %1316 = vmatpush1.msra.mxu0 %v1295
    %1317 = vmatprep.subr.mxu0 0.0
    %1318 = vmatpush1.msra.mxu0 %v1296
    %1319 = vmatprep.subr.mxu0 0.0
    %1320 = vmatpush1.msra.mxu0 0.0
    %1321 = vmatprep.subr.mxu0 0.0
    %1322 = vmatpush1.msra.mxu0 0.0
    %1323 = vmatprep.subr.mxu0 0.0
    %1324 = vmatpush1.msra.mxu0 0.0
    %1325 = vmatprep.subr.mxu0 0.0
    %1326 = vmatpush1.msra.mxu0 0.0
    %1327 = vmatprep.subr.mxu0 0.0
    %1328 = vmatpush1.msra.mxu0 0.0
    %1329 = vmatprep.subr.mxu0 0.0
    %1330 = vmatpush1.msra.mxu0 0.0
    %1331 = vmatprep.subr.mxu0 0.0
    %1332 = vmatpush1.msra.mxu0 0.0
    %1333 = vmatprep.subr.mxu0 0.0
    %1334 = vmatpush1.msra.mxu0 0.0
    %1335 = vmatprep.subr.mxu0 0.0
    %1336 = vmatpush1.msra.mxu0 0.0
    %1337 = vmatprep.subr.mxu0 0.0
    %1338 = vmatpush1.msra.mxu0 0.0
    %1339 = vmatprep.subr.mxu0 0.0
    %1340 = vmatpush1.msra.mxu0 0.0
    %1341 = vmatprep.subr.mxu0 0.0
    %1342 = vmatpush1.msra.mxu0 0.0
    %1343 = vmatprep.subr.mxu0 0.0
    %1344 = vmatpush1.msra.mxu0 0.0
    %1345 = vmatprep.subr.mxu0 0.0
    %1346 = vmatpush1.msra.mxu0 0.0
    %1347 = vmatprep.subr.mxu0 0.0
    %1348 = vmatpush1.msra.mxu0 0.0
    %1349 = vmatprep.subr.mxu0 0.0
    %1350 = vmatpush1.msra.mxu0 0.0
    %1351 = vmatprep.subr.mxu0 0.0
    %1352 = vmatpush1.msra.mxu0 0.0
    %1353 = vmatprep.subr.mxu0 0.0
    %1354 = vmatpush1.msra.mxu0 0.0
    %1355 = vmatprep.subr.mxu0 0.0
    %1356 = vmatpush1.msra.mxu0 0.0
    %1357 = vmatprep.subr.mxu0 0.0
    %1358 = vmatpush1.msra.mxu0 0.0
    %1359 = vmatprep.subr.mxu0 0.0
    %1360 = vmatpush1.msra.mxu0 0.0
    %1361 = vmatprep.subr.mxu0 0.0
    %1362 = vmatpush1.msra.mxu0 0.0
    %1363 = vmatprep.subr.mxu0 0.0
    %1364 = vmatpush1.msra.mxu0 0.0
    %1365 = vmatprep.subr.mxu0 0.0
    %1366 = vmatpush1.msra.mxu0 0.0
    %1367 = vmatprep.subr.mxu0 0.0
    %1368 = vmatpush1.msra.mxu0 0.0
    %1369 = vmatprep.subr.mxu0 0.0
    %1370 = vmatpush1.msra.mxu0 0.0
    %1371 = vmatprep.subr.mxu0 0.0
    %1372 = vmatpush1.msra.mxu0 0.0
    %1373 = vmatprep.subr.mxu0 0.0
    %1374 = vmatpush1.msra.mxu0 0.0
    %1375 = vmatprep.mubr.f32.mxu0 0.0
    %1376 = vmatmul.mubr.f32.gmra.mrb[0].mxu0 %v1306
    %v1377 = vpop.f32.mrb[0].mxu0
    %v1378 = vadd.f32 %v1303, %v1377
    %v1379 = vpop.f32.mrb[0].mxu0
    %1380 = vmatprep.mubr.f32.mxu0 0.0
    %1381 = vmatmul.mubr.f32.gmra.mrb[0].mxu0 %v1309
    %v1382 = vpop.f32.mrb[0].mxu0
    %v1383 = vadd.f32 %v1303, %v1382
    %v1384 = vpop.f32.mrb[0].mxu0
    %1385 = vdwg.mxu0
    %1387 = vrot.lane.b32.xlu0 %v1378, 96
    %v1388 = vpop.permute.xlu0 %1387
    %v1389 = vsel %vm218, %v1378, 0
    %v1391 = vsel %vm218, %v1388, 0
    %1393 = vmatprep.subr.mxu0 0.0
    %1394 = vmatpush1.xpose.msra.mxu0 %v1391
    %1395 = vmatprep.subr.mxu0 0.0
    %1396 = vmatpush1.xpose.msra.mxu0 0.0
    %1397 = vmatprep.subr.mxu0 0.0
    %1398 = vmatpush1.xpose.msra.mxu0 0.0
    %1399 = vmatprep.subr.mxu0 0.0
    %1400 = vmatpush1.xpose.msra.mxu0 0.0
    %1401 = vmatprep.subr.mxu0 0.0
    %1402 = vmatpush1.xpose.msra.mxu0 0.0
    %1403 = vmatprep.subr.mxu0 0.0
    %1404 = vmatpush1.xpose.msra.mxu0 0.0
    %1405 = vmatprep.subr.mxu0 0.0
    %1406 = vmatpush1.xpose.msra.mxu0 0.0
    %1407 = vmatprep.subr.mxu0 0.0
    %1408 = vmatpush1.xpose.msra.mxu0 0.0
    %1409 = vmatprep.subr.mxu0 0.0
    %1410 = vmatpush1.xpose.msra.mxu0 0.0
    %1411 = vmatprep.subr.mxu0 0.0
    %1412 = vmatpush1.xpose.msra.mxu0 0.0
    %1413 = vmatprep.subr.mxu0 0.0
    %1414 = vmatpush1.xpose.msra.mxu0 0.0
    %1415 = vmatprep.subr.mxu0 0.0
    %1416 = vmatpush1.xpose.msra.mxu0 0.0
    %1417 = vmatprep.subr.mxu0 0.0
    %1418 = vmatpush1.xpose.msra.mxu0 0.0
    %1419 = vmatprep.subr.mxu0 0.0
    %1420 = vmatpush1.xpose.msra.mxu0 0.0
    %1421 = vmatprep.subr.mxu0 0.0
    %1422 = vmatpush1.xpose.msra.mxu0 0.0
    %1423 = vmatprep.subr.mxu0 0.0
    %1424 = vmatpush1.xpose.msra.mxu0 0.0
    %1425 = vmatprep.subr.mxu0 0.0
    %1426 = vmatpush1.xpose.msra.mxu0 0.0
    %1427 = vmatprep.subr.mxu0 0.0
    %1428 = vmatpush1.xpose.msra.mxu0 0.0
    %1429 = vmatprep.subr.mxu0 0.0
    %1430 = vmatpush1.xpose.msra.mxu0 0.0
    %1431 = vmatprep.subr.mxu0 0.0
    %1432 = vmatpush1.xpose.msra.mxu0 0.0
    %1433 = vmatprep.subr.mxu0 0.0
    %1434 = vmatpush1.xpose.msra.mxu0 0.0
    %1435 = vmatprep.subr.mxu0 0.0
    %1436 = vmatpush1.xpose.msra.mxu0 0.0
    %1437 = vmatprep.subr.mxu0 0.0
    %1438 = vmatpush1.xpose.msra.mxu0 0.0
    %1439 = vmatprep.subr.mxu0 0.0
    %1440 = vmatpush1.xpose.msra.mxu0 0.0
    %1441 = vmatprep.subr.mxu0 0.0
    %1442 = vmatpush1.xpose.msra.mxu0 0.0
    %1443 = vmatprep.subr.mxu0 0.0
    %1444 = vmatpush1.xpose.msra.mxu0 0.0
    %1445 = vmatprep.subr.mxu0 0.0
    %1446 = vmatpush1.xpose.msra.mxu0 0.0
    %1447 = vmatprep.subr.mxu0 0.0
    %1448 = vmatpush1.xpose.msra.mxu0 0.0
    %1449 = vmatprep.subr.mxu0 0.0
    %1450 = vmatpush1.xpose.msra.mxu0 0.0
    %1451 = vmatprep.subr.mxu0 0.0
    %1452 = vmatpush1.xpose.msra.mxu0 0.0
    %1453 = vmatprep.subr.mxu0 0.0
    %1454 = vmatpush1.xpose.msra.mxu0 0.0
    %1455 = vmatprep.subr.mxu0 0.0
    %1456 = vmatpush1.xpose.msra.mxu0 0.0
    %1457 = vmatprep.mubr.f32.mxu0 0.0
    %1458 = vmatmul.mubr.f32.gmra.mrb[0].mxu0 %v1389
    %v1459 = vpop.f32.mrb[0].mxu0
    %v1460 = vadd.f32 0.0, %v1459
    %v1461 = vpop.f32.mrb[0].mxu0
    %1462 = vdwg.mxu0
    %v1463 = vmul.f32 %v1460, 0.25
    %v1464 = vadd.f32 %v1463, %v297
    %v1465 = vsel %vm299, %v1464, -inf
    %1466 = vmax.xlane.f32.xlu0 %v1465
    %v1467 = vpop.xlane.xlu0 %1466
    %v1468 = vsub.f32 %v1464, %v1467
    %v1469 = vmul.f32 %v1468, 1.442695
    %v1470 = vpow.pop %v1469
    %v1471 = vsel %vm299, %v1470, 0.0
    %1472 = vadd.xlane.f32.xlu0 %v1471
    %v1473 = vpop.xlane.xlu0 %1472
    %v1474 = vrcp.pop %v1473
    %v1475 = vmul.f32 %v1470, %v1474
    %1476 = vrot.lane.b32.xlu0 %v1378, 64
    %v1477 = vpop.permute.xlu0 %1476
    %v1480 = vsel %vm299, %v1475, 0
    %1482 = vmatprep.subr.mxu0 0.0
    %1483 = vmatpush1.msra.mxu0 %v1477
    %1484 = vmatprep.subr.mxu0 0.0
    %1485 = vmatpush1.msra.mxu0 0.0
    %1486 = vmatprep.subr.mxu0 0.0
    %1487 = vmatpush1.msra.mxu0 0.0
    %1488 = vmatprep.subr.mxu0 0.0
    %1489 = vmatpush1.msra.mxu0 0.0
    %1490 = vmatprep.subr.mxu0 0.0
    %1491 = vmatpush1.msra.mxu0 0.0
    %1492 = vmatprep.subr.mxu0 0.0
    %1493 = vmatpush1.msra.mxu0 0.0
    %1494 = vmatprep.subr.mxu0 0.0
    %1495 = vmatpush1.msra.mxu0 0.0
    %1496 = vmatprep.subr.mxu0 0.0
    %1497 = vmatpush1.msra.mxu0 0.0
    %1498 = vmatprep.subr.mxu0 0.0
    %1499 = vmatpush1.msra.mxu0 0.0
    %1500 = vmatprep.subr.mxu0 0.0
    %1501 = vmatpush1.msra.mxu0 0.0
    %1502 = vmatprep.subr.mxu0 0.0
    %1503 = vmatpush1.msra.mxu0 0.0
    %1504 = vmatprep.subr.mxu0 0.0
    %1505 = vmatpush1.msra.mxu0 0.0
    %1506 = vmatprep.subr.mxu0 0.0
    %1507 = vmatpush1.msra.mxu0 0.0
    %1508 = vmatprep.subr.mxu0 0.0
    %1509 = vmatpush1.msra.mxu0 0.0
    %1510 = vmatprep.subr.mxu0 0.0
    %1511 = vmatpush1.msra.mxu0 0.0
    %1512 = vmatprep.subr.mxu0 0.0
    %1513 = vmatpush1.msra.mxu0 0.0
    %1514 = vmatprep.subr.mxu0 0.0
    %1515 = vmatpush1.msra.mxu0 0.0
    %1516 = vmatprep.subr.mxu0 0.0
    %1517 = vmatpush1.msra.mxu0 0.0
    %1518 = vmatprep.subr.mxu0 0.0
    %1519 = vmatpush1.msra.mxu0 0.0
    %1520 = vmatprep.subr.mxu0 0.0
    %1521 = vmatpush1.msra.mxu0 0.0
    %1522 = vmatprep.subr.mxu0 0.0
    %1523 = vmatpush1.msra.mxu0 0.0
    %1524 = vmatprep.subr.mxu0 0.0
    %1525 = vmatpush1.msra.mxu0 0.0
    %1526 = vmatprep.subr.mxu0 0.0
    %1527 = vmatpush1.msra.mxu0 0.0
    %1528 = vmatprep.subr.mxu0 0.0
    %1529 = vmatpush1.msra.mxu0 0.0
    %1530 = vmatprep.subr.mxu0 0.0
    %1531 = vmatpush1.msra.mxu0 0.0
    %1532 = vmatprep.subr.mxu0 0.0
    %1533 = vmatpush1.msra.mxu0 0.0
    %1534 = vmatprep.subr.mxu0 0.0
    %1535 = vmatpush1.msra.mxu0 0.0
    %1536 = vmatprep.subr.mxu0 0.0
    %1537 = vmatpush1.msra.mxu0 0.0
    %1538 = vmatprep.subr.mxu0 0.0
    %1539 = vmatpush1.msra.mxu0 0.0
    %1540 = vmatprep.subr.mxu0 0.0
    %1541 = vmatpush1.msra.mxu0 0.0
    %1542 = vmatprep.subr.mxu0 0.0
    %1543 = vmatpush1.msra.mxu0 0.0
    %1544 = vmatprep.subr.mxu0 0.0
    %1545 = vmatpush1.msra.mxu0 0.0
    %1546 = vmatprep.mubr.f32.mxu0 0.0
    %1547 = vmatmul.mubr.f32.gmra.mrb[0].mxu0 %v1480
    %v1548 = vpop.f32.mrb[0].mxu0
    %v1549 = vadd.f32 0.0, %v1548
    %v1550 = vpop.f32.mrb[0].mxu0
    %1551 = vdwg.mxu0
    %1552 = vrot.lane.b32.xlu0 %v1378, 112
    %v1553 = vpop.permute.xlu0 %1552
    %1554 = vrot.lane.b32.xlu0 %v1378, 80
    %v1555 = vpop.permute.xlu0 %1554
    %v1556 = vsel %vm218, %v1553, 0
    %v1558 = vsel %vm218, %v1555, 0
    %1560 = vmatprep.subr.mxu0 0.0
    %1561 = vmatpush1.xpose.msra.mxu0 %v1558
    %1562 = vmatprep.subr.mxu0 0.0
    %1563 = vmatpush1.xpose.msra.mxu0 0.0
    %1564 = vmatprep.subr.mxu0 0.0
    %1565 = vmatpush1.xpose.msra.mxu0 0.0
    %1566 = vmatprep.subr.mxu0 0.0
    %1567 = vmatpush1.xpose.msra.mxu0 0.0
    %1568 = vmatprep.subr.mxu0 0.0
    %1569 = vmatpush1.xpose.msra.mxu0 0.0
    %1570 = vmatprep.subr.mxu0 0.0
    %1571 = vmatpush1.xpose.msra.mxu0 0.0
    %1572 = vmatprep.subr.mxu0 0.0
    %1573 = vmatpush1.xpose.msra.mxu0 0.0
    %1574 = vmatprep.subr.mxu0 0.0
    %1575 = vmatpush1.xpose.msra.mxu0 0.0
    %1576 = vmatprep.subr.mxu0 0.0
    %1577 = vmatpush1.xpose.msra.mxu0 0.0
    %1578 = vmatprep.subr.mxu0 0.0
    %1579 = vmatpush1.xpose.msra.mxu0 0.0
    %1580 = vmatprep.subr.mxu0 0.0
    %1581 = vmatpush1.xpose.msra.mxu0 0.0
    %1582 = vmatprep.subr.mxu0 0.0
    %1583 = vmatpush1.xpose.msra.mxu0 0.0
    %1584 = vmatprep.subr.mxu0 0.0
    %1585 = vmatpush1.xpose.msra.mxu0 0.0
    %1586 = vmatprep.subr.mxu0 0.0
    %1587 = vmatpush1.xpose.msra.mxu0 0.0
    %1588 = vmatprep.subr.mxu0 0.0
    %1589 = vmatpush1.xpose.msra.mxu0 0.0
    %1590 = vmatprep.subr.mxu0 0.0
    %1591 = vmatpush1.xpose.msra.mxu0 0.0
    %1592 = vmatprep.subr.mxu0 0.0
    %1593 = vmatpush1.xpose.msra.mxu0 0.0
    %1594 = vmatprep.subr.mxu0 0.0
    %1595 = vmatpush1.xpose.msra.mxu0 0.0
    %1596 = vmatprep.subr.mxu0 0.0
    %1597 = vmatpush1.xpose.msra.mxu0 0.0
    %1598 = vmatprep.subr.mxu0 0.0
    %1599 = vmatpush1.xpose.msra.mxu0 0.0
    %1600 = vmatprep.subr.mxu0 0.0
    %1601 = vmatpush1.xpose.msra.mxu0 0.0
    %1602 = vmatprep.subr.mxu0 0.0
    %1603 = vmatpush1.xpose.msra.mxu0 0.0
    %1604 = vmatprep.subr.mxu0 0.0
    %1605 = vmatpush1.xpose.msra.mxu0 0.0
    %1606 = vmatprep.subr.mxu0 0.0
    %1607 = vmatpush1.xpose.msra.mxu0 0.0
    %1608 = vmatprep.subr.mxu0 0.0
    %1609 = vmatpush1.xpose.msra.mxu0 0.0
    %1610 = vmatprep.subr.mxu0 0.0
    %1611 = vmatpush1.xpose.msra.mxu0 0.0
    %1612 = vmatprep.subr.mxu0 0.0
    %1613 = vmatpush1.xpose.msra.mxu0 0.0
    %1614 = vmatprep.subr.mxu0 0.0
    %1615 = vmatpush1.xpose.msra.mxu0 0.0
    %1616 = vmatprep.subr.mxu0 0.0
    %1617 = vmatpush1.xpose.msra.mxu0 0.0
    %1618 = vmatprep.subr.mxu0 0.0
    %1619 = vmatpush1.xpose.msra.mxu0 0.0
    %1620 = vmatprep.subr.mxu0 0.0
    %1621 = vmatpush1.xpose.msra.mxu0 0.0
    %1622 = vmatprep.subr.mxu0 0.0
    %1623 = vmatpush1.xpose.msra.mxu0 0.0
    %1624 = vmatprep.mubr.f32.mxu0 0.0
    %1625 = vmatmul.mubr.f32.gmra.mrb[0].mxu0 %v1556
    %v1626 = vpop.f32.mrb[0].mxu0
    %v1627 = vadd.f32 0.0, %v1626
    %v1628 = vpop.f32.mrb[0].mxu0
    %1629 = vdwg.mxu0
    %v1630 = vmul.f32 %v1627, 0.25
    %v1631 = vadd.f32 %v1630, %v297
    %v1632 = vsel %vm299, %v1631, -inf
    %1633 = vmax.xlane.f32.xlu0 %v1632
    %v1634 = vpop.xlane.xlu0 %1633
    %v1635 = vsub.f32 %v1631, %v1634
    %v1636 = vmul.f32 %v1635, 1.442695
    %v1637 = vpow.pop %v1636
    %v1638 = vsel %vm299, %v1637, 0.0
    %1639 = vadd.xlane.f32.xlu0 %v1638
    %v1640 = vpop.xlane.xlu0 %1639
    %v1641 = vrcp.pop %v1640
    %v1642 = vmul.f32 %v1637, %v1641
    %1643 = vrot.lane.b32.xlu0 %v1378, 48
    %v1644 = vpop.permute.xlu0 %1643
    %v1647 = vsel %vm299, %v1642, 0
    %1649 = vmatprep.subr.mxu0 0.0
    %1650 = vmatpush1.msra.mxu0 %v1644
    %1651 = vmatprep.subr.mxu0 0.0
    %1652 = vmatpush1.msra.mxu0 0.0
    %1653 = vmatprep.subr.mxu0 0.0
    %1654 = vmatpush1.msra.mxu0 0.0
    %1655 = vmatprep.subr.mxu0 0.0
    %1656 = vmatpush1.msra.mxu0 0.0
    %1657 = vmatprep.subr.mxu0 0.0
    %1658 = vmatpush1.msra.mxu0 0.0
    %1659 = vmatprep.subr.mxu0 0.0
    %1660 = vmatpush1.msra.mxu0 0.0
    %1661 = vmatprep.subr.mxu0 0.0
    %1662 = vmatpush1.msra.mxu0 0.0
    %1663 = vmatprep.subr.mxu0 0.0
    %1664 = vmatpush1.msra.mxu0 0.0
    %1665 = vmatprep.subr.mxu0 0.0
    %1666 = vmatpush1.msra.mxu0 0.0
    %1667 = vmatprep.subr.mxu0 0.0
    %1668 = vmatpush1.msra.mxu0 0.0
    %1669 = vmatprep.subr.mxu0 0.0
    %1670 = vmatpush1.msra.mxu0 0.0
    %1671 = vmatprep.subr.mxu0 0.0
    %1672 = vmatpush1.msra.mxu0 0.0
    %1673 = vmatprep.subr.mxu0 0.0
    %1674 = vmatpush1.msra.mxu0 0.0
    %1675 = vmatprep.subr.mxu0 0.0
    %1676 = vmatpush1.msra.mxu0 0.0
    %1677 = vmatprep.subr.mxu0 0.0
    %1678 = vmatpush1.msra.mxu0 0.0
    %1679 = vmatprep.subr.mxu0 0.0
    %1680 = vmatpush1.msra.mxu0 0.0
    %1681 = vmatprep.subr.mxu0 0.0
    %1682 = vmatpush1.msra.mxu0 0.0
    %1683 = vmatprep.subr.mxu0 0.0
    %1684 = vmatpush1.msra.mxu0 0.0
    %1685 = vmatprep.subr.mxu0 0.0
    %1686 = vmatpush1.msra.mxu0 0.0
    %1687 = vmatprep.subr.mxu0 0.0
    %1688 = vmatpush1.msra.mxu0 0.0
    %1689 = vmatprep.subr.mxu0 0.0
    %1690 = vmatpush1.msra.mxu0 0.0
    %1691 = vmatprep.subr.mxu0 0.0
    %1692 = vmatpush1.msra.mxu0 0.0
    %1693 = vmatprep.subr.mxu0 0.0
    %1694 = vmatpush1.msra.mxu0 0.0
    %1695 = vmatprep.subr.mxu0 0.0
    %1696 = vmatpush1.msra.mxu0 0.0
    %1697 = vmatprep.subr.mxu0 0.0
    %1698 = vmatpush1.msra.mxu0 0.0
    %1699 = vmatprep.subr.mxu0 0.0
    %1700 = vmatpush1.msra.mxu0 0.0
    %1701 = vmatprep.subr.mxu0 0.0
    %1702 = vmatpush1.msra.mxu0 0.0
    %1703 = vmatprep.subr.mxu0 0.0
    %1704 = vmatpush1.msra.mxu0 0.0
    %1705 = vmatprep.subr.mxu0 0.0
    %1706 = vmatpush1.msra.mxu0 0.0
    %1707 = vmatprep.subr.mxu0 0.0
    %1708 = vmatpush1.msra.mxu0 0.0
    %1709 = vmatprep.subr.mxu0 0.0
    %1710 = vmatpush1.msra.mxu0 0.0
    %1711 = vmatprep.subr.mxu0 0.0
    %1712 = vmatpush1.msra.mxu0 0.0
    %1713 = vmatprep.mubr.f32.mxu0 0.0
    %1714 = vmatmul.mubr.f32.gmra.mrb[0].mxu0 %v1647
    %v1715 = vpop.f32.mrb[0].mxu0
    %v1716 = vadd.f32 0.0, %v1715
    %v1717 = vpop.f32.mrb[0].mxu0
    %1718 = vdwg.mxu0
    %1720 = vrot.lane.b32.xlu0 %v1716, 16
    %v1721 = vpop.permute.xlu0 %1720
    %v1723 = vsel %vm218, %v1549, %v1721
    %1725 = vrot.lane.b32.xlu0 %v1383, 96
    %v1726 = vpop.permute.xlu0 %1725
    %v1727 = vsel %vm218, %v1383, 0
    %v1729 = vsel %vm218, %v1726, 0
    %1731 = vmatprep.subr.mxu0 0.0
    %1732 = vmatpush1.xpose.msra.mxu0 %v1729
    %1733 = vmatprep.subr.mxu0 0.0
    %1734 = vmatpush1.xpose.msra.mxu0 0.0
    %1735 = vmatprep.subr.mxu0 0.0
    %1736 = vmatpush1.xpose.msra.mxu0 0.0
    %1737 = vmatprep.subr.mxu0 0.0
    %1738 = vmatpush1.xpose.msra.mxu0 0.0
    %1739 = vmatprep.subr.mxu0 0.0
    %1740 = vmatpush1.xpose.msra.mxu0 0.0
    %1741 = vmatprep.subr.mxu0 0.0
    %1742 = vmatpush1.xpose.msra.mxu0 0.0
    %1743 = vmatprep.subr.mxu0 0.0
    %1744 = vmatpush1.xpose.msra.mxu0 0.0
    %1745 = vmatprep.subr.mxu0 0.0
    %1746 = vmatpush1.xpose.msra.mxu0 0.0
    %1747 = vmatprep.subr.mxu0 0.0
    %1748 = vmatpush1.xpose.msra.mxu0 0.0
    %1749 = vmatprep.subr.mxu0 0.0
    %1750 = vmatpush1.xpose.msra.mxu0 0.0
    %1751 = vmatprep.subr.mxu0 0.0
    %1752 = vmatpush1.xpose.msra.mxu0 0.0
    %1753 = vmatprep.subr.mxu0 0.0
    %1754 = vmatpush1.xpose.msra.mxu0 0.0
    %1755 = vmatprep.subr.mxu0 0.0
    %1756 = vmatpush1.xpose.msra.mxu0 0.0
    %1757 = vmatprep.subr.mxu0 0.0
    %1758 = vmatpush1.xpose.msra.mxu0 0.0
    %1759 = vmatprep.subr.mxu0 0.0
    %1760 = vmatpush1.xpose.msra.mxu0 0.0
    %1761 = vmatprep.subr.mxu0 0.0
    %1762 = vmatpush1.xpose.msra.mxu0 0.0
    %1763 = vmatprep.subr.mxu0 0.0
    %1764 = vmatpush1.xpose.msra.mxu0 0.0
    %1765 = vmatprep.subr.mxu0 0.0
    %1766 = vmatpush1.xpose.msra.mxu0 0.0
    %1767 = vmatprep.subr.mxu0 0.0
    %1768 = vmatpush1.xpose.msra.mxu0 0.0
    %1769 = vmatprep.subr.mxu0 0.0
    %1770 = vmatpush1.xpose.msra.mxu0 0.0
    %1771 = vmatprep.subr.mxu0 0.0
    %1772 = vmatpush1.xpose.msra.mxu0 0.0
    %1773 = vmatprep.subr.mxu0 0.0
    %1774 = vmatpush1.xpose.msra.mxu0 0.0
    %1775 = vmatprep.subr.mxu0 0.0
    %1776 = vmatpush1.xpose.msra.mxu0 0.0
    %1777 = vmatprep.subr.mxu0 0.0
    %1778 = vmatpush1.xpose.msra.mxu0 0.0
    %1779 = vmatprep.subr.mxu0 0.0
    %1780 = vmatpush1.xpose.msra.mxu0 0.0
    %1781 = vmatprep.subr.mxu0 0.0
    %1782 = vmatpush1.xpose.msra.mxu0 0.0
    %1783 = vmatprep.subr.mxu0 0.0
    %1784 = vmatpush1.xpose.msra.mxu0 0.0
    %1785 = vmatprep.subr.mxu0 0.0
    %1786 = vmatpush1.xpose.msra.mxu0 0.0
    %1787 = vmatprep.subr.mxu0 0.0
    %1788 = vmatpush1.xpose.msra.mxu0 0.0
    %1789 = vmatprep.subr.mxu0 0.0
    %1790 = vmatpush1.xpose.msra.mxu0 0.0
    %1791 = vmatprep.subr.mxu0 0.0
    %1792 = vmatpush1.xpose.msra.mxu0 0.0
    %1793 = vmatprep.subr.mxu0 0.0
    %1794 = vmatpush1.xpose.msra.mxu0 0.0
    %1795 = vmatprep.mubr.f32.mxu0 0.0
    %1796 = vmatmul.mubr.f32.gmra.mrb[0].mxu0 %v1727
    %v1797 = vpop.f32.mrb[0].mxu0
    %v1798 = vadd.f32 0.0, %v1797
    %v1799 = vpop.f32.mrb[0].mxu0
    %1800 = vdwg.mxu0
    %v1801 = vmul.f32 %v1798, 0.25
    %v1802 = vadd.f32 %v1801, %v640
    %v1803 = vsel %vm299, %v1802, -inf
    %1804 = vmax.xlane.f32.xlu0 %v1803
    %v1805 = vpop.xlane.xlu0 %1804
    %v1806 = vsub.f32 %v1802, %v1805
    %v1807 = vmul.f32 %v1806, 1.442695
    %v1808 = vpow.pop %v1807
    %v1809 = vsel %vm299, %v1808, 0.0
    %1810 = vadd.xlane.f32.xlu0 %v1809
    %v1811 = vpop.xlane.xlu0 %1810
    %v1812 = vrcp.pop %v1811
    %v1813 = vmul.f32 %v1808, %v1812
    %1814 = vrot.lane.b32.xlu0 %v1383, 64
    %v1815 = vpop.permute.xlu0 %1814
    %v1818 = vsel %vm299, %v1813, 0
    %1820 = vmatprep.subr.mxu0 0.0
    %1821 = vmatpush1.msra.mxu0 %v1815
    %1822 = vmatprep.subr.mxu0 0.0
    %1823 = vmatpush1.msra.mxu0 0.0
    %1824 = vmatprep.subr.mxu0 0.0
    %1825 = vmatpush1.msra.mxu0 0.0
    %1826 = vmatprep.subr.mxu0 0.0
    %1827 = vmatpush1.msra.mxu0 0.0
    %1828 = vmatprep.subr.mxu0 0.0
    %1829 = vmatpush1.msra.mxu0 0.0
    %1830 = vmatprep.subr.mxu0 0.0
    %1831 = vmatpush1.msra.mxu0 0.0
    %1832 = vmatprep.subr.mxu0 0.0
    %1833 = vmatpush1.msra.mxu0 0.0
    %1834 = vmatprep.subr.mxu0 0.0
    %1835 = vmatpush1.msra.mxu0 0.0
    %1836 = vmatprep.subr.mxu0 0.0
    %1837 = vmatpush1.msra.mxu0 0.0
    %1838 = vmatprep.subr.mxu0 0.0
    %1839 = vmatpush1.msra.mxu0 0.0
    %1840 = vmatprep.subr.mxu0 0.0
    %1841 = vmatpush1.msra.mxu0 0.0
    %1842 = vmatprep.subr.mxu0 0.0
    %1843 = vmatpush1.msra.mxu0 0.0
    %1844 = vmatprep.subr.mxu0 0.0
    %1845 = vmatpush1.msra.mxu0 0.0
    %1846 = vmatprep.subr.mxu0 0.0
    %1847 = vmatpush1.msra.mxu0 0.0
    %1848 = vmatprep.subr.mxu0 0.0
    %1849 = vmatpush1.msra.mxu0 0.0
    %1850 = vmatprep.subr.mxu0 0.0
    %1851 = vmatpush1.msra.mxu0 0.0
    %1852 = vmatprep.subr.mxu0 0.0
    %1853 = vmatpush1.msra.mxu0 0.0
    %1854 = vmatprep.subr.mxu0 0.0
    %1855 = vmatpush1.msra.mxu0 0.0
    %1856 = vmatprep.subr.mxu0 0.0
    %1857 = vmatpush1.msra.mxu0 0.0
    %1858 = vmatprep.subr.mxu0 0.0
    %1859 = vmatpush1.msra.mxu0 0.0
    %1860 = vmatprep.subr.mxu0 0.0
    %1861 = vmatpush1.msra.mxu0 0.0
    %1862 = vmatprep.subr.mxu0 0.0
    %1863 = vmatpush1.msra.mxu0 0.0
    %1864 = vmatprep.subr.mxu0 0.0
    %1865 = vmatpush1.msra.mxu0 0.0
    %1866 = vmatprep.subr.mxu0 0.0
    %1867 = vmatpush1.msra.mxu0 0.0
    %1868 = vmatprep.subr.mxu0 0.0
    %1869 = vmatpush1.msra.mxu0 0.0
    %1870 = vmatprep.subr.mxu0 0.0
    %1871 = vmatpush1.msra.mxu0 0.0
    %1872 = vmatprep.subr.mxu0 0.0
    %1873 = vmatpush1.msra.mxu0 0.0
    %1874 = vmatprep.subr.mxu0 0.0
    %1875 = vmatpush1.msra.mxu0 0.0
    %1876 = vmatprep.subr.mxu0 0.0
    %1877 = vmatpush1.msra.mxu0 0.0
    %1878 = vmatprep.subr.mxu0 0.0
    %1879 = vmatpush1.msra.mxu0 0.0
    %1880 = vmatprep.subr.mxu0 0.0
    %1881 = vmatpush1.msra.mxu0 0.0
    %1882 = vmatprep.subr.mxu0 0.0
    %1883 = vmatpush1.msra.mxu0 0.0
    %1884 = vmatprep.mubr.f32.mxu0 0.0
    %1885 = vmatmul.mubr.f32.gmra.mrb[0].mxu0 %v1818
    %v1886 = vpop.f32.mrb[0].mxu0
    %v1887 = vadd.f32 0.0, %v1886
    %v1888 = vpop.f32.mrb[0].mxu0
    %1889 = vdwg.mxu0
    %1890 = vrot.lane.b32.xlu0 %v1383, 112
    %v1891 = vpop.permute.xlu0 %1890
    %1892 = vrot.lane.b32.xlu0 %v1383, 80
    %v1893 = vpop.permute.xlu0 %1892
    %v1894 = vsel %vm218, %v1891, 0
    %v1896 = vsel %vm218, %v1893, 0
    %1898 = vmatprep.subr.mxu0 0.0
    %1899 = vmatpush1.xpose.msra.mxu0 %v1896
    %1900 = vmatprep.subr.mxu0 0.0
    %1901 = vmatpush1.xpose.msra.mxu0 0.0
    %1902 = vmatprep.subr.mxu0 0.0
    %1903 = vmatpush1.xpose.msra.mxu0 0.0
    %1904 = vmatprep.subr.mxu0 0.0
    %1905 = vmatpush1.xpose.msra.mxu0 0.0
    %1906 = vmatprep.subr.mxu0 0.0
    %1907 = vmatpush1.xpose.msra.mxu0 0.0
    %1908 = vmatprep.subr.mxu0 0.0
    %1909 = vmatpush1.xpose.msra.mxu0 0.0
    %1910 = vmatprep.subr.mxu0 0.0
    %1911 = vmatpush1.xpose.msra.mxu0 0.0
    %1912 = vmatprep.subr.mxu0 0.0
    %1913 = vmatpush1.xpose.msra.mxu0 0.0
    %1914 = vmatprep.subr.mxu0 0.0
    %1915 = vmatpush1.xpose.msra.mxu0 0.0
    %1916 = vmatprep.subr.mxu0 0.0
    %1917 = vmatpush1.xpose.msra.mxu0 0.0
    %1918 = vmatprep.subr.mxu0 0.0
    %1919 = vmatpush1.xpose.msra.mxu0 0.0
    %1920 = vmatprep.subr.mxu0 0.0
    %1921 = vmatpush1.xpose.msra.mxu0 0.0
    %1922 = vmatprep.subr.mxu0 0.0
    %1923 = vmatpush1.xpose.msra.mxu0 0.0
    %1924 = vmatprep.subr.mxu0 0.0
    %1925 = vmatpush1.xpose.msra.mxu0 0.0
    %1926 = vmatprep.subr.mxu0 0.0
    %1927 = vmatpush1.xpose.msra.mxu0 0.0
    %1928 = vmatprep.subr.mxu0 0.0
    %1929 = vmatpush1.xpose.msra.mxu0 0.0
    %1930 = vmatprep.subr.mxu0 0.0
    %1931 = vmatpush1.xpose.msra.mxu0 0.0
    %1932 = vmatprep.subr.mxu0 0.0
    %1933 = vmatpush1.xpose.msra.mxu0 0.0
    %1934 = vmatprep.subr.mxu0 0.0
    %1935 = vmatpush1.xpose.msra.mxu0 0.0
    %1936 = vmatprep.subr.mxu0 0.0
    %1937 = vmatpush1.xpose.msra.mxu0 0.0
    %1938 = vmatprep.subr.mxu0 0.0
    %1939 = vmatpush1.xpose.msra.mxu0 0.0
    %1940 = vmatprep.subr.mxu0 0.0
    %1941 = vmatpush1.xpose.msra.mxu0 0.0
    %1942 = vmatprep.subr.mxu0 0.0
    %1943 = vmatpush1.xpose.msra.mxu0 0.0
    %1944 = vmatprep.subr.mxu0 0.0
    %1945 = vmatpush1.xpose.msra.mxu0 0.0
    %1946 = vmatprep.subr.mxu0 0.0
    %1947 = vmatpush1.xpose.msra.mxu0 0.0
    %1948 = vmatprep.subr.mxu0 0.0
    %1949 = vmatpush1.xpose.msra.mxu0 0.0
    %1950 = vmatprep.subr.mxu0 0.0
    %1951 = vmatpush1.xpose.msra.mxu0 0.0
    %1952 = vmatprep.subr.mxu0 0.0
    %1953 = vmatpush1.xpose.msra.mxu0 0.0
    %1954 = vmatprep.subr.mxu0 0.0
    %1955 = vmatpush1.xpose.msra.mxu0 0.0
    %1956 = vmatprep.subr.mxu0 0.0
    %1957 = vmatpush1.xpose.msra.mxu0 0.0
    %1958 = vmatprep.subr.mxu0 0.0
    %1959 = vmatpush1.xpose.msra.mxu0 0.0
    %1960 = vmatprep.subr.mxu0 0.0
    %1961 = vmatpush1.xpose.msra.mxu0 0.0
    %1962 = vmatprep.mubr.f32.mxu0 0.0
    %1963 = vmatmul.mubr.f32.gmra.mrb[0].mxu0 %v1894
    %v1964 = vpop.f32.mrb[0].mxu0
    %v1965 = vadd.f32 0.0, %v1964
    %v1966 = vpop.f32.mrb[0].mxu0
    %1967 = vdwg.mxu0
    %v1968 = vmul.f32 %v1965, 0.25
    %v1969 = vadd.f32 %v1968, %v640
    %v1970 = vsel %vm299, %v1969, -inf
    %1971 = vmax.xlane.f32.xlu0 %v1970
    %v1972 = vpop.xlane.xlu0 %1971
    %v1973 = vsub.f32 %v1969, %v1972
    %v1974 = vmul.f32 %v1973, 1.442695
    %v1975 = vpow.pop %v1974
    %v1976 = vsel %vm299, %v1975, 0.0
    %1977 = vadd.xlane.f32.xlu0 %v1976
    %v1978 = vpop.xlane.xlu0 %1977
    %v1979 = vrcp.pop %v1978
    %v1980 = vmul.f32 %v1975, %v1979
    %1981 = vrot.lane.b32.xlu0 %v1383, 48
    %v1982 = vpop.permute.xlu0 %1981
    %v1985 = vsel %vm299, %v1980, 0
    %1987 = vmatprep.subr.mxu0 0.0
    %1988 = vmatpush1.msra.mxu0 %v1982
    %1989 = vmatprep.subr.mxu0 0.0
    %1990 = vmatpush1.msra.mxu0 0.0
    %1991 = vmatprep.subr.mxu0 0.0
    %1992 = vmatpush1.msra.mxu0 0.0
    %1993 = vmatprep.subr.mxu0 0.0
    %1994 = vmatpush1.msra.mxu0 0.0
    %1995 = vmatprep.subr.mxu0 0.0
    %1996 = vmatpush1.msra.mxu0 0.0
    %1997 = vmatprep.subr.mxu0 0.0
    %1998 = vmatpush1.msra.mxu0 0.0
    %1999 = vmatprep.subr.mxu0 0.0
    %2000 = vmatpush1.msra.mxu0 0.0
    %2001 = vmatprep.subr.mxu0 0.0
    %2002 = vmatpush1.msra.mxu0 0.0
    %2003 = vmatprep.subr.mxu0 0.0
    %2004 = vmatpush1.msra.mxu0 0.0
    %2005 = vmatprep.subr.mxu0 0.0
    %2006 = vmatpush1.msra.mxu0 0.0
    %2007 = vmatprep.subr.mxu0 0.0
    %2008 = vmatpush1.msra.mxu0 0.0
    %2009 = vmatprep.subr.mxu0 0.0
    %2010 = vmatpush1.msra.mxu0 0.0
    %2011 = vmatprep.subr.mxu0 0.0
    %2012 = vmatpush1.msra.mxu0 0.0
    %2013 = vmatprep.subr.mxu0 0.0
    %2014 = vmatpush1.msra.mxu0 0.0
    %2015 = vmatprep.subr.mxu0 0.0
    %2016 = vmatpush1.msra.mxu0 0.0
    %2017 = vmatprep.subr.mxu0 0.0
    %2018 = vmatpush1.msra.mxu0 0.0
    %2019 = vmatprep.subr.mxu0 0.0
    %2020 = vmatpush1.msra.mxu0 0.0
    %2021 = vmatprep.subr.mxu0 0.0
    %2022 = vmatpush1.msra.mxu0 0.0
    %2023 = vmatprep.subr.mxu0 0.0
    %2024 = vmatpush1.msra.mxu0 0.0
    %2025 = vmatprep.subr.mxu0 0.0
    %2026 = vmatpush1.msra.mxu0 0.0
    %2027 = vmatprep.subr.mxu0 0.0
    %2028 = vmatpush1.msra.mxu0 0.0
    %2029 = vmatprep.subr.mxu0 0.0
    %2030 = vmatpush1.msra.mxu0 0.0
    %2031 = vmatprep.subr.mxu0 0.0
    %2032 = vmatpush1.msra.mxu0 0.0
    %2033 = vmatprep.subr.mxu0 0.0
    %2034 = vmatpush1.msra.mxu0 0.0
    %2035 = vmatprep.subr.mxu0 0.0
    %2036 = vmatpush1.msra.mxu0 0.0
    %2037 = vmatprep.subr.mxu0 0.0
    %2038 = vmatpush1.msra.mxu0 0.0
    %2039 = vmatprep.subr.mxu0 0.0
    %2040 = vmatpush1.msra.mxu0 0.0
    %2041 = vmatprep.subr.mxu0 0.0
    %2042 = vmatpush1.msra.mxu0 0.0
    %2043 = vmatprep.subr.mxu0 0.0
    %2044 = vmatpush1.msra.mxu0 0.0
    %2045 = vmatprep.subr.mxu0 0.0
    %2046 = vmatpush1.msra.mxu0 0.0
    %2047 = vmatprep.subr.mxu0 0.0
    %2048 = vmatpush1.msra.mxu0 0.0
    %2049 = vmatprep.subr.mxu0 0.0
    %2050 = vmatpush1.msra.mxu0 0.0
    %2051 = vmatprep.mubr.f32.mxu0 0.0
    %2052 = vmatmul.mubr.f32.gmra.mrb[0].mxu0 %v1985
    %v2053 = vpop.f32.mrb[0].mxu0
    %v2054 = vadd.f32 0.0, %v2053
    %v2055 = vpop.f32.mrb[0].mxu0
    %2056 = vdwg.mxu0
    %2058 = vrot.lane.b32.xlu0 %v2054, 16
    %v2059 = vpop.permute.xlu0 %2058
    %v2061 = vsel %vm218, %v1887, %v2059
    %s2062 = scalar_lea.vmem %s7, 32
    %v2063 = vld [vmem:[%s2062] sm:$0xff]
    %v2064 = vld [vmem:[%s2062 + $0x8] sm:$0xff]
    %v2065 = vld [vmem:[%s2062 + $0x10] sm:$0xff]
    %v2066 = vld [vmem:[%s2062 + $0x18] sm:$0xff]
    %s2067 = scalar_lea.vmem %s8, 1
    %v2068 = vld [vmem:[%s2067] sm:$0x1]
    %v2070 = vlaneseq
    %v2071 = vshrl.u32 %v2070, 7
    %v2072 = vsub.s32 0, %v2071
    %v2073 = vrot.slane %v2068, %v2072
    %v2076 = vsel %vm76, %v1723, 0
    %v2079 = vsel %vm76, %v2061, 0
    %2081 = vmatprep.subr.mxu0 0.0
    %2082 = vmatpush1.msra.mxu0 %v2063
    %2083 = vmatprep.subr.mxu0 0.0
    %2084 = vmatpush1.msra.mxu0 %v2064
    %2085 = vmatprep.subr.mxu0 0.0
    %2086 = vmatpush1.msra.mxu0 %v2065
    %2087 = vmatprep.subr.mxu0 0.0
    %2088 = vmatpush1.msra.mxu0 %v2066
    %2089 = vmatprep.subr.mxu0 0.0
    %2090 = vmatpush1.msra.mxu0 0.0
    %2091 = vmatprep.subr.mxu0 0.0
    %2092 = vmatpush1.msra.mxu0 0.0
    %2093 = vmatprep.subr.mxu0 0.0
    %2094 = vmatpush1.msra.mxu0 0.0
    %2095 = vmatprep.subr.mxu0 0.0
    %2096 = vmatpush1.msra.mxu0 0.0
    %2097 = vmatprep.subr.mxu0 0.0
    %2098 = vmatpush1.msra.mxu0 0.0
    %2099 = vmatprep.subr.mxu0 0.0
    %2100 = vmatpush1.msra.mxu0 0.0
    %2101 = vmatprep.subr.mxu0 0.0
    %2102 = vmatpush1.msra.mxu0 0.0
    %2103 = vmatprep.subr.mxu0 0.0
    %2104 = vmatpush1.msra.mxu0 0.0
    %2105 = vmatprep.subr.mxu0 0.0
    %2106 = vmatpush1.msra.mxu0 0.0
    %2107 = vmatprep.subr.mxu0 0.0
    %2108 = vmatpush1.msra.mxu0 0.0
    %2109 = vmatprep.subr.mxu0 0.0
    %2110 = vmatpush1.msra.mxu0 0.0
    %2111 = vmatprep.subr.mxu0 0.0
    %2112 = vmatpush1.msra.mxu0 0.0
    %2113 = vmatprep.subr.mxu0 0.0
    %2114 = vmatpush1.msra.mxu0 0.0
    %2115 = vmatprep.subr.mxu0 0.0
    %2116 = vmatpush1.msra.mxu0 0.0
    %2117 = vmatprep.subr.mxu0 0.0
    %2118 = vmatpush1.msra.mxu0 0.0
    %2119 = vmatprep.subr.mxu0 0.0
    %2120 = vmatpush1.msra.mxu0 0.0
    %2121 = vmatprep.subr.mxu0 0.0
    %2122 = vmatpush1.msra.mxu0 0.0
    %2123 = vmatprep.subr.mxu0 0.0
    %2124 = vmatpush1.msra.mxu0 0.0
    %2125 = vmatprep.subr.mxu0 0.0
    %2126 = vmatpush1.msra.mxu0 0.0
    %2127 = vmatprep.subr.mxu0 0.0
    %2128 = vmatpush1.msra.mxu0 0.0
    %2129 = vmatprep.subr.mxu0 0.0
    %2130 = vmatpush1.msra.mxu0 0.0
    %2131 = vmatprep.subr.mxu0 0.0
    %2132 = vmatpush1.msra.mxu0 0.0
    %2133 = vmatprep.subr.mxu0 0.0
    %2134 = vmatpush1.msra.mxu0 0.0
    %2135 = vmatprep.subr.mxu0 0.0
    %2136 = vmatpush1.msra.mxu0 0.0
    %2137 = vmatprep.subr.mxu0 0.0
    %2138 = vmatpush1.msra.mxu0 0.0
    %2139 = vmatprep.subr.mxu0 0.0
    %2140 = vmatpush1.msra.mxu0 0.0
    %2141 = vmatprep.subr.mxu0 0.0
    %2142 = vmatpush1.msra.mxu0 0.0
    %2143 = vmatprep.subr.mxu0 0.0
    %2144 = vmatpush1.msra.mxu0 0.0
    %2145 = vmatprep.mubr.f32.mxu0 0.0
    %2146 = vmatmul.mubr.f32.gmra.mrb[0].mxu0 %v2076
    %v2147 = vpop.f32.mrb[0].mxu0
    %v2148 = vadd.f32 %v2073, %v2147
    %v2149 = vpop.f32.mrb[0].mxu0
    %2150 = vmatprep.mubr.f32.mxu0 0.0
    %2151 = vmatmul.mubr.f32.gmra.mrb[0].mxu0 %v2079
    %v2152 = vpop.f32.mrb[0].mxu0
    %v2153 = vadd.f32 %v2073, %v2152
    %v2154 = vpop.f32.mrb[0].mxu0
    %2155 = vdwg.mxu0
    %v2156 = vadd.f32 %v2148, %v1290
    %v2157 = vadd.f32 %v2153, %v1291
    %s2158 = scalar_lea.vmem %s9, 1
    %v2159 = vld [vmem:[%s2158] sm:$0x1]
    %s2160 = scalar_lea.vmem %s10, 1
    %v2161 = vld [vmem:[%s2160] sm:$0x1]
    %v2162 = vsel %vm76, %v2156, 0.0
    %2163 = vadd.xlane.f32.xlu0 %v2162
    %v2164 = vpop.xlane.xlu0 %2163
    %v2165 = vsel %vm76, %v2157, 0.0
    %2166 = vadd.xlane.f32.xlu0 %v2165
    %v2167 = vpop.xlane.xlu0 %2166
    %v2168 = vmul.f32 %v2164, %v83
    %v2169 = vmul.f32 %v2167, %v83
    %v2170 = vsub.f32 %v2156, %v2168
    %v2171 = vsub.f32 %v2157, %v2169
    %v2172 = vmul.f32 %v2170, %v2170
    %v2173 = vmul.f32 %v2171, %v2171
    %v2174 = vsel %vm76, %v2172, 0.0
    %2175 = vadd.xlane.f32.xlu0 %v2174
    %v2176 = vpop.xlane.xlu0 %2175
    %v2177 = vsel %vm76, %v2173, 0.0
    %2178 = vadd.xlane.f32.xlu0 %v2177
    %v2179 = vpop.xlane.xlu0 %2178
    %v2180 = vmul.f32 %v2176, %v83
    %v2181 = vmul.f32 %v2179, %v83
    %v2182 = vadd.f32 %v2180, 1e-12
    %v2183 = vadd.f32 %v2181, 1e-12
    %v2184 = vrsqrt.pop %v2182
    %v2185 = vrsqrt.pop %v2183
    %v2186 = vmul.f32 %v2170, %v2184
    %v2187 = vmul.f32 %v2171, %v2185
    %v2189 = vlaneseq
    %v2190 = vshrl.u32 %v2189, 7
    %v2191 = vsub.s32 0, %v2190
    %v2192 = vrot.slane %v2159, %v2191
    %v2194 = vmul.f32 %v2186, %v2192
    %v2195 = vmul.f32 %v2187, %v2192
    %v2197 = vlaneseq
    %v2198 = vshrl.u32 %v2197, 7
    %v2199 = vsub.s32 0, %v2198
    %v2200 = vrot.slane %v2161, %v2199
    %v2202 = vadd.f32 %v2194, %v2200
    %v2203 = vadd.f32 %v2195, %v2200
    %s2204 = scalar_lea.vmem %s11, 32
    %v2205 = vld [vmem:[%s2204] sm:$0xff]
    %v2206 = vld [vmem:[%s2204 + $0x8] sm:$0xff]
    %v2207 = vld [vmem:[%s2204 + $0x10] sm:$0xff]
    %v2208 = vld [vmem:[%s2204 + $0x18] sm:$0xff]
    %s2209 = scalar_lea.vmem %s12, 1
    %v2210 = vld [vmem:[%s2209] sm:$0x1]
    %v2212 = vlaneseq
    %v2213 = vshrl.u32 %v2212, 7
    %v2214 = vsub.s32 0, %v2213
    %v2215 = vrot.slane %v2210, %v2214
    %v2218 = vsel %vm76, %v2202, 0
    %v2221 = vsel %vm76, %v2203, 0
    %2223 = vmatprep.subr.mxu0 0.0
    %2224 = vmatpush1.msra.mxu0 %v2205
    %2225 = vmatprep.subr.mxu0 0.0
    %2226 = vmatpush1.msra.mxu0 %v2206
    %2227 = vmatprep.subr.mxu0 0.0
    %2228 = vmatpush1.msra.mxu0 %v2207
    %2229 = vmatprep.subr.mxu0 0.0
    %2230 = vmatpush1.msra.mxu0 %v2208
    %2231 = vmatprep.subr.mxu0 0.0
    %2232 = vmatpush1.msra.mxu0 0.0
    %2233 = vmatprep.subr.mxu0 0.0
    %2234 = vmatpush1.msra.mxu0 0.0
    %2235 = vmatprep.subr.mxu0 0.0
    %2236 = vmatpush1.msra.mxu0 0.0
    %2237 = vmatprep.subr.mxu0 0.0
    %2238 = vmatpush1.msra.mxu0 0.0
    %2239 = vmatprep.subr.mxu0 0.0
    %2240 = vmatpush1.msra.mxu0 0.0
    %2241 = vmatprep.subr.mxu0 0.0
    %2242 = vmatpush1.msra.mxu0 0.0
    %2243 = vmatprep.subr.mxu0 0.0
    %2244 = vmatpush1.msra.mxu0 0.0
    %2245 = vmatprep.subr.mxu0 0.0
    %2246 = vmatpush1.msra.mxu0 0.0
    %2247 = vmatprep.subr.mxu0 0.0
    %2248 = vmatpush1.msra.mxu0 0.0
    %2249 = vmatprep.subr.mxu0 0.0
    %2250 = vmatpush1.msra.mxu0 0.0
    %2251 = vmatprep.subr.mxu0 0.0
    %2252 = vmatpush1.msra.mxu0 0.0
    %2253 = vmatprep.subr.mxu0 0.0
    %2254 = vmatpush1.msra.mxu0 0.0
    %2255 = vmatprep.subr.mxu0 0.0
    %2256 = vmatpush1.msra.mxu0 0.0
    %2257 = vmatprep.subr.mxu0 0.0
    %2258 = vmatpush1.msra.mxu0 0.0
    %2259 = vmatprep.subr.mxu0 0.0
    %2260 = vmatpush1.msra.mxu0 0.0
    %2261 = vmatprep.subr.mxu0 0.0
    %2262 = vmatpush1.msra.mxu0 0.0
    %2263 = vmatprep.subr.mxu0 0.0
    %2264 = vmatpush1.msra.mxu0 0.0
    %2265 = vmatprep.subr.mxu0 0.0
    %2266 = vmatpush1.msra.mxu0 0.0
    %2267 = vmatprep.subr.mxu0 0.0
    %2268 = vmatpush1.msra.mxu0 0.0
    %2269 = vmatprep.subr.mxu0 0.0
    %2270 = vmatpush1.msra.mxu0 0.0
    %2271 = vmatprep.subr.mxu0 0.0
    %2272 = vmatpush1.msra.mxu0 0.0
    %2273 = vmatprep.subr.mxu0 0.0
    %2274 = vmatpush1.msra.mxu0 0.0
    %2275 = vmatprep.subr.mxu0 0.0
    %2276 = vmatpush1.msra.mxu0 0.0
    %2277 = vmatprep.subr.mxu0 0.0
    %2278 = vmatpush1.msra.mxu0 0.0
    %2279 = vmatprep.subr.mxu0 0.0
    %2280 = vmatpush1.msra.mxu0 0.0
    %2281 = vmatprep.subr.mxu0 0.0
    %2282 = vmatpush1.msra.mxu0 0.0
    %2283 = vmatprep.subr.mxu0 0.0
    %2284 = vmatpush1.msra.mxu0 0.0
    %2285 = vmatprep.subr.mxu0 0.0
    %2286 = vmatpush1.msra.mxu0 0.0
    %2287 = vmatprep.mubr.f32.mxu0 0.0
    %2288 = vmatmul.mubr.f32.gmra.mrb[0].mxu0 %v2218
    %v2289 = vpop.f32.mrb[0].mxu0
    %v2290 = vadd.f32 %v2215, %v2289
    %v2291 = vpop.f32.mrb[0].mxu0
    %2292 = vmatprep.mubr.f32.mxu0 0.0
    %2293 = vmatmul.mubr.f32.gmra.mrb[0].mxu0 %v2221
    %v2294 = vpop.f32.mrb[0].mxu0
    %v2295 = vadd.f32 %v2215, %v2294
    %v2296 = vpop.f32.mrb[0].mxu0
    %2297 = vdwg.mxu0
    %v2298 = vmul.f32 %v2290, 0.5
    %v2299 = vmul.f32 %v2295, 0.5
    %v2300 = vmul.f32 %v2290, 0.044715
    %v2301 = vmul.f32 %v2295, 0.044715
    %v2302 = vmul.f32 %v2300, %v2290
    %v2303 = vmul.f32 %v2301, %v2295
    %v2304 = vmul.f32 %v2302, %v2290
    %v2305 = vmul.f32 %v2303, %v2295
    %v2306 = vadd.f32 %v2290, %v2304
    %v2307 = vadd.f32 %v2295, %v2305
    %v2308 = vmul.f32 %v2306, 0.7978846
    %v2309 = vmul.f32 %v2307, 0.7978846
    %v2310 = vtanh.pop %v2308
    %v2311 = vtanh.pop %v2309
    %v2312 = vadd.f32 %v2310, 1.0
    %v2313 = vadd.f32 %v2311, 1.0
    %v2314 = vmul.f32 %v2298, %v2312
    %v2315 = vmul.f32 %v2299, %v2313
    %s2316 = scalar_lea.vmem %s13, 64
    %v2317 = vld [vmem:[%s2316] sm:$0xff]
    %v2318 = vld [vmem:[%s2316 + $0x8] sm:$0xff]
    %v2319 = vld [vmem:[%s2316 + $0x10] sm:$0xff]
    %v2320 = vld [vmem:[%s2316 + $0x18] sm:$0xff]
    %v2321 = vld [vmem:[%s2316 + $0x20] sm:$0xff]
    %v2322 = vld [vmem:[%s2316 + $0x28] sm:$0xff]
    %v2323 = vld [vmem:[%s2316 + $0x30] sm:$0xff]
    %v2324 = vld [vmem:[%s2316 + $0x38] sm:$0xff]
    %s2325 = scalar_lea.vmem %s14, 1
    %v2326 = vld [vmem:[%s2325] sm:$0x1]
    %v2328 = vlaneseq
    %v2329 = vshrl.u32 %v2328, 7
    %v2330 = vsub.s32 0, %v2329
    %v2331 = vrot.slane %v2326, %v2330
    %v2334 = vsel %vm1164, %v2314, 0
    %v2337 = vsel %vm1164, %v2315, 0
    %2339 = vmatprep.subr.mxu0 0.0
    %2340 = vmatpush1.msra.mxu0 %v2317
    %2341 = vmatprep.subr.mxu0 0.0
    %2342 = vmatpush1.msra.mxu0 %v2318
    %2343 = vmatprep.subr.mxu0 0.0
    %2344 = vmatpush1.msra.mxu0 %v2319
    %2345 = vmatprep.subr.mxu0 0.0
    %2346 = vmatpush1.msra.mxu0 %v2320
    %2347 = vmatprep.subr.mxu0 0.0
    %2348 = vmatpush1.msra.mxu0 %v2321
    %2349 = vmatprep.subr.mxu0 0.0
    %2350 = vmatpush1.msra.mxu0 %v2322
    %2351 = vmatprep.subr.mxu0 0.0
    %2352 = vmatpush1.msra.mxu0 %v2323
    %2353 = vmatprep.subr.mxu0 0.0
    %2354 = vmatpush1.msra.mxu0 %v2324
    %2355 = vmatprep.subr.mxu0 0.0
    %2356 = vmatpush1.msra.mxu0 0.0
    %2357 = vmatprep.subr.mxu0 0.0
    %2358 = vmatpush1.msra.mxu0 0.0
    %2359 = vmatprep.subr.mxu0 0.0
    %2360 = vmatpush1.msra.mxu0 0.0
    %2361 = vmatprep.subr.mxu0 0.0
    %2362 = vmatpush1.msra.mxu0 0.0
    %2363 = vmatprep.subr.mxu0 0.0
    %2364 = vmatpush1.msra.mxu0 0.0
    %2365 = vmatprep.subr.mxu0 0.0
    %2366 = vmatpush1.msra.mxu0 0.0
    %2367 = vmatprep.subr.mxu0 0.0
    %2368 = vmatpush1.msra.mxu0 0.0
    %2369 = vmatprep.subr.mxu0 0.0
    %2370 = vmatpush1.msra.mxu0 0.0
    %2371 = vmatprep.subr.mxu0 0.0
    %2372 = vmatpush1.msra.mxu0 0.0
    %2373 = vmatprep.subr.mxu0 0.0
    %2374 = vmatpush1.msra.mxu0 0.0
    %2375 = vmatprep.subr.mxu0 0.0
    %2376 = vmatpush1.msra.mxu0 0.0
    %2377 = vmatprep.subr.mxu0 0.0
    %2378 = vmatpush1.msra.mxu0 0.0
    %2379 = vmatprep.subr.mxu0 0.0
    %2380 = vmatpush1.msra.mxu0 0.0
    %2381 = vmatprep.subr.mxu0 0.0
    %2382 = vmatpush1.msra.mxu0 0.0
    %2383 = vmatprep.subr.mxu0 0.0
    %2384 = vmatpush1.msra.mxu0 0.0
    %2385 = vmatprep.subr.mxu0 0.0
    %2386 = vmatpush1.msra.mxu0 0.0
    %2387 = vmatprep.subr.mxu0 0.0
    %2388 = vmatpush1.msra.mxu0 0.0
    %2389 = vmatprep.subr.mxu0 0.0
    %2390 = vmatpush1.msra.mxu0 0.0
    %2391 = vmatprep.subr.mxu0 0.0
    %2392 = vmatpush1.msra.mxu0 0.0
    %2393 = vmatprep.subr.mxu0 0.0
    %2394 = vmatpush1.msra.mxu0 0.0
    %2395 = vmatprep.subr.mxu0 0.0
    %2396 = vmatpush1.msra.mxu0 0.0
    %2397 = vmatprep.subr.mxu0 0.0
    %2398 = vmatpush1.msra.mxu0 0.0
    %2399 = vmatprep.subr.mxu0 0.0
    %2400 = vmatpush1.msra.mxu0 0.0
    %2401 = vmatprep.subr.mxu0 0.0
    %2402 = vmatpush1.msra.mxu0 0.0
    %2403 = vmatprep.mubr.f32.mxu0 0.0
    %2404 = vmatmul.mubr.f32.gmra.mrb[0].mxu0 %v2334
    %v2405 = vpop.f32.mrb[0].mxu0
    %v2406 = vadd.f32 %v2331, %v2405
    %v2407 = vpop.f32.mrb[0].mxu0
    %2408 = vmatprep.mubr.f32.mxu0 0.0
    %2409 = vmatmul.mubr.f32.gmra.mrb[0].mxu0 %v2337
    %v2410 = vpop.f32.mrb[0].mxu0
    %v2411 = vadd.f32 %v2331, %v2410
    %v2412 = vpop.f32.mrb[0].mxu0
    %2413 = vdwg.mxu0
    %v2414 = vadd.f32 %v2406, %v2202
    %v2415 = vadd.f32 %v2411, %v2203
    %s2416 = scalar_lea.vmem %s15, 1
    %v2417 = vld [vmem:[%s2416] sm:$0x1]
    %s2418 = scalar_lea.vmem %s16, 1
    %v2419 = vld [vmem:[%s2418] sm:$0x1]
    %v2420 = vsel %vm76, %v2414, 0.0
    %2421 = vadd.xlane.f32.xlu0 %v2420
    %v2422 = vpop.xlane.xlu0 %2421
    %v2423 = vsel %vm76, %v2415, 0.0
    %2424 = vadd.xlane.f32.xlu0 %v2423
    %v2425 = vpop.xlane.xlu0 %2424
    %v2426 = vmul.f32 %v2422, %v83
    %v2427 = vmul.f32 %v2425, %v83
    %v2428 = vsub.f32 %v2414, %v2426
    %v2429 = vsub.f32 %v2415, %v2427
    %v2430 = vmul.f32 %v2428, %v2428
    %v2431 = vmul.f32 %v2429, %v2429
    %v2432 = vsel %vm76, %v2430, 0.0
    %2433 = vadd.xlane.f32.xlu0 %v2432
    %v2434 = vpop.xlane.xlu0 %2433
    %v2435 = vsel %vm76, %v2431, 0.0
    %2436 = vadd.xlane.f32.xlu0 %v2435
    %v2437 = vpop.xlane.xlu0 %2436
    %v2438 = vmul.f32 %v2434, %v83
    %v2439 = vmul.f32 %v2437, %v83
    %v2440 = vadd.f32 %v2438, 1e-12
    %v2441 = vadd.f32 %v2439, 1e-12
    %v2442 = vrsqrt.pop %v2440
    %v2443 = vrsqrt.pop %v2441
    %v2444 = vmul.f32 %v2428, %v2442
    %v2445 = vmul.f32 %v2429, %v2443
    %v2447 = vlaneseq
    %v2448 = vshrl.u32 %v2447, 7
    %v2449 = vsub.s32 0, %v2448
    %v2450 = vrot.slane %v2417, %v2449
    %v2452 = vmul.f32 %v2444, %v2450
    %v2453 = vmul.f32 %v2445, %v2450
    %v2455 = vlaneseq
    %v2456 = vshrl.u32 %v2455, 7
    %v2457 = vsub.s32 0, %v2456
    %v2458 = vrot.slane %v2419, %v2457
    %v2460 = vadd.f32 %v2452, %v2458
    %v2461 = vadd.f32 %v2453, %v2458
    %v2463 = vrot.slane %v2461, 7
    %vm2465 = vcmask 1040384
    %v2466 = vsel %vm2465, %v2460, %v2463
    %v2467 = vld [vmem:[%s17] sm:$0xff]
    %v2468 = vld [vmem:[%s17 + $0x8] sm:$0xff]
    %v2469 = vld [vmem:[%s17 + $0x10] sm:$0xff]
    %v2470 = vld [vmem:[%s17 + $0x18] sm:$0xff]
    %v2471 = vld [vmem:[%s18] sm:$0x1]
    %v2473 = vlaneseq
    %v2474 = vshrl.u32 %v2473, 7
    %v2475 = vsub.s32 0, %v2474
    %v2476 = vrot.slane %v2471, %v2475
    %v2479 = vsel %vm76, %v2466, 0
    %2481 = vmatprep.subr.mxu0 0.0
    %2482 = vmatpush1.msra.mxu0 %v2467
    %2483 = vmatprep.subr.mxu0 0.0
    %2484 = vmatpush1.msra.mxu0 %v2468
    %2485 = vmatprep.subr.mxu0 0.0
    %2486 = vmatpush1.msra.mxu0 %v2469
    %2487 = vmatprep.subr.mxu0 0.0
    %2488 = vmatpush1.msra.mxu0 %v2470
    %2489 = vmatprep.subr.mxu0 0.0
    %2490 = vmatpush1.msra.mxu0 0.0
    %2491 = vmatprep.subr.mxu0 0.0
    %2492 = vmatpush1.msra.mxu0 0.0
    %2493 = vmatprep.subr.mxu0 0.0
    %2494 = vmatpush1.msra.mxu0 0.0
    %2495 = vmatprep.subr.mxu0 0.0
    %2496 = vmatpush1.msra.mxu0 0.0
    %2497 = vmatprep.subr.mxu0 0.0
    %2498 = vmatpush1.msra.mxu0 0.0
    %2499 = vmatprep.subr.mxu0 0.0
    %2500 = vmatpush1.msra.mxu0 0.0
    %2501 = vmatprep.subr.mxu0 0.0
    %2502 = vmatpush1.msra.mxu0 0.0
    %2503 = vmatprep.subr.mxu0 0.0
    %2504 = vmatpush1.msra.mxu0 0.0
    %2505 = vmatprep.subr.mxu0 0.0
    %2506 = vmatpush1.msra.mxu0 0.0
    %2507 = vmatprep.subr.mxu0 0.0
    %2508 = vmatpush1.msra.mxu0 0.0
    %2509 = vmatprep.subr.mxu0 0.0
    %2510 = vmatpush1.msra.mxu0 0.0
    %2511 = vmatprep.subr.mxu0 0.0
    %2512 = vmatpush1.msra.mxu0 0.0
    %2513 = vmatprep.subr.mxu0 0.0
    %2514 = vmatpush1.msra.mxu0 0.0
    %2515 = vmatprep.subr.mxu0 0.0
    %2516 = vmatpush1.msra.mxu0 0.0
    %2517 = vmatprep.subr.mxu0 0.0
    %2518 = vmatpush1.msra.mxu0 0.0
    %2519 = vmatprep.subr.mxu0 0.0
    %2520 = vmatpush1.msra.mxu0 0.0
    %2521 = vmatprep.subr.mxu0 0.0
    %2522 = vmatpush1.msra.mxu0 0.0
    %2523 = vmatprep.subr.mxu0 0.0
    %2524 = vmatpush1.msra.mxu0 0.0
    %2525 = vmatprep.subr.mxu0 0.0
    %2526 = vmatpush1.msra.mxu0 0.0
    %2527 = vmatprep.subr.mxu0 0.0
    %2528 = vmatpush1.msra.mxu0 0.0
    %2529 = vmatprep.subr.mxu0 0.0
    %2530 = vmatpush1.msra.mxu0 0.0
    %2531 = vmatprep.subr.mxu0 0.0
    %2532 = vmatpush1.msra.mxu0 0.0
    %2533 = vmatprep.subr.mxu0 0.0
    %2534 = vmatpush1.msra.mxu0 0.0
    %2535 = vmatprep.subr.mxu0 0.0
    %2536 = vmatpush1.msra.mxu0 0.0
    %2537 = vmatprep.subr.mxu0 0.0
    %2538 = vmatpush1.msra.mxu0 0.0
    %2539 = vmatprep.subr.mxu0 0.0
    %2540 = vmatpush1.msra.mxu0 0.0
    %2541 = vmatprep.subr.mxu0 0.0
    %2542 = vmatpush1.msra.mxu0 0.0
    %2543 = vmatprep.subr.mxu0 0.0
    %2544 = vmatpush1.msra.mxu0 0.0
    %2545 = vmatprep.mubr.f32.mxu0 0.0
    %2546 = vmatmul.mubr.f32.gmra.mrb[0].mxu0 %v2479
    %v2547 = vpop.f32.mrb[0].mxu0
    %v2548 = vadd.f32 %v2476, %v2547
    %v2549 = vpop.f32.mrb[0].mxu0
    %2550 = vdwg.mxu0
    %v2551 = vtanh.pop %v2548
    %v2552 = vld [vmem:[%s19] sm:$0xff]
    %v2553 = vld [vmem:[%s19 + $0x8] sm:$0xff]
    %v2554 = vld [vmem:[%s19 + $0x10] sm:$0xff]
    %v2555 = vld [vmem:[%s19 + $0x18] sm:$0xff]
    %v2556 = vld [vmem:[%s20] sm:$0x1]
    %v2558 = vlaneseq
    %v2559 = vshrl.u32 %v2558, 7
    %v2560 = vsub.s32 0, %v2559
    %v2561 = vrot.slane %v2556, %v2560
    %v2564 = vsel %vm76, %v2551, 0
    %2566 = vmatprep.subr.mxu0 0.0
    %2567 = vmatpush1.msra.mxu0 %v2552
    %2568 = vmatprep.subr.mxu0 0.0
    %2569 = vmatpush1.msra.mxu0 %v2553
    %2570 = vmatprep.subr.mxu0 0.0
    %2571 = vmatpush1.msra.mxu0 %v2554
    %2572 = vmatprep.subr.mxu0 0.0
    %2573 = vmatpush1.msra.mxu0 %v2555
    %2574 = vmatprep.subr.mxu0 0.0
    %2575 = vmatpush1.msra.mxu0 0.0
    %2576 = vmatprep.subr.mxu0 0.0
    %2577 = vmatpush1.msra.mxu0 0.0
    %2578 = vmatprep.subr.mxu0 0.0
    %2579 = vmatpush1.msra.mxu0 0.0
    %2580 = vmatprep.subr.mxu0 0.0
    %2581 = vmatpush1.msra.mxu0 0.0
    %2582 = vmatprep.subr.mxu0 0.0
    %2583 = vmatpush1.msra.mxu0 0.0
    %2584 = vmatprep.subr.mxu0 0.0
    %2585 = vmatpush1.msra.mxu0 0.0
    %2586 = vmatprep.subr.mxu0 0.0
    %2587 = vmatpush1.msra.mxu0 0.0
    %2588 = vmatprep.subr.mxu0 0.0
    %2589 = vmatpush1.msra.mxu0 0.0
    %2590 = vmatprep.subr.mxu0 0.0
    %2591 = vmatpush1.msra.mxu0 0.0
    %2592 = vmatprep.subr.mxu0 0.0
    %2593 = vmatpush1.msra.mxu0 0.0
    %2594 = vmatprep.subr.mxu0 0.0
    %2595 = vmatpush1.msra.mxu0 0.0
    %2596 = vmatprep.subr.mxu0 0.0
    %2597 = vmatpush1.msra.mxu0 0.0
    %2598 = vmatprep.subr.mxu0 0.0
    %2599 = vmatpush1.msra.mxu0 0.0
    %2600 = vmatprep.subr.mxu0 0.0
    %2601 = vmatpush1.msra.mxu0 0.0
    %2602 = vmatprep.subr.mxu0 0.0
    %2603 = vmatpush1.msra.mxu0 0.0
    %2604 = vmatprep.subr.mxu0 0.0
    %2605 = vmatpush1.msra.mxu0 0.0
    %2606 = vmatprep.subr.mxu0 0.0
    %2607 = vmatpush1.msra.mxu0 0.0
    %2608 = vmatprep.subr.mxu0 0.0
    %2609 = vmatpush1.msra.mxu0 0.0
    %2610 = vmatprep.subr.mxu0 0.0
    %2611 = vmatpush1.msra.mxu0 0.0
    %2612 = vmatprep.subr.mxu0 0.0
    %2613 = vmatpush1.msra.mxu0 0.0
    %2614 = vmatprep.subr.mxu0 0.0
    %2615 = vmatpush1.msra.mxu0 0.0
    %2616 = vmatprep.subr.mxu0 0.0
    %2617 = vmatpush1.msra.mxu0 0.0
    %2618 = vmatprep.subr.mxu0 0.0
    %2619 = vmatpush1.msra.mxu0 0.0
    %2620 = vmatprep.subr.mxu0 0.0
    %2621 = vmatpush1.msra.mxu0 0.0
    %2622 = vmatprep.subr.mxu0 0.0
    %2623 = vmatpush1.msra.mxu0 0.0
    %2624 = vmatprep.subr.mxu0 0.0
    %2625 = vmatpush1.msra.mxu0 0.0
    %2626 = vmatprep.subr.mxu0 0.0
    %2627 = vmatpush1.msra.mxu0 0.0
    %2628 = vmatprep.subr.mxu0 0.0
    %2629 = vmatpush1.msra.mxu0 0.0
    %2630 = vmatprep.mubr.f32.mxu0 0.0
    %2631 = vmatmul.mubr.f32.gmra.mrb[0].mxu0 %v2564
    %v2632 = vpop.f32.mrb[0].mxu0
    %v2633 = vadd.f32 %v2561, %v2632
    %v2634 = vpop.f32.mrb[0].mxu0
    %2635 = vdwg.mxu0
    %vm2636 = vcmask 25600
    %v2637 = vsel %vm2636, %v2633, -inf
    %2638 = vmax.xlane.f32.xlu0 %v2637
    %v2639 = vpop.xlane.xlu0 %2638
    %v2640 = vsub.f32 %v2633, %v2639
    %v2641 = vmul.f32 %v2640, 1.442695
    %v2642 = vpow.pop %v2641
    %v2643 = vsel %vm2636, %v2642, 0.0
    %2644 = vadd.xlane.f32.xlu0 %v2643
    %v2645 = vpop.xlane.xlu0 %2644
    %v2646 = vlog2.pop %v2645
    %v2647 = vmul.f32 %v2646, 0.6931472
    %v2648 = vsub.f32 %v2640, %v2647
    %v2649 = vld [vmem:[%s2] sm:$0x3]
    %v2650 = vlaneseq
    %v2651 = vand.u32 %v2650, 127
    %2652 = vset.pattern.permute.xlu0 0
    %2653 = vperm.xlu0 %2652, %v2649
    %v2654 = vpop.permute.xlu0 %2653
    %vm2655 = vcmp.eq.s32.totalorder %v2651, %v2654
    %v2656 = vsel %vm2655, 1, 0
    %v2657 = vcvt.s32.f32 %v2656
    %v2658 = vmul.f32 %v2657, %v2648
    %v2659 = vsel %vm2636, %v2658, 0.0
    %2660 = vadd.xlane.f32.xlu0 %v2659
    %v2661 = vpop.xlane.xlu0 %2660
    %v2662 = vsub.f32 0.0, %v2661
    %vm2663 = vcmask 1041408
    %v2664 = vsel %vm2663, %v2662, 0.0
    %v2665 = vrot.slane %v2664, 4
    %v2666 = vadd.f32 %v2664, %v2665
    %v2667 = vrot.slane %v2666, 2
    %v2668 = vadd.f32 %v2666, %v2667
    %v2669 = vrot.slane %v2668, 1
    %v2670 = vadd.f32 %v2668, %v2669
    %v2671 = vmul.f32 %v2670, 0.5
    %vm2672 = vcmask 0
    %2673 = vst.msk [vmem:[#allocation2] sm:$0x1] %vm2672, %v2671
    %2674 = vst.msk [vmem:[#allocation4] sm:$0x3] %vm2636, %v2633
    // Predicated region
    $region86: #{run.1} parent=1 // pred_check
      _
    $region87: #{run.1} parent=1 // pred_check_branch
      %2676 = sbr.rel (0) target = $region89
    $region88: #{run.1} parent=1 // pred_region
      %s2678 = ssub.s32 16, 16
      %2679 = vsyncadd [#allocation3], %s2678
      %s2681 = sshll.u32 [#allocation2], 4
      %s2682 = int_to_ptr.vmem [resolvable:$true] %s2681
      %2684 = dma.vmem_to_hbm [thread:$0]  %s2682, 16, %s21, [#allocation3]
    $region89: #{run.1} parent=1 // pred_fallthru
      _
    // Predicated region
    $region90: #{run.1} parent=1 // pred_check
      _
    $region91: #{run.1} parent=1 // pred_check_branch
      %2686 = sbr.rel (0) target = $region93
    $region92: #{run.1} parent=1 // pred_region
      %s2688 = ssub.s32 32, 32
      %2689 = vsyncadd [#allocation5], %s2688
      %s2691 = sshll.u32 [#allocation4], 4
      %s2692 = int_to_ptr.vmem [resolvable:$true] %s2691
      %2694 = dma.vmem_to_hbm [thread:$0]  %s2692, 32, %s22, [#allocation5]
    $region93: #{run.1} parent=1 // pred_fallthru
      _
    // Predicated region
    $region94: #{run.1} parent=1 // pred_check
      _
    $region95: #{run.1} parent=1 // pred_check_branch
      %2696 = sbr.rel (0) target = $region97
    $region96: #{run.1} parent=1 // pred_region
      %2697 = dma.done [#allocation3], 16
    $region97: #{run.1} parent=1 // pred_fallthru
      _
    // Predicated region
    $region98: #{run.1} parent=1 // pred_check
      _
    $region99: #{run.1} parent=1 // pred_check_branch
      %2699 = sbr.rel (0) target = $region101
    $region100: #{run.1} parent=1 // pred_region
      %2700 = dma.done [#allocation5], 32
    $region101: #{run.1} parent=1 // pred_fallthru
      _
    %2701 = vsyncpa [#allocation3], 1
    %2702 = vsyncpa [#allocation5], 1

</llo_original>
